<compile_context>
chip_gen: v6e
topology: v6e:2x2x1
jax: 0.10.0
libtpu: 0.0.40
codegen_flags: <defaults>
</compile_context>

<pallas_src>
import math
import functools

import numpy as np
import jax
import jax.numpy as jnp
from jax.experimental import pallas as pl
from jax.experimental.pallas import tpu as pltpu


# ------------------------------ Pallas kernel -------------------------------

def make_synthesis_block_kernel(Bt, shifts, row, n_out, cout):
    """Bt: images per grid step; shifts: 9 flattened conv-tap offsets;
    row: flattened stride of one image row (= 2W); n_out: H2*W2; cout: Cout."""
    inv_n = 1.0 / n_out
    shift_m1 = (n_out - 1) % n_out          # roll by -1  -> value from p+1
    shift_mrow = (n_out - row) % n_out      # roll by -row-> value from p+row

    def taps_bf16(src, cm_ref):
        """(9*C, N) im2col matrix for a 3x3 / pad=1 conv from a VMEM-resident
        (C, N) f32 activation; rolls + boundary masks in f32, one cast to
        bf16 at the end (MXU operand)."""
        parts = []
        for t, s in enumerate(shifts):
            if s == 0:                       # center tap: always valid
                parts.append(src)
            else:
                rolled = pltpu.roll(src, (-s) % n_out, axis=1)  # [p]=src[p+s]
                parts.append(rolled * cm_ref[t])                # zero padding
        return jnp.concatenate(parts, axis=0).astype(jnp.bfloat16)

    def adain_lrelu(h, style):
        """InstanceNorm2d (biased var, eps=1e-5, one-pass stats) ->
        *factor + bias -> LeakyReLU(0.2).  h: (C, N) f32, style: (2C, 1)."""
        mean = jnp.sum(h, axis=-1, keepdims=True) * inv_n
        ex2 = jnp.sum(h * h, axis=-1, keepdims=True) * inv_n
        var = jnp.maximum(ex2 - mean * mean, 0.0)
        inv = jax.lax.rsqrt(var + 1e-5)
        y = (h - mean) * (inv * style[:cout]) + style[cout:]
        return jnp.where(y >= 0.0, y, 0.2 * y)

    def kernel(x_ref, noise_ref, s1_ref, s2_ref, um_ref, cm_ref,
               w1_ref, b1_ref, nw1_ref, w2_ref, b2_ref, out_ref):
        w1 = w1_ref[...]                     # (Cout, 9*Cin)  bf16
        w2 = w2_ref[...]                     # (Cout, 9*Cout) bf16
        b1 = b1_ref[...]                     # (Cout, 1) f32
        b2 = b2_ref[...]
        nw1 = nw1_ref[...]
        uw_c, uw_l, uw_r = um_ref[0], um_ref[1], um_ref[2]
        uh_c, uh_u, uh_d = um_ref[3], um_ref[4], um_ref[5]

        for b in range(Bt):                  # static unroll over the batch tile
            nnx = x_ref[b]                   # (Cin, N) nearest-2x-expanded input

            # Exact bilinear 2x (align_corners=False): separable 0.75/0.25
            # blend of the nearest-expanded image; edge clamping is folded
            # into the precomputed masks.  Pure VPU + XLU rolls, no matmul.
            t = uw_c * nnx + uw_l * pltpu.roll(nnx, 1, axis=1) \
                           + uw_r * pltpu.roll(nnx, shift_m1, axis=1)
            up = uh_c * t + uh_u * pltpu.roll(t, row, axis=1) \
                          + uh_d * pltpu.roll(t, shift_mrow, axis=1)

            # conv1: one (Cout, 9*Cin) x (9*Cin, N) bf16 MXU matmul, f32 acc
            h = jnp.dot(w1, taps_bf16(up, cm_ref),
                        preferred_element_type=jnp.float32) + b1
            h = h + nw1 * noise_ref[b]                   # noise B1
            h = adain_lrelu(h, s1_ref[b])                # AdaIN(style1) + lrelu

            # conv2 + AdaIN(style2) + LeakyReLU
            y = jnp.dot(w2, taps_bf16(h, cm_ref),
                        preferred_element_type=jnp.float32) + b2
            out_ref[b] = adain_lrelu(y, s2_ref[b])

    return kernel


# ----------------------- static (trace-time) operators -----------------------

def _tap_shifts_and_masks(h2, w2):
    """Flattened-index shift and validity mask for each of the 9 conv taps."""
    n = h2 * w2
    row = np.arange(n) // w2
    col = np.arange(n) % w2
    shifts, masks = [], []
    for dy in range(3):
        for dx in range(3):
            oy, ox = dy - 1, dx - 1
            shifts.append(oy * w2 + ox)
            valid = ((row + oy >= 0) & (row + oy < h2) &
                     (col + ox >= 0) & (col + ox < w2))
            masks.append(valid.astype(np.float32))
    return tuple(shifts), np.stack(masks, 0).reshape(9, 1, n)


def _upsample_blend_masks(h2, w2):
    """Weighted masks for the separable bilinear 2x blend applied to a
    nearest-neighbour-expanded (h2, w2) image, flattened row-major.
    out = c*n + l*roll(n,+1) + r*roll(n,-1) along width (then same along
    height with stride w2).  Edge clamping folds the 0.25 onto the center."""
    n = h2 * w2
    q = np.arange(n)
    X = q % w2
    Y = q // w2
    x_even = (X % 2 == 0)
    y_even = (Y % 2 == 0)
    uw_l = np.where(x_even & (X > 0), 0.25, 0.0)
    uw_r = np.where((~x_even) & (X < w2 - 1), 0.25, 0.0)
    uw_c = 0.75 + np.where((X == 0) | (X == w2 - 1), 0.25, 0.0)
    uh_u = np.where(y_even & (Y > 0), 0.25, 0.0)
    uh_d = np.where((~y_even) & (Y < h2 - 1), 0.25, 0.0)
    uh_c = 0.75 + np.where((Y == 0) | (Y == h2 - 1), 0.25, 0.0)
    return np.stack([uw_c, uw_l, uw_r, uh_c, uh_u, uh_d],
                    0).reshape(6, 1, n).astype(np.float32)


def _style_affine(latent_w, a_w, a_b):
    """FC_A: latent_w (B, L) -> style (B, 2C).  Tiny GEMM, done in XLA."""
    s = jnp.einsum('bl,cl->bc', latent_w, a_w,
                   precision=jax.lax.Precision.HIGHEST)
    return s + a_b[:, 0][None, :]


# ------------------------------- host wrapper --------------------------------

def synthesis_block_forward(params, latent_w, noize_map, x, *, batch_tile=2):
    """x: NCHW (B, Cin, H, W); noize_map: (B, 1, 2H, 2W); latent_w: (B, L).
    Returns NCHW (B, Cout, 2H, 2W)."""
    B, Cin, H, W = x.shape
    Cout = params['b1'].shape[0]
    H2, W2 = 2 * H, 2 * W
    N_out = H2 * W2

    # batch tile: must divide B; keep >= 2 grid steps when possible (v7x).
    Bt = max(1, min(batch_tile, B))
    while Bt > 1 and (B % Bt != 0 or B // Bt < 2):
        Bt -= 1

    # nearest-neighbour 2x expansion (pure replication, no arithmetic); the
    # bilinear weights are applied inside the kernel with rolls, so there is
    # no O(H^2 W^2) upsample operator to build or DMA.
    x_nn = jnp.repeat(jnp.repeat(x, 2, axis=2), 2, axis=3).reshape(B, Cin, N_out)
    noise = noize_map.reshape(B, 1, N_out)

    # style affines hoisted out of the kernel (one batched GEMM each)
    s1 = _style_affine(latent_w, params['a1_w'],
                       params['a1_b']).reshape(B, 2 * Cout, 1)
    s2 = _style_affine(latent_w, params['a2_w'],
                       params['a2_b']).reshape(B, 2 * Cout, 1)

    shifts, cmasks_np = _tap_shifts_and_masks(H2, W2)
    cmasks = jnp.asarray(cmasks_np)                        # (9, 1, N_out) f32
    umasks = jnp.asarray(_upsample_blend_masks(H2, W2))    # (6, 1, N_out) f32

    w1 = params['w1'].astype(jnp.bfloat16)                 # bf16 MXU operands
    w2 = params['w2'].astype(jnp.bfloat16)

    kernel = make_synthesis_block_kernel(Bt, shifts, W2, N_out, Cout)

    def const(a):
        nd = a.ndim
        return pl.BlockSpec(a.shape, lambda i, nd=nd: (0,) * nd)

    out = pl.pallas_call(
        kernel,
        grid=(B // Bt,),
        in_specs=[
            pl.BlockSpec((Bt, Cin, N_out), lambda i: (i, 0, 0)),      # x (NN-2x)
            pl.BlockSpec((Bt, 1, N_out), lambda i: (i, 0, 0)),        # noise
            pl.BlockSpec((Bt, 2 * Cout, 1), lambda i: (i, 0, 0)),     # style1
            pl.BlockSpec((Bt, 2 * Cout, 1), lambda i: (i, 0, 0)),     # style2
            const(umasks),                                            # blend masks
            const(cmasks),                                            # tap masks
            const(w1), const(params['b1']), const(params['nw1']),
            const(w2), const(params['b2']),
        ],
        out_specs=pl.BlockSpec((Bt, Cout, N_out), lambda i: (i, 0, 0)),
        out_shape=jax.ShapeDtypeStruct((B, Cout, N_out), jnp.float32),
        compiler_params=pltpu.CompilerParams(
            dimension_semantics=("parallel",)),
    )(x_nn, noise, s1, s2, umasks, cmasks,
      w1, params['b1'], params['nw1'], w2, params['b2'])
    return out.reshape(B, Cout, H2, W2)


# ------------------------------ parameter init -------------------------------
# Matches the PyTorch __init__: conv / linear weights ~ N(0,1), biases zero
# (FC_A bias = [1]*C ++ [0]*C), noise weight zero.  ScaleW's runtime
# sqrt(2/fan_in) scaling is folded into the stored weights.

def init_synthesis_block(key, in_dim_noize=32, in_dim_latent=32, out_dim=32):
    ks = jax.random.split(key, 4)

    def sconv(k, cin, cout):
        w = jax.random.normal(k, (cout, cin, 3, 3), jnp.float32)
        w = w * math.sqrt(2.0 / (cin * 9))                       # ScaleW
        # (co, ci, dy, dx) -> (co, (dy*3+dx)*ci + ci)  [tap-major, channel-minor]
        return w.transpose(0, 2, 3, 1).reshape(cout, 9 * cin)

    def fc_a(k, dl, c):
        w = jax.random.normal(k, (2 * c, dl), jnp.float32) * math.sqrt(2.0 / dl)
        b = jnp.concatenate([jnp.ones((c, 1), jnp.float32),
                             jnp.zeros((c, 1), jnp.float32)], axis=0)
        return w, b

    a1_w, a1_b = fc_a(ks[0], in_dim_latent, out_dim)
    a2_w, a2_b = fc_a(ks[1], in_dim_latent, out_dim)
    return {
        'w1': sconv(ks[2], in_dim_noize, out_dim),
        'b1': jnp.zeros((out_dim, 1), jnp.float32),
        'nw1': jnp.zeros((out_dim, 1), jnp.float32),   # zero init (ScaleW folded)
        'w2': sconv(ks[3], out_dim, out_dim),
        'b2': jnp.zeros((out_dim, 1), jnp.float32),
        'a1_w': a1_w, 'a1_b': a1_b,
        'a2_w': a2_w, 'a2_b': a2_b,
    }


# -------------------------- pure-JAX reference check -------------------------

def reference_forward(params, latent_w, noize_map, x, cin, cout,
                      matmul_dtype=jnp.float32):
    """Pure-JAX reference of the PyTorch module.  With matmul_dtype=bfloat16
    the conv operands are rounded exactly like the kernel's bf16 MXU path
    (products exact, f32 accumulation)."""
    def rnd(v):
        return v.astype(matmul_dtype).astype(jnp.float32)

    def up_axis(v, axis):
        n = v.shape[axis]
        k = jnp.arange(n)
        vk = jnp.take(v, k, axis=axis)
        vkm1 = jnp.take(v, jnp.clip(k - 1, 0, n - 1), axis=axis)
        vkp1 = jnp.take(v, jnp.clip(k + 1, 0, n - 1), axis=axis)
        even = 0.25 * vkm1 + 0.75 * vk
        odd = 0.75 * vk + 0.25 * vkp1
        out = jnp.stack([even, odd], axis=axis + 1)
        shp = list(v.shape)
        shp[axis] = 2 * n
        return out.reshape(shp)

    def conv3(z, w_flat, b, ci):
        co = w_flat.shape[0]
        w = rnd(w_flat).reshape(co, 3, 3, ci).transpose(0, 3, 1, 2)   # OIHW
        y = jax.lax.conv_general_dilated(
            rnd(z), w, (1, 1), ((1, 1), (1, 1)),
            dimension_numbers=('NCHW', 'OIHW', 'NCHW'),
            precision=jax.lax.Precision.HIGHEST)
        return y + b.reshape(1, co, 1, 1)

    def adain_lrelu(z, style):
        mean = z.mean(axis=(2, 3), keepdims=True)
        var = ((z - mean) ** 2).mean(axis=(2, 3), keepdims=True)
        zn = (z - mean) * jax.lax.rsqrt(var + 1e-5)
        c = z.shape[1]
        y = zn * style[:, :c].reshape(-1, c, 1, 1) + \
            style[:, c:].reshape(-1, c, 1, 1)
        return jnp.where(y >= 0, y, 0.2 * y)

    up = up_axis(up_axis(x, 2), 3)
    h = conv3(up, params['w1'], params['b1'], cin)
    h = h + params['nw1'].reshape(1, -1, 1, 1) * noize_map
    s1 = _style_affine(latent_w, params['a1_w'], params['a1_b'])
    h = adain_lrelu(h, s1)
    h = conv3(h, params['w2'], params['b2'], cout)
    s2 = _style_affine(latent_w, params['a2_w'], params['a2_b'])
    return adain_lrelu(h, s2)


# ----------------------------------- main ------------------------------------

if __name__ == "__main__":
    key = jax.random.PRNGKey(0)
    kp, kz, kn, kx, kw = jax.random.split(key, 5)

    B, Cin, Cout, L, H, W = 4, 32, 32, 32, 8, 8
    params = init_synthesis_block(kp, in_dim_noize=Cin, in_dim_latent=L,
                                  out_dim=Cout)
    # nw1 is zero-initialized in the module; give it nonzero values here so
    # the noise path is actually exercised by the correctness check.
    params['nw1'] = 0.1 * jax.random.normal(kw, (Cout, 1), jnp.float32)

    latent_w = jax.random.normal(kz, (B, L), jnp.float32)
    noize_map = jax.random.normal(kn, (B, 1, 2 * H, 2 * W), jnp.float32)
    x = jax.random.normal(kx, (B, Cin, H, W), jnp.float32)

    fwd = jax.jit(functools.partial(synthesis_block_forward, batch_tile=2))
    out = jax.block_until_ready(fwd(params, latent_w, noize_map, x))

    assert out.shape == (B, Cout, 2 * H, 2 * W), out.shape
    assert bool(jnp.all(jnp.isfinite(out)))

    # (1) Tight structural check against a precision-matched reference
    #     (conv operands rounded to bf16 the same way the kernel does).
    ref_m = jax.block_until_ready(
        reference_forward(params, latent_w, noize_map, x, Cin, Cout,
                          matmul_dtype=jnp.bfloat16))
    err_m = float(jnp.max(jnp.abs(out - ref_m)))
    assert err_m < 1e-2, f"max |pallas - bf16-matched reference| = {err_m}"

    # (2) Precision contract vs. the full-f32 module semantics (relative RMS;
    #     the residual here is purely the bf16 MXU operand rounding).
    ref_f = jax.block_until_ready(
        reference_forward(params, latent_w, noize_map, x, Cin, Cout))
    rel_rms = float(jnp.sqrt(jnp.mean((out - ref_f) ** 2)) /
                    jnp.sqrt(jnp.mean(ref_f ** 2)))
    assert rel_rms < 2e-2, f"relative RMS error vs f32 reference = {rel_rms}"

    print("KERNEL_OK")
</pallas_src>

<mosaic_0001>
module attributes {stable_mosaic.version = 11 : i64} {
  func.func @kernel(%arg0: i32, %arg1: memref<2x32x256xf32, #tpu.memory_space<vmem>>, %arg2: memref<2x1x256xf32, #tpu.memory_space<vmem>>, %arg3: memref<2x64x1xf32, #tpu.memory_space<vmem>>, %arg4: memref<2x64x1xf32, #tpu.memory_space<vmem>>, %arg5: memref<6x1x256xf32, #tpu.memory_space<vmem>>, %arg6: memref<9x1x256xf32, #tpu.memory_space<vmem>>, %arg7: memref<32x288xbf16, #tpu.memory_space<vmem>>, %arg8: memref<32x1xf32, #tpu.memory_space<vmem>>, %arg9: memref<32x1xf32, #tpu.memory_space<vmem>>, %arg10: memref<32x288xbf16, #tpu.memory_space<vmem>>, %arg11: memref<32x1xf32, #tpu.memory_space<vmem>>, %arg12: memref<2x32x256xf32, #tpu.memory_space<vmem>>) attributes {dimension_semantics = [#tpu.dimension_semantics<parallel>], iteration_bounds = array<i64: 2>, scalar_prefetch = 0 : i64, scratch_operands = 0 : i64, tpu.core_type = #tpu.core_type<tc>, window_params = [{transform_indices = @transform_0, window_bounds = array<i64: 2, 32, 256>}, {transform_indices = @transform_1, window_bounds = array<i64: 2, 1, 256>}, {transform_indices = @transform_2, window_bounds = array<i64: 2, 64, 1>}, {transform_indices = @transform_3, window_bounds = array<i64: 2, 64, 1>}, {pipeline_mode = #tpu.pipeline_mode<synchronous>, transform_indices = @transform_4, window_bounds = array<i64: 6, 1, 256>}, {pipeline_mode = #tpu.pipeline_mode<synchronous>, transform_indices = @transform_5, window_bounds = array<i64: 9, 1, 256>}, {pipeline_mode = #tpu.pipeline_mode<synchronous>, transform_indices = @transform_6, window_bounds = array<i64: 32, 288>}, {pipeline_mode = #tpu.pipeline_mode<synchronous>, transform_indices = @transform_7, window_bounds = array<i64: 32, 1>}, {pipeline_mode = #tpu.pipeline_mode<synchronous>, transform_indices = @transform_8, window_bounds = array<i64: 32, 1>}, {pipeline_mode = #tpu.pipeline_mode<synchronous>, transform_indices = @transform_9, window_bounds = array<i64: 32, 288>}, {pipeline_mode = #tpu.pipeline_mode<synchronous>, transform_indices = @transform_10, window_bounds = array<i64: 32, 1>}, {transform_indices = @transform_11, window_bounds = array<i64: 2, 32, 256>}]} {
    %c0 = arith.constant 0 : index
    %c0_0 = arith.constant 0 : index
    %0 = vector.load %arg7[%c0, %c0_0] : memref<32x288xbf16, #tpu.memory_space<vmem>>, vector<32x288xbf16>
    %c0_1 = arith.constant 0 : index
    %c0_2 = arith.constant 0 : index
    %1 = vector.load %arg10[%c0_1, %c0_2] : memref<32x288xbf16, #tpu.memory_space<vmem>>, vector<32x288xbf16>
    %c0_3 = arith.constant 0 : index
    %c0_4 = arith.constant 0 : index
    %2 = vector.load %arg8[%c0_3, %c0_4] : memref<32x1xf32, #tpu.memory_space<vmem>>, vector<32x1xf32>
    %c0_5 = arith.constant 0 : index
    %c0_6 = arith.constant 0 : index
    %3 = vector.load %arg11[%c0_5, %c0_6] : memref<32x1xf32, #tpu.memory_space<vmem>>, vector<32x1xf32>
    %c0_7 = arith.constant 0 : index
    %c0_8 = arith.constant 0 : index
    %4 = vector.load %arg9[%c0_7, %c0_8] : memref<32x1xf32, #tpu.memory_space<vmem>>, vector<32x1xf32>
    %c0_9 = arith.constant 0 : index
    %c0_10 = arith.constant 0 : index
    %c0_11 = arith.constant 0 : index
    %5 = vector.load %arg5[%c0_9, %c0_10, %c0_11] : memref<6x1x256xf32, #tpu.memory_space<vmem>>, vector<1x1x256xf32>
    %6 = vector.shape_cast %5 : vector<1x1x256xf32> to vector<1x256xf32>
    %c1 = arith.constant 1 : index
    %c0_12 = arith.constant 0 : index
    %c0_13 = arith.constant 0 : index
    %7 = vector.load %arg5[%c1, %c0_12, %c0_13] : memref<6x1x256xf32, #tpu.memory_space<vmem>>, vector<1x1x256xf32>
    %8 = vector.shape_cast %7 : vector<1x1x256xf32> to vector<1x256xf32>
    %c2 = arith.constant 2 : index
    %c0_14 = arith.constant 0 : index
    %c0_15 = arith.constant 0 : index
    %9 = vector.load %arg5[%c2, %c0_14, %c0_15] : memref<6x1x256xf32, #tpu.memory_space<vmem>>, vector<1x1x256xf32>
    %10 = vector.shape_cast %9 : vector<1x1x256xf32> to vector<1x256xf32>
    %c3 = arith.constant 3 : index
    %c0_16 = arith.constant 0 : index
    %c0_17 = arith.constant 0 : index
    %11 = vector.load %arg5[%c3, %c0_16, %c0_17] : memref<6x1x256xf32, #tpu.memory_space<vmem>>, vector<1x1x256xf32>
    %12 = vector.shape_cast %11 : vector<1x1x256xf32> to vector<1x256xf32>
    %c4 = arith.constant 4 : index
    %c0_18 = arith.constant 0 : index
    %c0_19 = arith.constant 0 : index
    %13 = vector.load %arg5[%c4, %c0_18, %c0_19] : memref<6x1x256xf32, #tpu.memory_space<vmem>>, vector<1x1x256xf32>
    %14 = vector.shape_cast %13 : vector<1x1x256xf32> to vector<1x256xf32>
    %c5 = arith.constant 5 : index
    %c0_20 = arith.constant 0 : index
    %c0_21 = arith.constant 0 : index
    %15 = vector.load %arg5[%c5, %c0_20, %c0_21] : memref<6x1x256xf32, #tpu.memory_space<vmem>>, vector<1x1x256xf32>
    %16 = vector.shape_cast %15 : vector<1x1x256xf32> to vector<1x256xf32>
    %c0_22 = arith.constant 0 : index
    %c0_23 = arith.constant 0 : index
    %c0_24 = arith.constant 0 : index
    %17 = vector.load %arg1[%c0_22, %c0_23, %c0_24] : memref<2x32x256xf32, #tpu.memory_space<vmem>>, vector<1x32x256xf32>
    %18 = vector.shape_cast %17 : vector<1x32x256xf32> to vector<32x256xf32>
    %19 = vector.broadcast %6 : vector<1x256xf32> to vector<32x256xf32>
    %20 = arith.mulf %19, %18 : vector<32x256xf32>
    %c1_i32 = arith.constant 1 : i32
    %21 = tpu.dynamic_rotate %18 by %c1_i32 dim 1 : vector<32x256xf32>, i32 -> vector<32x256xf32>
    %22 = vector.broadcast %8 : vector<1x256xf32> to vector<32x256xf32>
    %23 = arith.mulf %22, %21 : vector<32x256xf32>
    %24 = arith.addf %20, %23 : vector<32x256xf32>
    %c255_i32 = arith.constant 255 : i32
    %25 = tpu.dynamic_rotate %18 by %c255_i32 dim 1 : vector<32x256xf32>, i32 -> vector<32x256xf32>
    %26 = vector.broadcast %10 : vector<1x256xf32> to vector<32x256xf32>
    %27 = arith.mulf %26, %25 : vector<32x256xf32>
    %28 = arith.addf %24, %27 : vector<32x256xf32>
    %29 = vector.broadcast %12 : vector<1x256xf32> to vector<32x256xf32>
    %30 = arith.mulf %29, %28 : vector<32x256xf32>
    %c16_i32 = arith.constant 16 : i32
    %31 = tpu.dynamic_rotate %28 by %c16_i32 dim 1 : vector<32x256xf32>, i32 -> vector<32x256xf32>
    %32 = vector.broadcast %14 : vector<1x256xf32> to vector<32x256xf32>
    %33 = arith.mulf %32, %31 : vector<32x256xf32>
    %34 = arith.addf %30, %33 : vector<32x256xf32>
    %c240_i32 = arith.constant 240 : i32
    %35 = tpu.dynamic_rotate %28 by %c240_i32 dim 1 : vector<32x256xf32>, i32 -> vector<32x256xf32>
    %36 = vector.broadcast %16 : vector<1x256xf32> to vector<32x256xf32>
    %37 = arith.mulf %36, %35 : vector<32x256xf32>
    %38 = arith.addf %34, %37 : vector<32x256xf32>
    %c17_i32 = arith.constant 17 : i32
    %39 = tpu.dynamic_rotate %38 by %c17_i32 dim 1 : vector<32x256xf32>, i32 -> vector<32x256xf32>
    %c0_25 = arith.constant 0 : index
    %c0_26 = arith.constant 0 : index
    %c0_27 = arith.constant 0 : index
    %40 = vector.load %arg6[%c0_25, %c0_26, %c0_27] : memref<9x1x256xf32, #tpu.memory_space<vmem>>, vector<1x1x256xf32>
    %41 = vector.shape_cast %40 : vector<1x1x256xf32> to vector<1x256xf32>
    %42 = vector.broadcast %41 : vector<1x256xf32> to vector<32x256xf32>
    %43 = arith.mulf %39, %42 : vector<32x256xf32>
    %c16_i32_28 = arith.constant 16 : i32
    %44 = tpu.dynamic_rotate %38 by %c16_i32_28 dim 1 : vector<32x256xf32>, i32 -> vector<32x256xf32>
    %c1_29 = arith.constant 1 : index
    %c0_30 = arith.constant 0 : index
    %c0_31 = arith.constant 0 : index
    %45 = vector.load %arg6[%c1_29, %c0_30, %c0_31] : memref<9x1x256xf32, #tpu.memory_space<vmem>>, vector<1x1x256xf32>
    %46 = vector.shape_cast %45 : vector<1x1x256xf32> to vector<1x256xf32>
    %47 = vector.broadcast %46 : vector<1x256xf32> to vector<32x256xf32>
    %48 = arith.mulf %44, %47 : vector<32x256xf32>
    %c15_i32 = arith.constant 15 : i32
    %49 = tpu.dynamic_rotate %38 by %c15_i32 dim 1 : vector<32x256xf32>, i32 -> vector<32x256xf32>
    %c2_32 = arith.constant 2 : index
    %c0_33 = arith.constant 0 : index
    %c0_34 = arith.constant 0 : index
    %50 = vector.load %arg6[%c2_32, %c0_33, %c0_34] : memref<9x1x256xf32, #tpu.memory_space<vmem>>, vector<1x1x256xf32>
    %51 = vector.shape_cast %50 : vector<1x1x256xf32> to vector<1x256xf32>
    %52 = vector.broadcast %51 : vector<1x256xf32> to vector<32x256xf32>
    %53 = arith.mulf %49, %52 : vector<32x256xf32>
    %c1_i32_35 = arith.constant 1 : i32
    %54 = tpu.dynamic_rotate %38 by %c1_i32_35 dim 1 : vector<32x256xf32>, i32 -> vector<32x256xf32>
    %c3_36 = arith.constant 3 : index
    %c0_37 = arith.constant 0 : index
    %c0_38 = arith.constant 0 : index
    %55 = vector.load %arg6[%c3_36, %c0_37, %c0_38] : memref<9x1x256xf32, #tpu.memory_space<vmem>>, vector<1x1x256xf32>
    %56 = vector.shape_cast %55 : vector<1x1x256xf32> to vector<1x256xf32>
    %57 = vector.broadcast %56 : vector<1x256xf32> to vector<32x256xf32>
    %58 = arith.mulf %54, %57 : vector<32x256xf32>
    %c255_i32_39 = arith.constant 255 : i32
    %59 = tpu.dynamic_rotate %38 by %c255_i32_39 dim 1 : vector<32x256xf32>, i32 -> vector<32x256xf32>
    %c5_40 = arith.constant 5 : index
    %c0_41 = arith.constant 0 : index
    %c0_42 = arith.constant 0 : index
    %60 = vector.load %arg6[%c5_40, %c0_41, %c0_42] : memref<9x1x256xf32, #tpu.memory_space<vmem>>, vector<1x1x256xf32>
    %61 = vector.shape_cast %60 : vector<1x1x256xf32> to vector<1x256xf32>
    %62 = vector.broadcast %61 : vector<1x256xf32> to vector<32x256xf32>
    %63 = arith.mulf %59, %62 : vector<32x256xf32>
    %c241_i32 = arith.constant 241 : i32
    %64 = tpu.dynamic_rotate %38 by %c241_i32 dim 1 : vector<32x256xf32>, i32 -> vector<32x256xf32>
    %c6 = arith.constant 6 : index
    %c0_43 = arith.constant 0 : index
    %c0_44 = arith.constant 0 : index
    %65 = vector.load %arg6[%c6, %c0_43, %c0_44] : memref<9x1x256xf32, #tpu.memory_space<vmem>>, vector<1x1x256xf32>
    %66 = vector.shape_cast %65 : vector<1x1x256xf32> to vector<1x256xf32>
    %67 = vector.broadcast %66 : vector<1x256xf32> to vector<32x256xf32>
    %68 = arith.mulf %64, %67 : vector<32x256xf32>
    %c240_i32_45 = arith.constant 240 : i32
    %69 = tpu.dynamic_rotate %38 by %c240_i32_45 dim 1 : vector<32x256xf32>, i32 -> vector<32x256xf32>
    %c7 = arith.constant 7 : index
    %c0_46 = arith.constant 0 : index
    %c0_47 = arith.constant 0 : index
    %70 = vector.load %arg6[%c7, %c0_46, %c0_47] : memref<9x1x256xf32, #tpu.memory_space<vmem>>, vector<1x1x256xf32>
    %71 = vector.shape_cast %70 : vector<1x1x256xf32> to vector<1x256xf32>
    %72 = vector.broadcast %71 : vector<1x256xf32> to vector<32x256xf32>
    %73 = arith.mulf %69, %72 : vector<32x256xf32>
    %c239_i32 = arith.constant 239 : i32
    %74 = tpu.dynamic_rotate %38 by %c239_i32 dim 1 : vector<32x256xf32>, i32 -> vector<32x256xf32>
    %c8 = arith.constant 8 : index
    %c0_48 = arith.constant 0 : index
    %c0_49 = arith.constant 0 : index
    %75 = vector.load %arg6[%c8, %c0_48, %c0_49] : memref<9x1x256xf32, #tpu.memory_space<vmem>>, vector<1x1x256xf32>
    %76 = vector.shape_cast %75 : vector<1x1x256xf32> to vector<1x256xf32>
    %77 = vector.broadcast %76 : vector<1x256xf32> to vector<32x256xf32>
    %78 = arith.mulf %74, %77 : vector<32x256xf32>
    %79 = tpu.concatenate %43, %48, %53, %58, %38, %63, %68, %73, %78 in 0 : vector<32x256xf32>, vector<32x256xf32>, vector<32x256xf32>, vector<32x256xf32>, vector<32x256xf32>, vector<32x256xf32>, vector<32x256xf32>, vector<32x256xf32>, vector<32x256xf32> -> vector<288x256xf32>
    %80 = arith.truncf %79 : vector<288x256xf32> to vector<288x256xbf16>
    %cst = arith.constant dense<0.000000e+00> : vector<32x256xf32>
    %81 = tpu.matmul %0, %80, %cst {dimension_numbers = #tpu.dot_dimension_numbers<[1], [0], [0], [1], [0, 0, 1, 1], [], []>} : vector<32x288xbf16>, vector<288x256xbf16>, vector<32x256xf32> -> vector<32x256xf32>
    %82 = vector.broadcast %2 : vector<32x1xf32> to vector<32x256xf32>
    %83 = arith.addf %81, %82 : vector<32x256xf32>
    %c0_50 = arith.constant 0 : index
    %c0_51 = arith.constant 0 : index
    %c0_52 = arith.constant 0 : index
    %84 = vector.load %arg2[%c0_50, %c0_51, %c0_52] : memref<2x1x256xf32, #tpu.memory_space<vmem>>, vector<1x1x256xf32>
    %85 = vector.shape_cast %84 : vector<1x1x256xf32> to vector<1x256xf32>
    %86 = vector.broadcast %4 : vector<32x1xf32> to vector<32x256xf32>
    %87 = vector.broadcast %85 : vector<1x256xf32> to vector<32x256xf32>
    %88 = arith.mulf %86, %87 : vector<32x256xf32>
    %89 = arith.addf %83, %88 : vector<32x256xf32>
    %c0_53 = arith.constant 0 : index
    %c0_54 = arith.constant 0 : index
    %c0_55 = arith.constant 0 : index
    %90 = vector.load %arg3[%c0_53, %c0_54, %c0_55] : memref<2x64x1xf32, #tpu.memory_space<vmem>>, vector<1x64x1xf32>
    %91 = vector.shape_cast %90 : vector<1x64x1xf32> to vector<64x1xf32>
    %cst_56 = arith.constant dense<0.000000e+00> : vector<32xf32>
    %92 = vector.multi_reduction <add>, %89, %cst_56 [1] : vector<32x256xf32> to vector<32xf32>
    %93 = vector.shape_cast %92 : vector<32xf32> to vector<32x1xf32>
    %cst_57 = arith.constant 3.906250e-03 : f32
    %94 = vector.broadcast %cst_57 : f32 to vector<32x1xf32>
    %95 = arith.mulf %93, %94 : vector<32x1xf32>
    %96 = arith.mulf %89, %89 : vector<32x256xf32>
    %cst_58 = arith.constant dense<0.000000e+00> : vector<32xf32>
    %97 = vector.multi_reduction <add>, %96, %cst_58 [1] : vector<32x256xf32> to vector<32xf32>
    %98 = vector.shape_cast %97 : vector<32xf32> to vector<32x1xf32>
    %cst_59 = arith.constant 3.906250e-03 : f32
    %99 = vector.broadcast %cst_59 : f32 to vector<32x1xf32>
    %100 = arith.mulf %98, %99 : vector<32x1xf32>
    %101 = arith.mulf %95, %95 : vector<32x1xf32>
    %102 = arith.subf %100, %101 : vector<32x1xf32>
    %cst_60 = arith.constant 0.000000e+00 : f32
    %103 = vector.broadcast %cst_60 : f32 to vector<32x1xf32>
    %104 = arith.maximumf %102, %103 : vector<32x1xf32>
    %cst_61 = arith.constant 9.99999974E-6 : f32
    %105 = vector.broadcast %cst_61 : f32 to vector<32x1xf32>
    %106 = arith.addf %104, %105 : vector<32x1xf32>
    %107 = math.rsqrt %106 : vector<32x1xf32>
    %108 = vector.broadcast %95 : vector<32x1xf32> to vector<32x256xf32>
    %109 = arith.subf %89, %108 : vector<32x256xf32>
    %110 = vector.extract_strided_slice %91 {offsets = [0, 0], sizes = [32, 1], strides = [1, 1]} : vector<64x1xf32> to vector<32x1xf32>
    %111 = arith.mulf %107, %110 : vector<32x1xf32>
    %112 = vector.broadcast %111 : vector<32x1xf32> to vector<32x256xf32>
    %113 = arith.mulf %109, %112 : vector<32x256xf32>
    %114 = vector.extract_strided_slice %91 {offsets = [32, 0], sizes = [32, 1], strides = [1, 1]} : vector<64x1xf32> to vector<32x1xf32>
    %115 = vector.broadcast %114 : vector<32x1xf32> to vector<32x256xf32>
    %116 = arith.addf %113, %115 : vector<32x256xf32>
    %cst_62 = arith.constant 0.000000e+00 : f32
    %117 = vector.broadcast %cst_62 : f32 to vector<32x256xf32>
    %118 = arith.cmpf oge, %116, %117 : vector<32x256xf32>
    %cst_63 = arith.constant 2.000000e-01 : f32
    %119 = vector.broadcast %cst_63 : f32 to vector<32x256xf32>
    %120 = arith.mulf %119, %116 : vector<32x256xf32>
    %121 = arith.select %118, %116, %120 : vector<32x256xi1>, vector<32x256xf32>
    %c17_i32_64 = arith.constant 17 : i32
    %122 = tpu.dynamic_rotate %121 by %c17_i32_64 dim 1 : vector<32x256xf32>, i32 -> vector<32x256xf32>
    %c0_65 = arith.constant 0 : index
    %c0_66 = arith.constant 0 : index
    %c0_67 = arith.constant 0 : index
    %123 = vector.load %arg6[%c0_65, %c0_66, %c0_67] : memref<9x1x256xf32, #tpu.memory_space<vmem>>, vector<1x1x256xf32>
    %124 = vector.shape_cast %123 : vector<1x1x256xf32> to vector<1x256xf32>
    %125 = vector.broadcast %124 : vector<1x256xf32> to vector<32x256xf32>
    %126 = arith.mulf %122, %125 : vector<32x256xf32>
    %c16_i32_68 = arith.constant 16 : i32
    %127 = tpu.dynamic_rotate %121 by %c16_i32_68 dim 1 : vector<32x256xf32>, i32 -> vector<32x256xf32>
    %c1_69 = arith.constant 1 : index
    %c0_70 = arith.constant 0 : index
    %c0_71 = arith.constant 0 : index
    %128 = vector.load %arg6[%c1_69, %c0_70, %c0_71] : memref<9x1x256xf32, #tpu.memory_space<vmem>>, vector<1x1x256xf32>
    %129 = vector.shape_cast %128 : vector<1x1x256xf32> to vector<1x256xf32>
    %130 = vector.broadcast %129 : vector<1x256xf32> to vector<32x256xf32>
    %131 = arith.mulf %127, %130 : vector<32x256xf32>
    %c15_i32_72 = arith.constant 15 : i32
    %132 = tpu.dynamic_rotate %121 by %c15_i32_72 dim 1 : vector<32x256xf32>, i32 -> vector<32x256xf32>
    %c2_73 = arith.constant 2 : index
    %c0_74 = arith.constant 0 : index
    %c0_75 = arith.constant 0 : index
    %133 = vector.load %arg6[%c2_73, %c0_74, %c0_75] : memref<9x1x256xf32, #tpu.memory_space<vmem>>, vector<1x1x256xf32>
    %134 = vector.shape_cast %133 : vector<1x1x256xf32> to vector<1x256xf32>
    %135 = vector.broadcast %134 : vector<1x256xf32> to vector<32x256xf32>
    %136 = arith.mulf %132, %135 : vector<32x256xf32>
    %c1_i32_76 = arith.constant 1 : i32
    %137 = tpu.dynamic_rotate %121 by %c1_i32_76 dim 1 : vector<32x256xf32>, i32 -> vector<32x256xf32>
    %c3_77 = arith.constant 3 : index
    %c0_78 = arith.constant 0 : index
    %c0_79 = arith.constant 0 : index
    %138 = vector.load %arg6[%c3_77, %c0_78, %c0_79] : memref<9x1x256xf32, #tpu.memory_space<vmem>>, vector<1x1x256xf32>
    %139 = vector.shape_cast %138 : vector<1x1x256xf32> to vector<1x256xf32>
    %140 = vector.broadcast %139 : vector<1x256xf32> to vector<32x256xf32>
    %141 = arith.mulf %137, %140 : vector<32x256xf32>
    %c255_i32_80 = arith.constant 255 : i32
    %142 = tpu.dynamic_rotate %121 by %c255_i32_80 dim 1 : vector<32x256xf32>, i32 -> vector<32x256xf32>
    %c5_81 = arith.constant 5 : index
    %c0_82 = arith.constant 0 : index
    %c0_83 = arith.constant 0 : index
    %143 = vector.load %arg6[%c5_81, %c0_82, %c0_83] : memref<9x1x256xf32, #tpu.memory_space<vmem>>, vector<1x1x256xf32>
    %144 = vector.shape_cast %143 : vector<1x1x256xf32> to vector<1x256xf32>
    %145 = vector.broadcast %144 : vector<1x256xf32> to vector<32x256xf32>
    %146 = arith.mulf %142, %145 : vector<32x256xf32>
    %c241_i32_84 = arith.constant 241 : i32
    %147 = tpu.dynamic_rotate %121 by %c241_i32_84 dim 1 : vector<32x256xf32>, i32 -> vector<32x256xf32>
    %c6_85 = arith.constant 6 : index
    %c0_86 = arith.constant 0 : index
    %c0_87 = arith.constant 0 : index
    %148 = vector.load %arg6[%c6_85, %c0_86, %c0_87] : memref<9x1x256xf32, #tpu.memory_space<vmem>>, vector<1x1x256xf32>
    %149 = vector.shape_cast %148 : vector<1x1x256xf32> to vector<1x256xf32>
    %150 = vector.broadcast %149 : vector<1x256xf32> to vector<32x256xf32>
    %151 = arith.mulf %147, %150 : vector<32x256xf32>
    %c240_i32_88 = arith.constant 240 : i32
    %152 = tpu.dynamic_rotate %121 by %c240_i32_88 dim 1 : vector<32x256xf32>, i32 -> vector<32x256xf32>
    %c7_89 = arith.constant 7 : index
    %c0_90 = arith.constant 0 : index
    %c0_91 = arith.constant 0 : index
    %153 = vector.load %arg6[%c7_89, %c0_90, %c0_91] : memref<9x1x256xf32, #tpu.memory_space<vmem>>, vector<1x1x256xf32>
    %154 = vector.shape_cast %153 : vector<1x1x256xf32> to vector<1x256xf32>
    %155 = vector.broadcast %154 : vector<1x256xf32> to vector<32x256xf32>
    %156 = arith.mulf %152, %155 : vector<32x256xf32>
    %c239_i32_92 = arith.constant 239 : i32
    %157 = tpu.dynamic_rotate %121 by %c239_i32_92 dim 1 : vector<32x256xf32>, i32 -> vector<32x256xf32>
    %c8_93 = arith.constant 8 : index
    %c0_94 = arith.constant 0 : index
    %c0_95 = arith.constant 0 : index
    %158 = vector.load %arg6[%c8_93, %c0_94, %c0_95] : memref<9x1x256xf32, #tpu.memory_space<vmem>>, vector<1x1x256xf32>
    %159 = vector.shape_cast %158 : vector<1x1x256xf32> to vector<1x256xf32>
    %160 = vector.broadcast %159 : vector<1x256xf32> to vector<32x256xf32>
    %161 = arith.mulf %157, %160 : vector<32x256xf32>
    %162 = tpu.concatenate %126, %131, %136, %141, %121, %146, %151, %156, %161 in 0 : vector<32x256xf32>, vector<32x256xf32>, vector<32x256xf32>, vector<32x256xf32>, vector<32x256xf32>, vector<32x256xf32>, vector<32x256xf32>, vector<32x256xf32>, vector<32x256xf32> -> vector<288x256xf32>
    %163 = arith.truncf %162 : vector<288x256xf32> to vector<288x256xbf16>
    %cst_96 = arith.constant dense<0.000000e+00> : vector<32x256xf32>
    %164 = tpu.matmul %1, %163, %cst_96 {dimension_numbers = #tpu.dot_dimension_numbers<[1], [0], [0], [1], [0, 0, 1, 1], [], []>} : vector<32x288xbf16>, vector<288x256xbf16>, vector<32x256xf32> -> vector<32x256xf32>
    %165 = vector.broadcast %3 : vector<32x1xf32> to vector<32x256xf32>
    %166 = arith.addf %164, %165 : vector<32x256xf32>
    %c0_97 = arith.constant 0 : index
    %c0_98 = arith.constant 0 : index
    %c0_99 = arith.constant 0 : index
    %167 = vector.load %arg4[%c0_97, %c0_98, %c0_99] : memref<2x64x1xf32, #tpu.memory_space<vmem>>, vector<1x64x1xf32>
    %168 = vector.shape_cast %167 : vector<1x64x1xf32> to vector<64x1xf32>
    %cst_100 = arith.constant dense<0.000000e+00> : vector<32xf32>
    %169 = vector.multi_reduction <add>, %166, %cst_100 [1] : vector<32x256xf32> to vector<32xf32>
    %170 = vector.shape_cast %169 : vector<32xf32> to vector<32x1xf32>
    %cst_101 = arith.constant 3.906250e-03 : f32
    %171 = vector.broadcast %cst_101 : f32 to vector<32x1xf32>
    %172 = arith.mulf %170, %171 : vector<32x1xf32>
    %173 = arith.mulf %166, %166 : vector<32x256xf32>
    %cst_102 = arith.constant dense<0.000000e+00> : vector<32xf32>
    %174 = vector.multi_reduction <add>, %173, %cst_102 [1] : vector<32x256xf32> to vector<32xf32>
    %175 = vector.shape_cast %174 : vector<32xf32> to vector<32x1xf32>
    %cst_103 = arith.constant 3.906250e-03 : f32
    %176 = vector.broadcast %cst_103 : f32 to vector<32x1xf32>
    %177 = arith.mulf %175, %176 : vector<32x1xf32>
    %178 = arith.mulf %172, %172 : vector<32x1xf32>
    %179 = arith.subf %177, %178 : vector<32x1xf32>
    %cst_104 = arith.constant 0.000000e+00 : f32
    %180 = vector.broadcast %cst_104 : f32 to vector<32x1xf32>
    %181 = arith.maximumf %179, %180 : vector<32x1xf32>
    %cst_105 = arith.constant 9.99999974E-6 : f32
    %182 = vector.broadcast %cst_105 : f32 to vector<32x1xf32>
    %183 = arith.addf %181, %182 : vector<32x1xf32>
    %184 = math.rsqrt %183 : vector<32x1xf32>
    %185 = vector.broadcast %172 : vector<32x1xf32> to vector<32x256xf32>
    %186 = arith.subf %166, %185 : vector<32x256xf32>
    %187 = vector.extract_strided_slice %168 {offsets = [0, 0], sizes = [32, 1], strides = [1, 1]} : vector<64x1xf32> to vector<32x1xf32>
    %188 = arith.mulf %184, %187 : vector<32x1xf32>
    %189 = vector.broadcast %188 : vector<32x1xf32> to vector<32x256xf32>
    %190 = arith.mulf %186, %189 : vector<32x256xf32>
    %191 = vector.extract_strided_slice %168 {offsets = [32, 0], sizes = [32, 1], strides = [1, 1]} : vector<64x1xf32> to vector<32x1xf32>
    %192 = vector.broadcast %191 : vector<32x1xf32> to vector<32x256xf32>
    %193 = arith.addf %190, %192 : vector<32x256xf32>
    %cst_106 = arith.constant 0.000000e+00 : f32
    %194 = vector.broadcast %cst_106 : f32 to vector<32x256xf32>
    %195 = arith.cmpf oge, %193, %194 : vector<32x256xf32>
    %cst_107 = arith.constant 2.000000e-01 : f32
    %196 = vector.broadcast %cst_107 : f32 to vector<32x256xf32>
    %197 = arith.mulf %196, %193 : vector<32x256xf32>
    %198 = arith.select %195, %193, %197 : vector<32x256xi1>, vector<32x256xf32>
    %c0_108 = arith.constant 0 : index
    %c0_109 = arith.constant 0 : index
    %c0_110 = arith.constant 0 : index
    %199 = vector.load %arg12[%c0_108, %c0_109, %c0_110] : memref<2x32x256xf32, #tpu.memory_space<vmem>>, vector<1x32x256xf32>
    %200 = vector.shape_cast %199 : vector<1x32x256xf32> to vector<32x256xf32>
    %201 = vector.shape_cast %198 : vector<32x256xf32> to vector<1x32x256xf32>
    tpu.vector_store %arg12[%c0_108, %c0_109, %c0_110], %201 {strides = array<i32>} : memref<2x32x256xf32, #tpu.memory_space<vmem>>, vector<1x32x256xf32>,
    %c1_111 = arith.constant 1 : index
    %c0_112 = arith.constant 0 : index
    %c0_113 = arith.constant 0 : index
    %202 = vector.load %arg1[%c1_111, %c0_112, %c0_113] : memref<2x32x256xf32, #tpu.memory_space<vmem>>, vector<1x32x256xf32>
    %203 = vector.shape_cast %202 : vector<1x32x256xf32> to vector<32x256xf32>
    %204 = vector.broadcast %6 : vector<1x256xf32> to vector<32x256xf32>
    %205 = arith.mulf %204, %203 : vector<32x256xf32>
    %c1_i32_114 = arith.constant 1 : i32
    %206 = tpu.dynamic_rotate %203 by %c1_i32_114 dim 1 : vector<32x256xf32>, i32 -> vector<32x256xf32>
    %207 = vector.broadcast %8 : vector<1x256xf32> to vector<32x256xf32>
    %208 = arith.mulf %207, %206 : vector<32x256xf32>
    %209 = arith.addf %205, %208 : vector<32x256xf32>
    %c255_i32_115 = arith.constant 255 : i32
    %210 = tpu.dynamic_rotate %203 by %c255_i32_115 dim 1 : vector<32x256xf32>, i32 -> vector<32x256xf32>
    %211 = vector.broadcast %10 : vector<1x256xf32> to vector<32x256xf32>
    %212 = arith.mulf %211, %210 : vector<32x256xf32>
    %213 = arith.addf %209, %212 : vector<32x256xf32>
    %214 = vector.broadcast %12 : vector<1x256xf32> to vector<32x256xf32>
    %215 = arith.mulf %214, %213 : vector<32x256xf32>
    %c16_i32_116 = arith.constant 16 : i32
    %216 = tpu.dynamic_rotate %213 by %c16_i32_116 dim 1 : vector<32x256xf32>, i32 -> vector<32x256xf32>
    %217 = vector.broadcast %14 : vector<1x256xf32> to vector<32x256xf32>
    %218 = arith.mulf %217, %216 : vector<32x256xf32>
    %219 = arith.addf %215, %218 : vector<32x256xf32>
    %c240_i32_117 = arith.constant 240 : i32
    %220 = tpu.dynamic_rotate %213 by %c240_i32_117 dim 1 : vector<32x256xf32>, i32 -> vector<32x256xf32>
    %221 = vector.broadcast %16 : vector<1x256xf32> to vector<32x256xf32>
    %222 = arith.mulf %221, %220 : vector<32x256xf32>
    %223 = arith.addf %219, %222 : vector<32x256xf32>
    %c17_i32_118 = arith.constant 17 : i32
    %224 = tpu.dynamic_rotate %223 by %c17_i32_118 dim 1 : vector<32x256xf32>, i32 -> vector<32x256xf32>
    %c0_119 = arith.constant 0 : index
    %c0_120 = arith.constant 0 : index
    %c0_121 = arith.constant 0 : index
    %225 = vector.load %arg6[%c0_119, %c0_120, %c0_121] : memref<9x1x256xf32, #tpu.memory_space<vmem>>, vector<1x1x256xf32>
    %226 = vector.shape_cast %225 : vector<1x1x256xf32> to vector<1x256xf32>
    %227 = vector.broadcast %226 : vector<1x256xf32> to vector<32x256xf32>
    %228 = arith.mulf %224, %227 : vector<32x256xf32>
    %c16_i32_122 = arith.constant 16 : i32
    %229 = tpu.dynamic_rotate %223 by %c16_i32_122 dim 1 : vector<32x256xf32>, i32 -> vector<32x256xf32>
    %c1_123 = arith.constant 1 : index
    %c0_124 = arith.constant 0 : index
    %c0_125 = arith.constant 0 : index
    %230 = vector.load %arg6[%c1_123, %c0_124, %c0_125] : memref<9x1x256xf32, #tpu.memory_space<vmem>>, vector<1x1x256xf32>
    %231 = vector.shape_cast %230 : vector<1x1x256xf32> to vector<1x256xf32>
    %232 = vector.broadcast %231 : vector<1x256xf32> to vector<32x256xf32>
    %233 = arith.mulf %229, %232 : vector<32x256xf32>
    %c15_i32_126 = arith.constant 15 : i32
    %234 = tpu.dynamic_rotate %223 by %c15_i32_126 dim 1 : vector<32x256xf32>, i32 -> vector<32x256xf32>
    %c2_127 = arith.constant 2 : index
    %c0_128 = arith.constant 0 : index
    %c0_129 = arith.constant 0 : index
    %235 = vector.load %arg6[%c2_127, %c0_128, %c0_129] : memref<9x1x256xf32, #tpu.memory_space<vmem>>, vector<1x1x256xf32>
    %236 = vector.shape_cast %235 : vector<1x1x256xf32> to vector<1x256xf32>
    %237 = vector.broadcast %236 : vector<1x256xf32> to vector<32x256xf32>
    %238 = arith.mulf %234, %237 : vector<32x256xf32>
    %c1_i32_130 = arith.constant 1 : i32
    %239 = tpu.dynamic_rotate %223 by %c1_i32_130 dim 1 : vector<32x256xf32>, i32 -> vector<32x256xf32>
    %c3_131 = arith.constant 3 : index
    %c0_132 = arith.constant 0 : index
    %c0_133 = arith.constant 0 : index
    %240 = vector.load %arg6[%c3_131, %c0_132, %c0_133] : memref<9x1x256xf32, #tpu.memory_space<vmem>>, vector<1x1x256xf32>
    %241 = vector.shape_cast %240 : vector<1x1x256xf32> to vector<1x256xf32>
    %242 = vector.broadcast %241 : vector<1x256xf32> to vector<32x256xf32>
    %243 = arith.mulf %239, %242 : vector<32x256xf32>
    %c255_i32_134 = arith.constant 255 : i32
    %244 = tpu.dynamic_rotate %223 by %c255_i32_134 dim 1 : vector<32x256xf32>, i32 -> vector<32x256xf32>
    %c5_135 = arith.constant 5 : index
    %c0_136 = arith.constant 0 : index
    %c0_137 = arith.constant 0 : index
    %245 = vector.load %arg6[%c5_135, %c0_136, %c0_137] : memref<9x1x256xf32, #tpu.memory_space<vmem>>, vector<1x1x256xf32>
    %246 = vector.shape_cast %245 : vector<1x1x256xf32> to vector<1x256xf32>
    %247 = vector.broadcast %246 : vector<1x256xf32> to vector<32x256xf32>
    %248 = arith.mulf %244, %247 : vector<32x256xf32>
    %c241_i32_138 = arith.constant 241 : i32
    %249 = tpu.dynamic_rotate %223 by %c241_i32_138 dim 1 : vector<32x256xf32>, i32 -> vector<32x256xf32>
    %c6_139 = arith.constant 6 : index
    %c0_140 = arith.constant 0 : index
    %c0_141 = arith.constant 0 : index
    %250 = vector.load %arg6[%c6_139, %c0_140, %c0_141] : memref<9x1x256xf32, #tpu.memory_space<vmem>>, vector<1x1x256xf32>
    %251 = vector.shape_cast %250 : vector<1x1x256xf32> to vector<1x256xf32>
    %252 = vector.broadcast %251 : vector<1x256xf32> to vector<32x256xf32>
    %253 = arith.mulf %249, %252 : vector<32x256xf32>
    %c240_i32_142 = arith.constant 240 : i32
    %254 = tpu.dynamic_rotate %223 by %c240_i32_142 dim 1 : vector<32x256xf32>, i32 -> vector<32x256xf32>
    %c7_143 = arith.constant 7 : index
    %c0_144 = arith.constant 0 : index
    %c0_145 = arith.constant 0 : index
    %255 = vector.load %arg6[%c7_143, %c0_144, %c0_145] : memref<9x1x256xf32, #tpu.memory_space<vmem>>, vector<1x1x256xf32>
    %256 = vector.shape_cast %255 : vector<1x1x256xf32> to vector<1x256xf32>
    %257 = vector.broadcast %256 : vector<1x256xf32> to vector<32x256xf32>
    %258 = arith.mulf %254, %257 : vector<32x256xf32>
    %c239_i32_146 = arith.constant 239 : i32
    %259 = tpu.dynamic_rotate %223 by %c239_i32_146 dim 1 : vector<32x256xf32>, i32 -> vector<32x256xf32>
    %c8_147 = arith.constant 8 : index
    %c0_148 = arith.constant 0 : index
    %c0_149 = arith.constant 0 : index
    %260 = vector.load %arg6[%c8_147, %c0_148, %c0_149] : memref<9x1x256xf32, #tpu.memory_space<vmem>>, vector<1x1x256xf32>
    %261 = vector.shape_cast %260 : vector<1x1x256xf32> to vector<1x256xf32>
    %262 = vector.broadcast %261 : vector<1x256xf32> to vector<32x256xf32>
    %263 = arith.mulf %259, %262 : vector<32x256xf32>
    %264 = tpu.concatenate %228, %233, %238, %243, %223, %248, %253, %258, %263 in 0 : vector<32x256xf32>, vector<32x256xf32>, vector<32x256xf32>, vector<32x256xf32>, vector<32x256xf32>, vector<32x256xf32>, vector<32x256xf32>, vector<32x256xf32>, vector<32x256xf32> -> vector<288x256xf32>
    %265 = arith.truncf %264 : vector<288x256xf32> to vector<288x256xbf16>
    %cst_150 = arith.constant dense<0.000000e+00> : vector<32x256xf32>
    %266 = tpu.matmul %0, %265, %cst_150 {dimension_numbers = #tpu.dot_dimension_numbers<[1], [0], [0], [1], [0, 0, 1, 1], [], []>} : vector<32x288xbf16>, vector<288x256xbf16>, vector<32x256xf32> -> vector<32x256xf32>
    %267 = vector.broadcast %2 : vector<32x1xf32> to vector<32x256xf32>
    %268 = arith.addf %266, %267 : vector<32x256xf32>
    %c1_151 = arith.constant 1 : index
    %c0_152 = arith.constant 0 : index
    %c0_153 = arith.constant 0 : index
    %269 = vector.load %arg2[%c1_151, %c0_152, %c0_153] : memref<2x1x256xf32, #tpu.memory_space<vmem>>, vector<1x1x256xf32>
    %270 = vector.shape_cast %269 : vector<1x1x256xf32> to vector<1x256xf32>
    %271 = vector.broadcast %4 : vector<32x1xf32> to vector<32x256xf32>
    %272 = vector.broadcast %270 : vector<1x256xf32> to vector<32x256xf32>
    %273 = arith.mulf %271, %272 : vector<32x256xf32>
    %274 = arith.addf %268, %273 : vector<32x256xf32>
    %c1_154 = arith.constant 1 : index
    %c0_155 = arith.constant 0 : index
    %c0_156 = arith.constant 0 : index
    %275 = vector.load %arg3[%c1_154, %c0_155, %c0_156] : memref<2x64x1xf32, #tpu.memory_space<vmem>>, vector<1x64x1xf32>
    %276 = vector.shape_cast %275 : vector<1x64x1xf32> to vector<64x1xf32>
    %cst_157 = arith.constant dense<0.000000e+00> : vector<32xf32>
    %277 = vector.multi_reduction <add>, %274, %cst_157 [1] : vector<32x256xf32> to vector<32xf32>
    %278 = vector.shape_cast %277 : vector<32xf32> to vector<32x1xf32>
    %cst_158 = arith.constant 3.906250e-03 : f32
    %279 = vector.broadcast %cst_158 : f32 to vector<32x1xf32>
    %280 = arith.mulf %278, %279 : vector<32x1xf32>
    %281 = arith.mulf %274, %274 : vector<32x256xf32>
    %cst_159 = arith.constant dense<0.000000e+00> : vector<32xf32>
    %282 = vector.multi_reduction <add>, %281, %cst_159 [1] : vector<32x256xf32> to vector<32xf32>
    %283 = vector.shape_cast %282 : vector<32xf32> to vector<32x1xf32>
    %cst_160 = arith.constant 3.906250e-03 : f32
    %284 = vector.broadcast %cst_160 : f32 to vector<32x1xf32>
    %285 = arith.mulf %283, %284 : vector<32x1xf32>
    %286 = arith.mulf %280, %280 : vector<32x1xf32>
    %287 = arith.subf %285, %286 : vector<32x1xf32>
    %cst_161 = arith.constant 0.000000e+00 : f32
    %288 = vector.broadcast %cst_161 : f32 to vector<32x1xf32>
    %289 = arith.maximumf %287, %288 : vector<32x1xf32>
    %cst_162 = arith.constant 9.99999974E-6 : f32
    %290 = vector.broadcast %cst_162 : f32 to vector<32x1xf32>
    %291 = arith.addf %289, %290 : vector<32x1xf32>
    %292 = math.rsqrt %291 : vector<32x1xf32>
    %293 = vector.broadcast %280 : vector<32x1xf32> to vector<32x256xf32>
    %294 = arith.subf %274, %293 : vector<32x256xf32>
    %295 = vector.extract_strided_slice %276 {offsets = [0, 0], sizes = [32, 1], strides = [1, 1]} : vector<64x1xf32> to vector<32x1xf32>
    %296 = arith.mulf %292, %295 : vector<32x1xf32>
    %297 = vector.broadcast %296 : vector<32x1xf32> to vector<32x256xf32>
    %298 = arith.mulf %294, %297 : vector<32x256xf32>
    %299 = vector.extract_strided_slice %276 {offsets = [32, 0], sizes = [32, 1], strides = [1, 1]} : vector<64x1xf32> to vector<32x1xf32>
    %300 = vector.broadcast %299 : vector<32x1xf32> to vector<32x256xf32>
    %301 = arith.addf %298, %300 : vector<32x256xf32>
    %cst_163 = arith.constant 0.000000e+00 : f32
    %302 = vector.broadcast %cst_163 : f32 to vector<32x256xf32>
    %303 = arith.cmpf oge, %301, %302 : vector<32x256xf32>
    %cst_164 = arith.constant 2.000000e-01 : f32
    %304 = vector.broadcast %cst_164 : f32 to vector<32x256xf32>
    %305 = arith.mulf %304, %301 : vector<32x256xf32>
    %306 = arith.select %303, %301, %305 : vector<32x256xi1>, vector<32x256xf32>
    %c17_i32_165 = arith.constant 17 : i32
    %307 = tpu.dynamic_rotate %306 by %c17_i32_165 dim 1 : vector<32x256xf32>, i32 -> vector<32x256xf32>
    %c0_166 = arith.constant 0 : index
    %c0_167 = arith.constant 0 : index
    %c0_168 = arith.constant 0 : index
    %308 = vector.load %arg6[%c0_166, %c0_167, %c0_168] : memref<9x1x256xf32, #tpu.memory_space<vmem>>, vector<1x1x256xf32>
    %309 = vector.shape_cast %308 : vector<1x1x256xf32> to vector<1x256xf32>
    %310 = vector.broadcast %309 : vector<1x256xf32> to vector<32x256xf32>
    %311 = arith.mulf %307, %310 : vector<32x256xf32>
    %c16_i32_169 = arith.constant 16 : i32
    %312 = tpu.dynamic_rotate %306 by %c16_i32_169 dim 1 : vector<32x256xf32>, i32 -> vector<32x256xf32>
    %c1_170 = arith.constant 1 : index
    %c0_171 = arith.constant 0 : index
    %c0_172 = arith.constant 0 : index
    %313 = vector.load %arg6[%c1_170, %c0_171, %c0_172] : memref<9x1x256xf32, #tpu.memory_space<vmem>>, vector<1x1x256xf32>
    %314 = vector.shape_cast %313 : vector<1x1x256xf32> to vector<1x256xf32>
    %315 = vector.broadcast %314 : vector<1x256xf32> to vector<32x256xf32>
    %316 = arith.mulf %312, %315 : vector<32x256xf32>
    %c15_i32_173 = arith.constant 15 : i32
    %317 = tpu.dynamic_rotate %306 by %c15_i32_173 dim 1 : vector<32x256xf32>, i32 -> vector<32x256xf32>
    %c2_174 = arith.constant 2 : index
    %c0_175 = arith.constant 0 : index
    %c0_176 = arith.constant 0 : index
    %318 = vector.load %arg6[%c2_174, %c0_175, %c0_176] : memref<9x1x256xf32, #tpu.memory_space<vmem>>, vector<1x1x256xf32>
    %319 = vector.shape_cast %318 : vector<1x1x256xf32> to vector<1x256xf32>
    %320 = vector.broadcast %319 : vector<1x256xf32> to vector<32x256xf32>
    %321 = arith.mulf %317, %320 : vector<32x256xf32>
    %c1_i32_177 = arith.constant 1 : i32
    %322 = tpu.dynamic_rotate %306 by %c1_i32_177 dim 1 : vector<32x256xf32>, i32 -> vector<32x256xf32>
    %c3_178 = arith.constant 3 : index
    %c0_179 = arith.constant 0 : index
    %c0_180 = arith.constant 0 : index
    %323 = vector.load %arg6[%c3_178, %c0_179, %c0_180] : memref<9x1x256xf32, #tpu.memory_space<vmem>>, vector<1x1x256xf32>
    %324 = vector.shape_cast %323 : vector<1x1x256xf32> to vector<1x256xf32>
    %325 = vector.broadcast %324 : vector<1x256xf32> to vector<32x256xf32>
    %326 = arith.mulf %322, %325 : vector<32x256xf32>
    %c255_i32_181 = arith.constant 255 : i32
    %327 = tpu.dynamic_rotate %306 by %c255_i32_181 dim 1 : vector<32x256xf32>, i32 -> vector<32x256xf32>
    %c5_182 = arith.constant 5 : index
    %c0_183 = arith.constant 0 : index
    %c0_184 = arith.constant 0 : index
    %328 = vector.load %arg6[%c5_182, %c0_183, %c0_184] : memref<9x1x256xf32, #tpu.memory_space<vmem>>, vector<1x1x256xf32>
    %329 = vector.shape_cast %328 : vector<1x1x256xf32> to vector<1x256xf32>
    %330 = vector.broadcast %329 : vector<1x256xf32> to vector<32x256xf32>
    %331 = arith.mulf %327, %330 : vector<32x256xf32>
    %c241_i32_185 = arith.constant 241 : i32
    %332 = tpu.dynamic_rotate %306 by %c241_i32_185 dim 1 : vector<32x256xf32>, i32 -> vector<32x256xf32>
    %c6_186 = arith.constant 6 : index
    %c0_187 = arith.constant 0 : index
    %c0_188 = arith.constant 0 : index
    %333 = vector.load %arg6[%c6_186, %c0_187, %c0_188] : memref<9x1x256xf32, #tpu.memory_space<vmem>>, vector<1x1x256xf32>
    %334 = vector.shape_cast %333 : vector<1x1x256xf32> to vector<1x256xf32>
    %335 = vector.broadcast %334 : vector<1x256xf32> to vector<32x256xf32>
    %336 = arith.mulf %332, %335 : vector<32x256xf32>
    %c240_i32_189 = arith.constant 240 : i32
    %337 = tpu.dynamic_rotate %306 by %c240_i32_189 dim 1 : vector<32x256xf32>, i32 -> vector<32x256xf32>
    %c7_190 = arith.constant 7 : index
    %c0_191 = arith.constant 0 : index
    %c0_192 = arith.constant 0 : index
    %338 = vector.load %arg6[%c7_190, %c0_191, %c0_192] : memref<9x1x256xf32, #tpu.memory_space<vmem>>, vector<1x1x256xf32>
    %339 = vector.shape_cast %338 : vector<1x1x256xf32> to vector<1x256xf32>
    %340 = vector.broadcast %339 : vector<1x256xf32> to vector<32x256xf32>
    %341 = arith.mulf %337, %340 : vector<32x256xf32>
    %c239_i32_193 = arith.constant 239 : i32
    %342 = tpu.dynamic_rotate %306 by %c239_i32_193 dim 1 : vector<32x256xf32>, i32 -> vector<32x256xf32>
    %c8_194 = arith.constant 8 : index
    %c0_195 = arith.constant 0 : index
    %c0_196 = arith.constant 0 : index
    %343 = vector.load %arg6[%c8_194, %c0_195, %c0_196] : memref<9x1x256xf32, #tpu.memory_space<vmem>>, vector<1x1x256xf32>
    %344 = vector.shape_cast %343 : vector<1x1x256xf32> to vector<1x256xf32>
    %345 = vector.broadcast %344 : vector<1x256xf32> to vector<32x256xf32>
    %346 = arith.mulf %342, %345 : vector<32x256xf32>
    %347 = tpu.concatenate %311, %316, %321, %326, %306, %331, %336, %341, %346 in 0 : vector<32x256xf32>, vector<32x256xf32>, vector<32x256xf32>, vector<32x256xf32>, vector<32x256xf32>, vector<32x256xf32>, vector<32x256xf32>, vector<32x256xf32>, vector<32x256xf32> -> vector<288x256xf32>
    %348 = arith.truncf %347 : vector<288x256xf32> to vector<288x256xbf16>
    %cst_197 = arith.constant dense<0.000000e+00> : vector<32x256xf32>
    %349 = tpu.matmul %1, %348, %cst_197 {dimension_numbers = #tpu.dot_dimension_numbers<[1], [0], [0], [1], [0, 0, 1, 1], [], []>} : vector<32x288xbf16>, vector<288x256xbf16>, vector<32x256xf32> -> vector<32x256xf32>
    %350 = vector.broadcast %3 : vector<32x1xf32> to vector<32x256xf32>
    %351 = arith.addf %349, %350 : vector<32x256xf32>
    %c1_198 = arith.constant 1 : index
    %c0_199 = arith.constant 0 : index
    %c0_200 = arith.constant 0 : index
    %352 = vector.load %arg4[%c1_198, %c0_199, %c0_200] : memref<2x64x1xf32, #tpu.memory_space<vmem>>, vector<1x64x1xf32>
    %353 = vector.shape_cast %352 : vector<1x64x1xf32> to vector<64x1xf32>
    %cst_201 = arith.constant dense<0.000000e+00> : vector<32xf32>
    %354 = vector.multi_reduction <add>, %351, %cst_201 [1] : vector<32x256xf32> to vector<32xf32>
    %355 = vector.shape_cast %354 : vector<32xf32> to vector<32x1xf32>
    %cst_202 = arith.constant 3.906250e-03 : f32
    %356 = vector.broadcast %cst_202 : f32 to vector<32x1xf32>
    %357 = arith.mulf %355, %356 : vector<32x1xf32>
    %358 = arith.mulf %351, %351 : vector<32x256xf32>
    %cst_203 = arith.constant dense<0.000000e+00> : vector<32xf32>
    %359 = vector.multi_reduction <add>, %358, %cst_203 [1] : vector<32x256xf32> to vector<32xf32>
    %360 = vector.shape_cast %359 : vector<32xf32> to vector<32x1xf32>
    %cst_204 = arith.constant 3.906250e-03 : f32
    %361 = vector.broadcast %cst_204 : f32 to vector<32x1xf32>
    %362 = arith.mulf %360, %361 : vector<32x1xf32>
    %363 = arith.mulf %357, %357 : vector<32x1xf32>
    %364 = arith.subf %362, %363 : vector<32x1xf32>
    %cst_205 = arith.constant 0.000000e+00 : f32
    %365 = vector.broadcast %cst_205 : f32 to vector<32x1xf32>
    %366 = arith.maximumf %364, %365 : vector<32x1xf32>
    %cst_206 = arith.constant 9.99999974E-6 : f32
    %367 = vector.broadcast %cst_206 : f32 to vector<32x1xf32>
    %368 = arith.addf %366, %367 : vector<32x1xf32>
    %369 = math.rsqrt %368 : vector<32x1xf32>
    %370 = vector.broadcast %357 : vector<32x1xf32> to vector<32x256xf32>
    %371 = arith.subf %351, %370 : vector<32x256xf32>
    %372 = vector.extract_strided_slice %353 {offsets = [0, 0], sizes = [32, 1], strides = [1, 1]} : vector<64x1xf32> to vector<32x1xf32>
    %373 = arith.mulf %369, %372 : vector<32x1xf32>
    %374 = vector.broadcast %373 : vector<32x1xf32> to vector<32x256xf32>
    %375 = arith.mulf %371, %374 : vector<32x256xf32>
    %376 = vector.extract_strided_slice %353 {offsets = [32, 0], sizes = [32, 1], strides = [1, 1]} : vector<64x1xf32> to vector<32x1xf32>
    %377 = vector.broadcast %376 : vector<32x1xf32> to vector<32x256xf32>
    %378 = arith.addf %375, %377 : vector<32x256xf32>
    %cst_207 = arith.constant 0.000000e+00 : f32
    %379 = vector.broadcast %cst_207 : f32 to vector<32x256xf32>
    %380 = arith.cmpf oge, %378, %379 : vector<32x256xf32>
    %cst_208 = arith.constant 2.000000e-01 : f32
    %381 = vector.broadcast %cst_208 : f32 to vector<32x256xf32>
    %382 = arith.mulf %381, %378 : vector<32x256xf32>
    %383 = arith.select %380, %378, %382 : vector<32x256xi1>, vector<32x256xf32>
    %c1_209 = arith.constant 1 : index
    %c0_210 = arith.constant 0 : index
    %c0_211 = arith.constant 0 : index
    %384 = vector.load %arg12[%c1_209, %c0_210, %c0_211] : memref<2x32x256xf32, #tpu.memory_space<vmem>>, vector<1x32x256xf32>
    %385 = vector.shape_cast %384 : vector<1x32x256xf32> to vector<32x256xf32>
    %386 = vector.shape_cast %383 : vector<32x256xf32> to vector<1x32x256xf32>
    tpu.vector_store %arg12[%c1_209, %c0_210, %c0_211], %386 {strides = array<i32>} : memref<2x32x256xf32, #tpu.memory_space<vmem>>, vector<1x32x256xf32>,
    return
  }
  func.func @transform_0(%arg0: i32) -> (i32, i32, i32) {
    %c0_i32 = arith.constant 0 : i32
    %c0_i32_0 = arith.constant 0 : i32
    %c0_i32_1 = arith.constant 0 : i32
    return %arg0, %c0_i32, %c0_i32_0 : i32, i32, i32
  }
  func.func @transform_1(%arg0: i32) -> (i32, i32, i32) {
    %c0_i32 = arith.constant 0 : i32
    %c0_i32_0 = arith.constant 0 : i32
    %c0_i32_1 = arith.constant 0 : i32
    return %arg0, %c0_i32, %c0_i32_0 : i32, i32, i32
  }
  func.func @transform_2(%arg0: i32) -> (i32, i32, i32) {
    %c0_i32 = arith.constant 0 : i32
    %c0_i32_0 = arith.constant 0 : i32
    %c0_i32_1 = arith.constant 0 : i32
    return %arg0, %c0_i32, %c0_i32_0 : i32, i32, i32
  }
  func.func @transform_3(%arg0: i32) -> (i32, i32, i32) {
    %c0_i32 = arith.constant 0 : i32
    %c0_i32_0 = arith.constant 0 : i32
    %c0_i32_1 = arith.constant 0 : i32
    return %arg0, %c0_i32, %c0_i32_0 : i32, i32, i32
  }
  func.func @transform_4(%arg0: i32) -> (i32, i32, i32) {
    %c0_i32 = arith.constant 0 : i32
    %c0_i32_0 = arith.constant 0 : i32
    %c0_i32_1 = arith.constant 0 : i32
    %c0_i32_2 = arith.constant 0 : i32
    return %c0_i32, %c0_i32_0, %c0_i32_1 : i32, i32, i32
  }
  func.func @transform_5(%arg0: i32) -> (i32, i32, i32) {
    %c0_i32 = arith.constant 0 : i32
    %c0_i32_0 = arith.constant 0 : i32
    %c0_i32_1 = arith.constant 0 : i32
    %c0_i32_2 = arith.constant 0 : i32
    return %c0_i32, %c0_i32_0, %c0_i32_1 : i32, i32, i32
  }
  func.func @transform_6(%arg0: i32) -> (i32, i32) {
    %c0_i32 = arith.constant 0 : i32
    %c0_i32_0 = arith.constant 0 : i32
    %c0_i32_1 = arith.constant 0 : i32
    return %c0_i32, %c0_i32_0 : i32, i32
  }
  func.func @transform_7(%arg0: i32) -> (i32, i32) {
    %c0_i32 = arith.constant 0 : i32
    %c0_i32_0 = arith.constant 0 : i32
    %c0_i32_1 = arith.constant 0 : i32
    return %c0_i32, %c0_i32_0 : i32, i32
  }
  func.func @transform_8(%arg0: i32) -> (i32, i32) {
    %c0_i32 = arith.constant 0 : i32
    %c0_i32_0 = arith.constant 0 : i32
    %c0_i32_1 = arith.constant 0 : i32
    return %c0_i32, %c0_i32_0 : i32, i32
  }
  func.func @transform_9(%arg0: i32) -> (i32, i32) {
    %c0_i32 = arith.constant 0 : i32
    %c0_i32_0 = arith.constant 0 : i32
    %c0_i32_1 = arith.constant 0 : i32
    return %c0_i32, %c0_i32_0 : i32, i32
  }
  func.func @transform_10(%arg0: i32) -> (i32, i32) {
    %c0_i32 = arith.constant 0 : i32
    %c0_i32_0 = arith.constant 0 : i32
    %c0_i32_1 = arith.constant 0 : i32
    return %c0_i32, %c0_i32_0 : i32, i32
  }
  func.func @transform_11(%arg0: i32) -> (i32, i32, i32) {
    %c0_i32 = arith.constant 0 : i32
    %c0_i32_0 = arith.constant 0 : i32
    %c0_i32_1 = arith.constant 0 : i32
    return %arg0, %c0_i32, %c0_i32_0 : i32, i32, i32
  }
}

</mosaic_0001>

<llo_original>
// kernel: synthesis_block_forward.1
$region0: #{synthesis_block_forward.1}
  #allocation0 [shape = 'u32[]', space=smem, size = 0x4, offset = 0x4, fixed_abs, tag = 'smem constant byte address 0x4 - core index']
  #allocation1 [shape = 'u32[144,128]{1,0:T(1,128)}', space=vmem, size = 0x12000, scoped, tag = 'internal scratch']
  %s0 = inlined_call_operand.vmem [shape: f32[4,32,256], index: 0, kind: input, shape index: {}]
  %s1 = inlined_call_operand.vmem [shape: f32[4,1,256], index: 1, kind: input, shape index: {}]
  %s2 = inlined_call_operand.vmem [shape: f32[4,64,1], index: 2, kind: input, shape index: {}]
  %s3 = inlined_call_operand.vmem [shape: f32[4,64,1], index: 3, kind: input, shape index: {}]
  %s4 = inlined_call_operand.vmem [shape: f32[6,1,256], index: 4, kind: input, shape index: {}]
  %s5 = inlined_call_operand.vmem [shape: f32[9,1,256], index: 5, kind: input, shape index: {}]
  %s6 = inlined_call_operand.vmem [shape: bf16[32,288], index: 6, kind: input, shape index: {}]
  %s7 = inlined_call_operand.vmem [shape: f32[32,1], index: 7, kind: input, shape index: {}]
  %s8 = inlined_call_operand.vmem [shape: f32[32,1], index: 8, kind: input, shape index: {}]
  %s9 = inlined_call_operand.vmem [shape: bf16[32,288], index: 9, kind: input, shape index: {}]
  %s10 = inlined_call_operand.vmem [shape: f32[32,1], index: 10, kind: input, shape index: {}]
  %s11 = inlined_call_operand.vmem [shape: f32[4,32,256], index: 11, kind: output, shape index: {}]
  %s12 = sld [smem:[#allocation0]]
  $region77: #{synthesis_block_forward.1} parent=0
    _
  %s14 = ssub.s32 1, %s12
  %s15 = scalar_select 0, %s14, %s12
  loop: start=0, step=1, limit=4
  $region2: #{synthesis_block_forward.1} parent=0 // loop_pre_header
    _
  $region3: #{synthesis_block_forward.1} parent=0 // loop_header
    %s17 = sphi 0, %s21
    %p18 = scmp.ge.s32.totalorder %s17, 4
    %s27 = sphi 0, %s29
    %s30 = sphi 0, %s27
    %s31 = sphi 0, %s30
    %s47 = sphi 0, %s31
    %s53 = sphi 0, %s55
    %s56 = sphi 0, %s53
    %s57 = sphi 0, %s56
    %s73 = sphi 0, %s57
    %s79 = sphi 0, %s81
    %s82 = sphi 0, %s79
    %s83 = sphi 0, %s82
    %s99 = sphi 0, %s83
    %s105 = sphi 0, %s107
    %s108 = sphi 0, %s105
    %s109 = sphi 0, %s108
    %s125 = sphi 0, %s109
    %s129 = sphi 0, %s129
    %s131 = sphi 0, %s129
    %s132 = sphi 0, %s131
    %s146 = sphi 0, %s132
    %s150 = sphi 0, %s150
    %s152 = sphi 0, %s150
    %s153 = sphi 0, %s152
    %s167 = sphi 0, %s153
    %s171 = sphi 0, %s171
    %s173 = sphi 0, %s171
    %s174 = sphi 0, %s173
    %s188 = sphi 0, %s174
    %s192 = sphi 0, %s192
    %s194 = sphi 0, %s192
    %s195 = sphi 0, %s194
    %s209 = sphi 0, %s195
    %s213 = sphi 0, %s213
    %s215 = sphi 0, %s213
    %s216 = sphi 0, %s215
    %s230 = sphi 0, %s216
    %s234 = sphi 0, %s234
    %s236 = sphi 0, %s234
    %s237 = sphi 0, %s236
    %s251 = sphi 0, %s237
    %s255 = sphi 0, %s255
    %s257 = sphi 0, %s255
    %s258 = sphi 0, %s257
    %s272 = sphi 0, %s258
    %s278 = sphi 0, %s280
    %s281 = sphi 0, %s278
    %s282 = sphi 0, %s281
    %s298 = sphi 0, %s282
  $region4: #{synthesis_block_forward.1} parent=0 // loop_header_branch
    %20 = sbr.rel (%p18) target = $region8
  $region5: #{synthesis_block_forward.1} parent=0 // loop_body
    %s22 = ssub.s32 %s17, 1
    %s23 = ssub.s32 %s17, 2
    %s24 = sadd.s32 %s17, 1
    %s25 = ssub.s32 %s17, %s24
    %p26 = scmp.eq.s32.totalorder %s25, 0
    %s28 = sadd.s32 %s27, 1
    %s29 = scalar_select %p26, %s27, %s28
    %p32 = pneg %p26
    %p33 = scmp.eq.s32.totalorder %s17, 1
    %p34 = por %p32, %p33
    %p35 = scmp.ne.s32.totalorder %s27, %s30
    %p36 = scmp.eq.s32.totalorder %s17, 0
    %p37 = por %p35, %p36
    %p38 = scmp.ne.s32.totalorder %s27, %s30
    %p39 = scmp.eq.s32.totalorder %s22, 1
    %p40 = por %p38, %p39
    %p41 = scmp.ne.s32.totalorder %s30, %s31
    %p42 = scmp.eq.s32.totalorder %s22, 0
    %p43 = por %p41, %p42
    %p44 = scmp.ne.s32.totalorder %s30, %s31
    %p45 = scmp.eq.s32.totalorder %s23, 1
    %p46 = por %p44, %p45
    %p48 = scmp.ne.s32.totalorder %s31, %s47
    %p49 = scmp.eq.s32.totalorder %s23, 0
    %p50 = por %p48, %p49
    %s51 = ssub.s32 %s17, %s24
    %p52 = scmp.eq.s32.totalorder %s51, 0
    %s54 = sadd.s32 %s53, 1
    %s55 = scalar_select %p52, %s53, %s54
    %p58 = pneg %p52
    %p59 = scmp.eq.s32.totalorder %s17, 1
    %p60 = por %p58, %p59
    %p61 = scmp.ne.s32.totalorder %s53, %s56
    %p62 = scmp.eq.s32.totalorder %s17, 0
    %p63 = por %p61, %p62
    %p64 = scmp.ne.s32.totalorder %s53, %s56
    %p65 = scmp.eq.s32.totalorder %s22, 1
    %p66 = por %p64, %p65
    %p67 = scmp.ne.s32.totalorder %s56, %s57
    %p68 = scmp.eq.s32.totalorder %s22, 0
    %p69 = por %p67, %p68
    %p70 = scmp.ne.s32.totalorder %s56, %s57
    %p71 = scmp.eq.s32.totalorder %s23, 1
    %p72 = por %p70, %p71
    %p74 = scmp.ne.s32.totalorder %s57, %s73
    %p75 = scmp.eq.s32.totalorder %s23, 0
    %p76 = por %p74, %p75
    %s77 = ssub.s32 %s17, %s24
    %p78 = scmp.eq.s32.totalorder %s77, 0
    %s80 = sadd.s32 %s79, 1
    %s81 = scalar_select %p78, %s79, %s80
    %p84 = pneg %p78
    %p85 = scmp.eq.s32.totalorder %s17, 1
    %p86 = por %p84, %p85
    %p87 = scmp.ne.s32.totalorder %s79, %s82
    %p88 = scmp.eq.s32.totalorder %s17, 0
    %p89 = por %p87, %p88
    %p90 = scmp.ne.s32.totalorder %s79, %s82
    %p91 = scmp.eq.s32.totalorder %s22, 1
    %p92 = por %p90, %p91
    %p93 = scmp.ne.s32.totalorder %s82, %s83
    %p94 = scmp.eq.s32.totalorder %s22, 0
    %p95 = por %p93, %p94
    %p96 = scmp.ne.s32.totalorder %s82, %s83
    %p97 = scmp.eq.s32.totalorder %s23, 1
    %p98 = por %p96, %p97
    %p100 = scmp.ne.s32.totalorder %s83, %s99
    %p101 = scmp.eq.s32.totalorder %s23, 0
    %p102 = por %p100, %p101
    %s103 = ssub.s32 %s17, %s24
    %p104 = scmp.eq.s32.totalorder %s103, 0
    %s106 = sadd.s32 %s105, 1
    %s107 = scalar_select %p104, %s105, %s106
    %p110 = pneg %p104
    %p111 = scmp.eq.s32.totalorder %s17, 1
    %p112 = por %p110, %p111
    %p113 = scmp.ne.s32.totalorder %s105, %s108
    %p114 = scmp.eq.s32.totalorder %s17, 0
    %p115 = por %p113, %p114
    %p116 = scmp.ne.s32.totalorder %s105, %s108
    %p117 = scmp.eq.s32.totalorder %s22, 1
    %p118 = por %p116, %p117
    %p119 = scmp.ne.s32.totalorder %s108, %s109
    %p120 = scmp.eq.s32.totalorder %s22, 0
    %p121 = por %p119, %p120
    %p122 = scmp.ne.s32.totalorder %s108, %s109
    %p123 = scmp.eq.s32.totalorder %s23, 1
    %p124 = por %p122, %p123
    %p126 = scmp.ne.s32.totalorder %s109, %s125
    %p127 = scmp.eq.s32.totalorder %s23, 0
    %p128 = por %p126, %p127
    %s130 = sadd.s32 %s129, 1
    %p133 = scmp.eq.s32.totalorder %s17, 1
    %p134 = scmp.ne.s32.totalorder %s129, %s131
    %p135 = scmp.eq.s32.totalorder %s17, 0
    %p136 = por %p134, %p135
    %p137 = scmp.ne.s32.totalorder %s129, %s131
    %p138 = scmp.eq.s32.totalorder %s22, 1
    %p139 = por %p137, %p138
    %p140 = scmp.ne.s32.totalorder %s131, %s132
    %p141 = scmp.eq.s32.totalorder %s22, 0
    %p142 = por %p140, %p141
    %p143 = scmp.ne.s32.totalorder %s131, %s132
    %p144 = scmp.eq.s32.totalorder %s23, 1
    %p145 = por %p143, %p144
    %p147 = scmp.ne.s32.totalorder %s132, %s146
    %p148 = scmp.eq.s32.totalorder %s23, 0
    %p149 = por %p147, %p148
    %s151 = sadd.s32 %s150, 1
    %p154 = scmp.eq.s32.totalorder %s17, 1
    %p155 = scmp.ne.s32.totalorder %s150, %s152
    %p156 = scmp.eq.s32.totalorder %s17, 0
    %p157 = por %p155, %p156
    %p158 = scmp.ne.s32.totalorder %s150, %s152
    %p159 = scmp.eq.s32.totalorder %s22, 1
    %p160 = por %p158, %p159
    %p161 = scmp.ne.s32.totalorder %s152, %s153
    %p162 = scmp.eq.s32.totalorder %s22, 0
    %p163 = por %p161, %p162
    %p164 = scmp.ne.s32.totalorder %s152, %s153
    %p165 = scmp.eq.s32.totalorder %s23, 1
    %p166 = por %p164, %p165
    %p168 = scmp.ne.s32.totalorder %s153, %s167
    %p169 = scmp.eq.s32.totalorder %s23, 0
    %p170 = por %p168, %p169
    %s172 = sadd.s32 %s171, 1
    %p175 = scmp.eq.s32.totalorder %s17, 1
    %p176 = scmp.ne.s32.totalorder %s171, %s173
    %p177 = scmp.eq.s32.totalorder %s17, 0
    %p178 = por %p176, %p177
    %p179 = scmp.ne.s32.totalorder %s171, %s173
    %p180 = scmp.eq.s32.totalorder %s22, 1
    %p181 = por %p179, %p180
    %p182 = scmp.ne.s32.totalorder %s173, %s174
    %p183 = scmp.eq.s32.totalorder %s22, 0
    %p184 = por %p182, %p183
    %p185 = scmp.ne.s32.totalorder %s173, %s174
    %p186 = scmp.eq.s32.totalorder %s23, 1
    %p187 = por %p185, %p186
    %p189 = scmp.ne.s32.totalorder %s174, %s188
    %p190 = scmp.eq.s32.totalorder %s23, 0
    %p191 = por %p189, %p190
    %s193 = sadd.s32 %s192, 1
    %p196 = scmp.eq.s32.totalorder %s17, 1
    %p197 = scmp.ne.s32.totalorder %s192, %s194
    %p198 = scmp.eq.s32.totalorder %s17, 0
    %p199 = por %p197, %p198
    %p200 = scmp.ne.s32.totalorder %s192, %s194
    %p201 = scmp.eq.s32.totalorder %s22, 1
    %p202 = por %p200, %p201
    %p203 = scmp.ne.s32.totalorder %s194, %s195
    %p204 = scmp.eq.s32.totalorder %s22, 0
    %p205 = por %p203, %p204
    %p206 = scmp.ne.s32.totalorder %s194, %s195
    %p207 = scmp.eq.s32.totalorder %s23, 1
    %p208 = por %p206, %p207
    %p210 = scmp.ne.s32.totalorder %s195, %s209
    %p211 = scmp.eq.s32.totalorder %s23, 0
    %p212 = por %p210, %p211
    %s214 = sadd.s32 %s213, 1
    %p217 = scmp.eq.s32.totalorder %s17, 1
    %p218 = scmp.ne.s32.totalorder %s213, %s215
    %p219 = scmp.eq.s32.totalorder %s17, 0
    %p220 = por %p218, %p219
    %p221 = scmp.ne.s32.totalorder %s213, %s215
    %p222 = scmp.eq.s32.totalorder %s22, 1
    %p223 = por %p221, %p222
    %p224 = scmp.ne.s32.totalorder %s215, %s216
    %p225 = scmp.eq.s32.totalorder %s22, 0
    %p226 = por %p224, %p225
    %p227 = scmp.ne.s32.totalorder %s215, %s216
    %p228 = scmp.eq.s32.totalorder %s23, 1
    %p229 = por %p227, %p228
    %p231 = scmp.ne.s32.totalorder %s216, %s230
    %p232 = scmp.eq.s32.totalorder %s23, 0
    %p233 = por %p231, %p232
    %s235 = sadd.s32 %s234, 1
    %p238 = scmp.eq.s32.totalorder %s17, 1
    %p239 = scmp.ne.s32.totalorder %s234, %s236
    %p240 = scmp.eq.s32.totalorder %s17, 0
    %p241 = por %p239, %p240
    %p242 = scmp.ne.s32.totalorder %s234, %s236
    %p243 = scmp.eq.s32.totalorder %s22, 1
    %p244 = por %p242, %p243
    %p245 = scmp.ne.s32.totalorder %s236, %s237
    %p246 = scmp.eq.s32.totalorder %s22, 0
    %p247 = por %p245, %p246
    %p248 = scmp.ne.s32.totalorder %s236, %s237
    %p249 = scmp.eq.s32.totalorder %s23, 1
    %p250 = por %p248, %p249
    %p252 = scmp.ne.s32.totalorder %s237, %s251
    %p253 = scmp.eq.s32.totalorder %s23, 0
    %p254 = por %p252, %p253
    %s256 = sadd.s32 %s255, 1
    %p259 = scmp.eq.s32.totalorder %s17, 1
    %p260 = scmp.ne.s32.totalorder %s255, %s257
    %p261 = scmp.eq.s32.totalorder %s17, 0
    %p262 = por %p260, %p261
    %p263 = scmp.ne.s32.totalorder %s255, %s257
    %p264 = scmp.eq.s32.totalorder %s22, 1
    %p265 = por %p263, %p264
    %p266 = scmp.ne.s32.totalorder %s257, %s258
    %p267 = scmp.eq.s32.totalorder %s22, 0
    %p268 = por %p266, %p267
    %p269 = scmp.ne.s32.totalorder %s257, %s258
    %p270 = scmp.eq.s32.totalorder %s23, 1
    %p271 = por %p269, %p270
    %p273 = scmp.ne.s32.totalorder %s258, %s272
    %p274 = scmp.eq.s32.totalorder %s23, 0
    %p275 = por %p273, %p274
    %s276 = ssub.s32 %s17, %s24
    %p277 = scmp.eq.s32.totalorder %s276, 0
    %s279 = sadd.s32 %s278, 1
    %s280 = scalar_select %p277, %s278, %s279
    %p283 = pneg %p277
    %p284 = scmp.eq.s32.totalorder %s17, 1
    %p285 = por %p283, %p284
    %p286 = scmp.ne.s32.totalorder %s278, %s281
    %p287 = scmp.eq.s32.totalorder %s17, 0
    %p288 = por %p286, %p287
    %p289 = scmp.ne.s32.totalorder %s278, %s281
    %p290 = scmp.eq.s32.totalorder %s22, 1
    %p291 = por %p289, %p290
    %p292 = scmp.ne.s32.totalorder %s281, %s282
    %p293 = scmp.eq.s32.totalorder %s22, 0
    %p294 = por %p292, %p293
    %p295 = scmp.ne.s32.totalorder %s281, %s282
    %p296 = scmp.eq.s32.totalorder %s23, 1
    %p297 = por %p295, %p296
    %p299 = scmp.ne.s32.totalorder %s282, %s298
    %p300 = scmp.eq.s32.totalorder %s23, 0
    %p301 = por %p299, %p300
    %p302 = scmp.le.s32.totalorder 1, %s17
    %p303 = scmp.lt.s32.totalorder %s17, 3
    %p304 = pnand %p302, %p303
    %p305 = pneg %p304
    // Predicated region
    $region9: #{synthesis_block_forward.1} parent=5 // pred_check
      _
    $region10: #{synthesis_block_forward.1} parent=5 // pred_check_branch
      %307 = sbr.rel (%p304) target = $region12
    $region11: #{synthesis_block_forward.1} parent=5 // pred_region
      %s308 = ssub.s32 %s17, 1
      // Predicated region
      $region13: #{synthesis_block_forward.1} parent=11 // pred_check
        %p309 = pneg %p142
      $region14: #{synthesis_block_forward.1} parent=11 // pred_check_branch
        %311 = sbr.rel (%p309) target = $region16
      $region15: #{synthesis_block_forward.1} parent=11 // pred_region
        _
      $region16: #{synthesis_block_forward.1} parent=11 // pred_fallthru
        _
      // Predicated region
      $region17: #{synthesis_block_forward.1} parent=11 // pred_check
        %p312 = pneg %p163
      $region18: #{synthesis_block_forward.1} parent=11 // pred_check_branch
        %314 = sbr.rel (%p312) target = $region20
      $region19: #{synthesis_block_forward.1} parent=11 // pred_region
        _
      $region20: #{synthesis_block_forward.1} parent=11 // pred_fallthru
        _
      // Predicated region
      $region21: #{synthesis_block_forward.1} parent=11 // pred_check
        %p315 = pneg %p184
      $region22: #{synthesis_block_forward.1} parent=11 // pred_check_branch
        %317 = sbr.rel (%p315) target = $region24
      $region23: #{synthesis_block_forward.1} parent=11 // pred_region
        _
      $region24: #{synthesis_block_forward.1} parent=11 // pred_fallthru
        _
      // Predicated region
      $region25: #{synthesis_block_forward.1} parent=11 // pred_check
        %p318 = pneg %p205
      $region26: #{synthesis_block_forward.1} parent=11 // pred_check_branch
        %320 = sbr.rel (%p318) target = $region28
      $region27: #{synthesis_block_forward.1} parent=11 // pred_region
        _
      $region28: #{synthesis_block_forward.1} parent=11 // pred_fallthru
        _
      // Predicated region
      $region29: #{synthesis_block_forward.1} parent=11 // pred_check
        %p321 = pneg %p226
      $region30: #{synthesis_block_forward.1} parent=11 // pred_check_branch
        %323 = sbr.rel (%p321) target = $region32
      $region31: #{synthesis_block_forward.1} parent=11 // pred_region
        _
      $region32: #{synthesis_block_forward.1} parent=11 // pred_fallthru
        _
      // Predicated region
      $region33: #{synthesis_block_forward.1} parent=11 // pred_check
        %p324 = pneg %p247
      $region34: #{synthesis_block_forward.1} parent=11 // pred_check_branch
        %326 = sbr.rel (%p324) target = $region36
      $region35: #{synthesis_block_forward.1} parent=11 // pred_region
        _
      $region36: #{synthesis_block_forward.1} parent=11 // pred_fallthru
        _
      // Predicated region
      $region37: #{synthesis_block_forward.1} parent=11 // pred_check
        %p327 = pneg %p268
      $region38: #{synthesis_block_forward.1} parent=11 // pred_check_branch
        %329 = sbr.rel (%p327) target = $region40
      $region39: #{synthesis_block_forward.1} parent=11 // pred_region
        _
      $region40: #{synthesis_block_forward.1} parent=11 // pred_fallthru
        _
    $region12: #{synthesis_block_forward.1} parent=5 // pred_fallthru
      _
    %p330 = scmp.lt.s32.totalorder %s17, 2
    // Predicated region
    $region41: #{synthesis_block_forward.1} parent=5 // pred_check
      %p331 = pneg %p330
    $region42: #{synthesis_block_forward.1} parent=5 // pred_check_branch
      %333 = sbr.rel (%p331) target = $region44
    $region43: #{synthesis_block_forward.1} parent=5 // pred_region
      // Predicated region
      $region45: #{synthesis_block_forward.1} parent=43 // pred_check
        %p334 = pneg %p37
      $region46: #{synthesis_block_forward.1} parent=43 // pred_check_branch
        %336 = sbr.rel (%p334) target = $region48
      $region47: #{synthesis_block_forward.1} parent=43 // pred_region
        %s337 = smul.u32 2, %s17
        %p338 = scmp.lt.s32.totalorder %s337, 3
        %s339 = scalar_select %p338, %s337, 3
        %s340 = smul.addr %s339, 8
        %s341 = smul.addr %s340, 8
        %s342 = scalar_lea.vmem %s0, %s341
        %s343 = smul.u32 2, %s17
      $region48: #{synthesis_block_forward.1} parent=43 // pred_fallthru
        _
      // Predicated region
      $region49: #{synthesis_block_forward.1} parent=43 // pred_check
        %p344 = pneg %p63
      $region50: #{synthesis_block_forward.1} parent=43 // pred_check_branch
        %346 = sbr.rel (%p344) target = $region52
      $region51: #{synthesis_block_forward.1} parent=43 // pred_region
        %s347 = smul.u32 2, %s17
        %p348 = scmp.lt.s32.totalorder %s347, 3
        %s349 = scalar_select %p348, %s347, 3
        %s350 = smul.addr %s349, 2
        %s351 = scalar_lea.vmem %s1, %s350
        %s352 = smul.u32 2, %s17
      $region52: #{synthesis_block_forward.1} parent=43 // pred_fallthru
        _
      // Predicated region
      $region53: #{synthesis_block_forward.1} parent=43 // pred_check
        %p353 = pneg %p89
      $region54: #{synthesis_block_forward.1} parent=43 // pred_check_branch
        %355 = sbr.rel (%p353) target = $region56
      $region55: #{synthesis_block_forward.1} parent=43 // pred_region
        %s356 = smul.u32 2, %s17
        %p357 = scmp.lt.s32.totalorder %s356, 3
        %s358 = scalar_select %p357, %s356, 3
        %s359 = smul.addr %s358, 8
        %s360 = smul.addr %s359, 8
        %s361 = scalar_lea.vmem %s2, %s360
        %s362 = smul.u32 2, %s17
      $region56: #{synthesis_block_forward.1} parent=43 // pred_fallthru
        _
      // Predicated region
      $region57: #{synthesis_block_forward.1} parent=43 // pred_check
        %p363 = pneg %p115
      $region58: #{synthesis_block_forward.1} parent=43 // pred_check_branch
        %365 = sbr.rel (%p363) target = $region60
      $region59: #{synthesis_block_forward.1} parent=43 // pred_region
        %s366 = smul.u32 2, %s17
        %p367 = scmp.lt.s32.totalorder %s366, 3
        %s368 = scalar_select %p367, %s366, 3
        %s369 = smul.addr %s368, 8
        %s370 = smul.addr %s369, 8
        %s371 = scalar_lea.vmem %s3, %s370
        %s372 = smul.u32 2, %s17
      $region60: #{synthesis_block_forward.1} parent=43 // pred_fallthru
        _
    $region44: #{synthesis_block_forward.1} parent=5 // pred_fallthru
      _
    %p373 = scmp.le.s32.totalorder 1, %s17
    %p374 = scmp.lt.s32.totalorder %s17, 3
    %p375 = pnand %p373, %p374
    %p376 = pneg %p375
    // Predicated region
    $region61: #{synthesis_block_forward.1} parent=5 // pred_check
      _
    $region62: #{synthesis_block_forward.1} parent=5 // pred_check_branch
      %378 = sbr.rel (%p375) target = $region64
    $region63: #{synthesis_block_forward.1} parent=5 // pred_region
      %s379 = ssub.s32 %s17, 1
      %s380 = smul.u32 2, %s22
      %p381 = scmp.lt.s32.totalorder %s380, 3
      %s382 = scalar_select %p381, %s380, 3
      %s383 = smul.addr %s382, 8
      %s384 = smul.addr %s383, 8
      %s385 = scalar_lea.vmem %s0, %s384
      %p386 = pneg %p43
      %p387 = pneg %p40
      %s388 = smul.u32 2, %s22
      %p389 = scmp.lt.s32.totalorder %s388, 3
      %s390 = scalar_select %p389, %s388, 3
      %s391 = smul.addr %s390, 2
      %s392 = scalar_lea.vmem %s1, %s391
      %p393 = pneg %p69
      %p394 = pneg %p66
      %s395 = smul.u32 2, %s22
      %p396 = scmp.lt.s32.totalorder %s395, 3
      %s397 = scalar_select %p396, %s395, 3
      %s398 = smul.addr %s397, 8
      %s399 = smul.addr %s398, 8
      %s400 = scalar_lea.vmem %s2, %s399
      %p401 = pneg %p95
      %p402 = pneg %p92
      %s403 = smul.u32 2, %s22
      %p404 = scmp.lt.s32.totalorder %s403, 3
      %s405 = scalar_select %p404, %s403, 3
      %s406 = smul.addr %s405, 8
      %s407 = smul.addr %s406, 8
      %s408 = scalar_lea.vmem %s3, %s407
      %p409 = pneg %p121
      %p410 = pneg %p118
      %p411 = pneg %p142
      %p412 = pneg %p139
      %p413 = pneg %p163
      %p414 = pneg %p160
      %p415 = pneg %p184
      %p416 = pneg %p181
      %p417 = pneg %p205
      %p418 = pneg %p202
      %p419 = pneg %p226
      %p420 = pneg %p223
      %p421 = pneg %p247
      %p422 = pneg %p244
      %p423 = pneg %p268
      %p424 = pneg %p265
      %p425 = pneg %p294
      %p426 = pneg %p291
      %s427 = smul.u32 2, %s22
      %p428 = scmp.lt.s32.totalorder %s427, 3
      %s429 = scalar_select %p428, %s427, 3
      %s430 = smul.addr %s429, 8
      %s431 = smul.addr %s430, 8
      %s432 = scalar_lea.vmem %s11, %s431
      %s433 = smul.u32 2, %s22
      %p434 = scmp.lt.s32.totalorder %s433, 3
      %s435 = scalar_select %p434, %s433, 3
      %s436 = smul.addr %s435, 8
      %s437 = smul.addr %s436, 8
      %s438 = scalar_lea.vmem %s0, %s437
      %s439 = smul.u32 2, %s22
      %s440 = smul.u32 2, %s22
      %p441 = scmp.lt.s32.totalorder %s440, 3
      %s442 = scalar_select %p441, %s440, 3
      %s443 = smul.addr %s442, 2
      %s444 = scalar_lea.vmem %s1, %s443
      %s445 = smul.u32 2, %s22
      %s446 = smul.u32 2, %s22
      %p447 = scmp.lt.s32.totalorder %s446, 3
      %s448 = scalar_select %p447, %s446, 3
      %s449 = smul.addr %s448, 8
      %s450 = smul.addr %s449, 8
      %s451 = scalar_lea.vmem %s2, %s450
      %s452 = smul.u32 2, %s22
      %s453 = smul.u32 2, %s22
      %p454 = scmp.lt.s32.totalorder %s453, 3
      %s455 = scalar_select %p454, %s453, 3
      %s456 = smul.addr %s455, 8
      %s457 = smul.addr %s456, 8
      %s458 = scalar_lea.vmem %s3, %s457
      %s459 = smul.u32 2, %s22
      %s460 = smul.u32 2, %s22
      %p461 = scmp.lt.s32.totalorder %s460, 3
      %s462 = scalar_select %p461, %s460, 3
      %s463 = smul.addr %s462, 8
      %s464 = smul.addr %s463, 8
      %s465 = scalar_lea.vmem %s11, %s464
      %s466 = smul.u32 2, %s22
      %v468 = vld [vmem:[%s6] sm:$0xff]
      %v469 = vld [vmem:[%s6 + $0x8] sm:$0xf]
      %v470 = vld [vmem:[%s6 + $0xc] sm:$0xff]
      %v471 = vld [vmem:[%s6 + $0x14] sm:$0xf]
      %v472 = vld [vmem:[%s6 + $0x18] sm:$0xff]
      %v473 = vld [vmem:[%s6 + $0x20] sm:$0xf]
      %v474 = vld [vmem:[%s6 + $0x24] sm:$0xff]
      %v475 = vld [vmem:[%s6 + $0x2c] sm:$0xf]
      %v476 = vld [vmem:[%s9] sm:$0xff]
      %v477 = vld [vmem:[%s9 + $0x8] sm:$0xf]
      %v478 = vld [vmem:[%s9 + $0xc] sm:$0xff]
      %v479 = vld [vmem:[%s9 + $0x14] sm:$0xf]
      %v480 = vld [vmem:[%s9 + $0x18] sm:$0xff]
      %v481 = vld [vmem:[%s9 + $0x20] sm:$0xf]
      %v482 = vld [vmem:[%s9 + $0x24] sm:$0xff]
      %v483 = vld [vmem:[%s9 + $0x2c] sm:$0xf]
      %v484 = vld [vmem:[%s7] sm:$0xff]
      %v485 = vld [vmem:[%s7 + $0x8] sm:$0xff]
      %v486 = vld [vmem:[%s7 + $0x10] sm:$0xff]
      %v487 = vld [vmem:[%s7 + $0x18] sm:$0xff]
      %v488 = vld [vmem:[%s10] sm:$0xff]
      %v489 = vld [vmem:[%s10 + $0x8] sm:$0xff]
      %v490 = vld [vmem:[%s10 + $0x10] sm:$0xff]
      %v491 = vld [vmem:[%s10 + $0x18] sm:$0xff]
      %v492 = vld [vmem:[%s8] sm:$0xff]
      %v493 = vld [vmem:[%s8 + $0x8] sm:$0xff]
      %v494 = vld [vmem:[%s8 + $0x10] sm:$0xff]
      %v495 = vld [vmem:[%s8 + $0x18] sm:$0xff]
      %v496 = vld [vmem:[%s4] sm:$0x3]
      %s497 = scalar_lea.vmem %s4, 2
      %v498 = vld [vmem:[%s497] sm:$0x3]
      %s499 = scalar_lea.vmem %s4, 4
      %v500 = vld [vmem:[%s499] sm:$0x3]
      %s501 = scalar_lea.vmem %s4, 6
      %v502 = vld [vmem:[%s501] sm:$0x3]
      %s503 = scalar_lea.vmem %s4, 8
      %v504 = vld [vmem:[%s503] sm:$0x3]
      %s505 = scalar_lea.vmem %s4, 10
      %v506 = vld [vmem:[%s505] sm:$0x3]
      %v507 = vld [vmem:[%s438] sm:$0xff]
      %v508 = vld [vmem:[%s438 + $0x8] sm:$0xff]
      %v509 = vld [vmem:[%s438 + $0x10] sm:$0xff]
      %v510 = vld [vmem:[%s438 + $0x18] sm:$0xff]
      %v511 = vld [vmem:[%s438 + $0x20] sm:$0xff]
      %v512 = vld [vmem:[%s438 + $0x28] sm:$0xff]
      %v513 = vld [vmem:[%s438 + $0x30] sm:$0xff]
      %v514 = vld [vmem:[%s438 + $0x38] sm:$0xff]
      %v516 = vlaneseq
      %v517 = vshrl.u32 %v516, 7
      %v518 = vsub.s32 0, %v517
      %v519 = vrot.slane %v496, %v518
      %v520 = vlaneseq
      %v521 = vshrl.u32 %v520, 7
      %v522 = vsub.s32 1, %v521
      %v523 = vrot.slane %v496, %v522
      %v526 = vmul.f32 %v519, %v507
      %v527 = vmul.f32 %v523, %v508
      %v528 = vmul.f32 %v519, %v509
      %v529 = vmul.f32 %v523, %v510
      %v530 = vmul.f32 %v519, %v511
      %v531 = vmul.f32 %v523, %v512
      %v532 = vmul.f32 %v519, %v513
      %v533 = vmul.f32 %v523, %v514
      %534 = vrot.lane.b32.xlu0 %v507, 1
      %v535 = vpop.permute.xlu0 %534
      %536 = vrot.lane.b32.xlu0 %v509, 1
      %v537 = vpop.permute.xlu0 %536
      %538 = vrot.lane.b32.xlu0 %v511, 1
      %v539 = vpop.permute.xlu0 %538
      %540 = vrot.lane.b32.xlu0 %v513, 1
      %v541 = vpop.permute.xlu0 %540
      %542 = vrot.lane.b32.xlu0 %v508, 1
      %v543 = vpop.permute.xlu0 %542
      %544 = vrot.lane.b32.xlu0 %v510, 1
      %v545 = vpop.permute.xlu0 %544
      %546 = vrot.lane.b32.xlu0 %v512, 1
      %v547 = vpop.permute.xlu0 %546
      %548 = vrot.lane.b32.xlu0 %v514, 1
      %v549 = vpop.permute.xlu0 %548
      %v550 = vlaneseq
      %v551 = vand.u32 %v550, 127
      %vm552 = vcmp.lt.s32.totalorder %v551, 1
      %v553 = vsel %vm552, %v535, %v543
      %v554 = vsel %vm552, %v537, %v545
      %v555 = vsel %vm552, %v539, %v547
      %v556 = vsel %vm552, %v541, %v549
      %v557 = vsel %vm552, %v543, %v535
      %v558 = vsel %vm552, %v545, %v537
      %v559 = vsel %vm552, %v547, %v539
      %v560 = vsel %vm552, %v549, %v541
      %v562 = vlaneseq
      %v563 = vshrl.u32 %v562, 7
      %v564 = vsub.s32 0, %v563
      %v565 = vrot.slane %v498, %v564
      %v566 = vlaneseq
      %v567 = vshrl.u32 %v566, 7
      %v568 = vsub.s32 1, %v567
      %v569 = vrot.slane %v498, %v568
      %v572 = vmul.f32 %v565, %v557
      %v573 = vmul.f32 %v569, %v553
      %v574 = vmul.f32 %v565, %v558
      %v575 = vmul.f32 %v569, %v554
      %v576 = vmul.f32 %v565, %v559
      %v577 = vmul.f32 %v569, %v555
      %v578 = vmul.f32 %v565, %v560
      %v579 = vmul.f32 %v569, %v556
      %v580 = vadd.f32 %v526, %v572
      %v581 = vadd.f32 %v527, %v573
      %v582 = vadd.f32 %v528, %v574
      %v583 = vadd.f32 %v529, %v575
      %v584 = vadd.f32 %v530, %v576
      %v585 = vadd.f32 %v531, %v577
      %v586 = vadd.f32 %v532, %v578
      %v587 = vadd.f32 %v533, %v579
      %588 = vrot.lane.b32.xlu0 %v507, 127
      %v589 = vpop.permute.xlu0 %588
      %590 = vrot.lane.b32.xlu0 %v509, 127
      %v591 = vpop.permute.xlu0 %590
      %592 = vrot.lane.b32.xlu0 %v511, 127
      %v593 = vpop.permute.xlu0 %592
      %594 = vrot.lane.b32.xlu0 %v513, 127
      %v595 = vpop.permute.xlu0 %594
      %596 = vrot.lane.b32.xlu0 %v508, 127
      %v597 = vpop.permute.xlu0 %596
      %598 = vrot.lane.b32.xlu0 %v510, 127
      %v599 = vpop.permute.xlu0 %598
      %600 = vrot.lane.b32.xlu0 %v512, 127
      %v601 = vpop.permute.xlu0 %600
      %602 = vrot.lane.b32.xlu0 %v514, 127
      %v603 = vpop.permute.xlu0 %602
      %vm604 = vcmp.lt.s32.totalorder %v551, 127
      %v605 = vsel %vm604, %v589, %v597
      %v606 = vsel %vm604, %v591, %v599
      %v607 = vsel %vm604, %v593, %v601
      %v608 = vsel %vm604, %v595, %v603
      %v609 = vsel %vm604, %v597, %v589
      %v610 = vsel %vm604, %v599, %v591
      %v611 = vsel %vm604, %v601, %v593
      %v612 = vsel %vm604, %v603, %v595
      %v614 = vlaneseq
      %v615 = vshrl.u32 %v614, 7
      %v616 = vsub.s32 0, %v615
      %v617 = vrot.slane %v500, %v616
      %v618 = vlaneseq
      %v619 = vshrl.u32 %v618, 7
      %v620 = vsub.s32 1, %v619
      %v621 = vrot.slane %v500, %v620
      %v624 = vmul.f32 %v617, %v605
      %v625 = vmul.f32 %v621, %v609
      %v626 = vmul.f32 %v617, %v606
      %v627 = vmul.f32 %v621, %v610
      %v628 = vmul.f32 %v617, %v607
      %v629 = vmul.f32 %v621, %v611
      %v630 = vmul.f32 %v617, %v608
      %v631 = vmul.f32 %v621, %v612
      %v632 = vadd.f32 %v580, %v624
      %v633 = vadd.f32 %v581, %v625
      %v634 = vadd.f32 %v582, %v626
      %v635 = vadd.f32 %v583, %v627
      %v636 = vadd.f32 %v584, %v628
      %v637 = vadd.f32 %v585, %v629
      %v638 = vadd.f32 %v586, %v630
      %v639 = vadd.f32 %v587, %v631
      %v641 = vlaneseq
      %v642 = vshrl.u32 %v641, 7
      %v643 = vsub.s32 0, %v642
      %v644 = vrot.slane %v502, %v643
      %v645 = vlaneseq
      %v646 = vshrl.u32 %v645, 7
      %v647 = vsub.s32 1, %v646
      %v648 = vrot.slane %v502, %v647
      %v651 = vmul.f32 %v644, %v632
      %v652 = vmul.f32 %v648, %v633
      %v653 = vmul.f32 %v644, %v634
      %v654 = vmul.f32 %v648, %v635
      %v655 = vmul.f32 %v644, %v636
      %v656 = vmul.f32 %v648, %v637
      %v657 = vmul.f32 %v644, %v638
      %v658 = vmul.f32 %v648, %v639
      %659 = vrot.lane.b32.xlu0 %v632, 16
      %v660 = vpop.permute.xlu0 %659
      %661 = vrot.lane.b32.xlu0 %v634, 16
      %v662 = vpop.permute.xlu0 %661
      %663 = vrot.lane.b32.xlu0 %v636, 16
      %v664 = vpop.permute.xlu0 %663
      %665 = vrot.lane.b32.xlu0 %v638, 16
      %v666 = vpop.permute.xlu0 %665
      %667 = vrot.lane.b32.xlu0 %v633, 16
      %v668 = vpop.permute.xlu0 %667
      %669 = vrot.lane.b32.xlu0 %v635, 16
      %v670 = vpop.permute.xlu0 %669
      %671 = vrot.lane.b32.xlu0 %v637, 16
      %v672 = vpop.permute.xlu0 %671
      %673 = vrot.lane.b32.xlu0 %v639, 16
      %v674 = vpop.permute.xlu0 %673
      %vm675 = vcmp.lt.s32.totalorder %v551, 16
      %v676 = vsel %vm675, %v660, %v668
      %v677 = vsel %vm675, %v662, %v670
      %v678 = vsel %vm675, %v664, %v672
      %v679 = vsel %vm675, %v666, %v674
      %v680 = vsel %vm675, %v668, %v660
      %v681 = vsel %vm675, %v670, %v662
      %v682 = vsel %vm675, %v672, %v664
      %v683 = vsel %vm675, %v674, %v666
      %v685 = vlaneseq
      %v686 = vshrl.u32 %v685, 7
      %v687 = vsub.s32 0, %v686
      %v688 = vrot.slane %v504, %v687
      %v689 = vlaneseq
      %v690 = vshrl.u32 %v689, 7
      %v691 = vsub.s32 1, %v690
      %v692 = vrot.slane %v504, %v691
      %v695 = vmul.f32 %v688, %v680
      %v696 = vmul.f32 %v692, %v676
      %v697 = vmul.f32 %v688, %v681
      %v698 = vmul.f32 %v692, %v677
      %v699 = vmul.f32 %v688, %v682
      %v700 = vmul.f32 %v692, %v678
      %v701 = vmul.f32 %v688, %v683
      %v702 = vmul.f32 %v692, %v679
      %v703 = vadd.f32 %v651, %v695
      %v704 = vadd.f32 %v652, %v696
      %v705 = vadd.f32 %v653, %v697
      %v706 = vadd.f32 %v654, %v698
      %v707 = vadd.f32 %v655, %v699
      %v708 = vadd.f32 %v656, %v700
      %v709 = vadd.f32 %v657, %v701
      %v710 = vadd.f32 %v658, %v702
      %711 = vrot.lane.b32.xlu0 %v632, 112
      %v712 = vpop.permute.xlu0 %711
      %713 = vrot.lane.b32.xlu0 %v634, 112
      %v714 = vpop.permute.xlu0 %713
      %715 = vrot.lane.b32.xlu0 %v636, 112
      %v716 = vpop.permute.xlu0 %715
      %717 = vrot.lane.b32.xlu0 %v638, 112
      %v718 = vpop.permute.xlu0 %717
      %719 = vrot.lane.b32.xlu0 %v633, 112
      %v720 = vpop.permute.xlu0 %719
      %721 = vrot.lane.b32.xlu0 %v635, 112
      %v722 = vpop.permute.xlu0 %721
      %723 = vrot.lane.b32.xlu0 %v637, 112
      %v724 = vpop.permute.xlu0 %723
      %725 = vrot.lane.b32.xlu0 %v639, 112
      %v726 = vpop.permute.xlu0 %725
      %vm727 = vcmp.lt.s32.totalorder %v551, 112
      %v728 = vsel %vm727, %v712, %v720
      %v729 = vsel %vm727, %v714, %v722
      %v730 = vsel %vm727, %v716, %v724
      %v731 = vsel %vm727, %v718, %v726
      %v732 = vsel %vm727, %v720, %v712
      %v733 = vsel %vm727, %v722, %v714
      %v734 = vsel %vm727, %v724, %v716
      %v735 = vsel %vm727, %v726, %v718
      %v737 = vlaneseq
      %v738 = vshrl.u32 %v737, 7
      %v739 = vsub.s32 0, %v738
      %v740 = vrot.slane %v506, %v739
      %v741 = vlaneseq
      %v742 = vshrl.u32 %v741, 7
      %v743 = vsub.s32 1, %v742
      %v744 = vrot.slane %v506, %v743
      %v747 = vmul.f32 %v740, %v728
      %v748 = vmul.f32 %v744, %v732
      %v749 = vmul.f32 %v740, %v729
      %v750 = vmul.f32 %v744, %v733
      %v751 = vmul.f32 %v740, %v730
      %v752 = vmul.f32 %v744, %v734
      %v753 = vmul.f32 %v740, %v731
      %v754 = vmul.f32 %v744, %v735
      %v755 = vadd.f32 %v703, %v747
      %v756 = vadd.f32 %v704, %v748
      %v757 = vadd.f32 %v705, %v749
      %v758 = vadd.f32 %v706, %v750
      %v759 = vadd.f32 %v707, %v751
      %v760 = vadd.f32 %v708, %v752
      %v761 = vadd.f32 %v709, %v753
      %v762 = vadd.f32 %v710, %v754
      %763 = vrot.lane.b32.xlu0 %v755, 17
      %v764 = vpop.permute.xlu0 %763
      %765 = vrot.lane.b32.xlu0 %v757, 17
      %v766 = vpop.permute.xlu0 %765
      %767 = vrot.lane.b32.xlu0 %v759, 17
      %v768 = vpop.permute.xlu0 %767
      %769 = vrot.lane.b32.xlu0 %v761, 17
      %v770 = vpop.permute.xlu0 %769
      %771 = vrot.lane.b32.xlu0 %v756, 17
      %v772 = vpop.permute.xlu0 %771
      %773 = vrot.lane.b32.xlu0 %v758, 17
      %v774 = vpop.permute.xlu0 %773
      %775 = vrot.lane.b32.xlu0 %v760, 17
      %v776 = vpop.permute.xlu0 %775
      %777 = vrot.lane.b32.xlu0 %v762, 17
      %v778 = vpop.permute.xlu0 %777
      %vm779 = vcmp.lt.s32.totalorder %v551, 17
      %v780 = vsel %vm779, %v764, %v772
      %v781 = vsel %vm779, %v766, %v774
      %v782 = vsel %vm779, %v768, %v776
      %v783 = vsel %vm779, %v770, %v778
      %v784 = vsel %vm779, %v772, %v764
      %v785 = vsel %vm779, %v774, %v766
      %v786 = vsel %vm779, %v776, %v768
      %v787 = vsel %vm779, %v778, %v770
      %v788 = vld [vmem:[%s5] sm:$0x3]
      %v790 = vlaneseq
      %v791 = vshrl.u32 %v790, 7
      %v792 = vsub.s32 0, %v791
      %v793 = vrot.slane %v788, %v792
      %v794 = vlaneseq
      %v795 = vshrl.u32 %v794, 7
      %v796 = vsub.s32 1, %v795
      %v797 = vrot.slane %v788, %v796
      %v800 = vmul.f32 %v784, %v793
      %v801 = vmul.f32 %v780, %v797
      %v802 = vmul.f32 %v785, %v793
      %v803 = vmul.f32 %v781, %v797
      %v804 = vmul.f32 %v786, %v793
      %v805 = vmul.f32 %v782, %v797
      %v806 = vmul.f32 %v787, %v793
      %v807 = vmul.f32 %v783, %v797
      %808 = vrot.lane.b32.xlu0 %v755, 16
      %v809 = vpop.permute.xlu0 %808
      %810 = vrot.lane.b32.xlu0 %v757, 16
      %v811 = vpop.permute.xlu0 %810
      %812 = vrot.lane.b32.xlu0 %v759, 16
      %v813 = vpop.permute.xlu0 %812
      %814 = vrot.lane.b32.xlu0 %v761, 16
      %v815 = vpop.permute.xlu0 %814
      %816 = vrot.lane.b32.xlu0 %v756, 16
      %v817 = vpop.permute.xlu0 %816
      %818 = vrot.lane.b32.xlu0 %v758, 16
      %v819 = vpop.permute.xlu0 %818
      %820 = vrot.lane.b32.xlu0 %v760, 16
      %v821 = vpop.permute.xlu0 %820
      %822 = vrot.lane.b32.xlu0 %v762, 16
      %v823 = vpop.permute.xlu0 %822
      %v824 = vsel %vm675, %v809, %v817
      %v825 = vsel %vm675, %v811, %v819
      %v826 = vsel %vm675, %v813, %v821
      %v827 = vsel %vm675, %v815, %v823
      %v828 = vsel %vm675, %v817, %v809
      %v829 = vsel %vm675, %v819, %v811
      %v830 = vsel %vm675, %v821, %v813
      %v831 = vsel %vm675, %v823, %v815
      %s832 = scalar_lea.vmem %s5, 2
      %v833 = vld [vmem:[%s832] sm:$0x3]
      %v835 = vlaneseq
      %v836 = vshrl.u32 %v835, 7
      %v837 = vsub.s32 0, %v836
      %v838 = vrot.slane %v833, %v837
      %v839 = vlaneseq
      %v840 = vshrl.u32 %v839, 7
      %v841 = vsub.s32 1, %v840
      %v842 = vrot.slane %v833, %v841
      %v845 = vmul.f32 %v828, %v838
      %v846 = vmul.f32 %v824, %v842
      %v847 = vmul.f32 %v829, %v838
      %v848 = vmul.f32 %v825, %v842
      %v849 = vmul.f32 %v830, %v838
      %v850 = vmul.f32 %v826, %v842
      %v851 = vmul.f32 %v831, %v838
      %v852 = vmul.f32 %v827, %v842
      %853 = vrot.lane.b32.xlu0 %v755, 15
      %v854 = vpop.permute.xlu0 %853
      %855 = vrot.lane.b32.xlu0 %v757, 15
      %v856 = vpop.permute.xlu0 %855
      %857 = vrot.lane.b32.xlu0 %v759, 15
      %v858 = vpop.permute.xlu0 %857
      %859 = vrot.lane.b32.xlu0 %v761, 15
      %v860 = vpop.permute.xlu0 %859
      %861 = vrot.lane.b32.xlu0 %v756, 15
      %v862 = vpop.permute.xlu0 %861
      %863 = vrot.lane.b32.xlu0 %v758, 15
      %v864 = vpop.permute.xlu0 %863
      %865 = vrot.lane.b32.xlu0 %v760, 15
      %v866 = vpop.permute.xlu0 %865
      %867 = vrot.lane.b32.xlu0 %v762, 15
      %v868 = vpop.permute.xlu0 %867
      %vm869 = vcmp.lt.s32.totalorder %v551, 15
      %v870 = vsel %vm869, %v854, %v862
      %v871 = vsel %vm869, %v856, %v864
      %v872 = vsel %vm869, %v858, %v866
      %v873 = vsel %vm869, %v860, %v868
      %v874 = vsel %vm869, %v862, %v854
      %v875 = vsel %vm869, %v864, %v856
      %v876 = vsel %vm869, %v866, %v858
      %v877 = vsel %vm869, %v868, %v860
      %s878 = scalar_lea.vmem %s5, 4
      %v879 = vld [vmem:[%s878] sm:$0x3]
      %v881 = vlaneseq
      %v882 = vshrl.u32 %v881, 7
      %v883 = vsub.s32 0, %v882
      %v884 = vrot.slane %v879, %v883
      %v885 = vlaneseq
      %v886 = vshrl.u32 %v885, 7
      %v887 = vsub.s32 1, %v886
      %v888 = vrot.slane %v879, %v887
      %v891 = vmul.f32 %v874, %v884
      %v892 = vmul.f32 %v870, %v888
      %v893 = vmul.f32 %v875, %v884
      %v894 = vmul.f32 %v871, %v888
      %v895 = vmul.f32 %v876, %v884
      %v896 = vmul.f32 %v872, %v888
      %v897 = vmul.f32 %v877, %v884
      %v898 = vmul.f32 %v873, %v888
      %899 = vrot.lane.b32.xlu0 %v755, 1
      %v900 = vpop.permute.xlu0 %899
      %901 = vrot.lane.b32.xlu0 %v757, 1
      %v902 = vpop.permute.xlu0 %901
      %903 = vrot.lane.b32.xlu0 %v759, 1
      %v904 = vpop.permute.xlu0 %903
      %905 = vrot.lane.b32.xlu0 %v761, 1
      %v906 = vpop.permute.xlu0 %905
      %907 = vrot.lane.b32.xlu0 %v756, 1
      %v908 = vpop.permute.xlu0 %907
      %909 = vrot.lane.b32.xlu0 %v758, 1
      %v910 = vpop.permute.xlu0 %909
      %911 = vrot.lane.b32.xlu0 %v760, 1
      %v912 = vpop.permute.xlu0 %911
      %913 = vrot.lane.b32.xlu0 %v762, 1
      %v914 = vpop.permute.xlu0 %913
      %v915 = vsel %vm552, %v900, %v908
      %v916 = vsel %vm552, %v902, %v910
      %v917 = vsel %vm552, %v904, %v912
      %v918 = vsel %vm552, %v906, %v914
      %v919 = vsel %vm552, %v908, %v900
      %v920 = vsel %vm552, %v910, %v902
      %v921 = vsel %vm552, %v912, %v904
      %v922 = vsel %vm552, %v914, %v906
      %s923 = scalar_lea.vmem %s5, 6
      %v924 = vld [vmem:[%s923] sm:$0x3]
      %v926 = vlaneseq
      %v927 = vshrl.u32 %v926, 7
      %v928 = vsub.s32 0, %v927
      %v929 = vrot.slane %v924, %v928
      %v930 = vlaneseq
      %v931 = vshrl.u32 %v930, 7
      %v932 = vsub.s32 1, %v931
      %v933 = vrot.slane %v924, %v932
      %v936 = vmul.f32 %v919, %v929
      %v937 = vmul.f32 %v915, %v933
      %v938 = vmul.f32 %v920, %v929
      %v939 = vmul.f32 %v916, %v933
      %v940 = vmul.f32 %v921, %v929
      %v941 = vmul.f32 %v917, %v933
      %v942 = vmul.f32 %v922, %v929
      %v943 = vmul.f32 %v918, %v933
      %944 = vrot.lane.b32.xlu0 %v755, 127
      %v945 = vpop.permute.xlu0 %944
      %946 = vrot.lane.b32.xlu0 %v757, 127
      %v947 = vpop.permute.xlu0 %946
      %948 = vrot.lane.b32.xlu0 %v759, 127
      %v949 = vpop.permute.xlu0 %948
      %950 = vrot.lane.b32.xlu0 %v761, 127
      %v951 = vpop.permute.xlu0 %950
      %952 = vrot.lane.b32.xlu0 %v756, 127
      %v953 = vpop.permute.xlu0 %952
      %954 = vrot.lane.b32.xlu0 %v758, 127
      %v955 = vpop.permute.xlu0 %954
      %956 = vrot.lane.b32.xlu0 %v760, 127
      %v957 = vpop.permute.xlu0 %956
      %958 = vrot.lane.b32.xlu0 %v762, 127
      %v959 = vpop.permute.xlu0 %958
      %v960 = vsel %vm604, %v945, %v953
      %v961 = vsel %vm604, %v947, %v955
      %v962 = vsel %vm604, %v949, %v957
      %v963 = vsel %vm604, %v951, %v959
      %v964 = vsel %vm604, %v953, %v945
      %v965 = vsel %vm604, %v955, %v947
      %v966 = vsel %vm604, %v957, %v949
      %v967 = vsel %vm604, %v959, %v951
      %s968 = scalar_lea.vmem %s5, 10
      %v969 = vld [vmem:[%s968] sm:$0x3]
      %v971 = vlaneseq
      %v972 = vshrl.u32 %v971, 7
      %v973 = vsub.s32 0, %v972
      %v974 = vrot.slane %v969, %v973
      %v975 = vlaneseq
      %v976 = vshrl.u32 %v975, 7
      %v977 = vsub.s32 1, %v976
      %v978 = vrot.slane %v969, %v977
      %v981 = vmul.f32 %v960, %v974
      %v982 = vmul.f32 %v964, %v978
      %v983 = vmul.f32 %v961, %v974
      %v984 = vmul.f32 %v965, %v978
      %v985 = vmul.f32 %v962, %v974
      %v986 = vmul.f32 %v966, %v978
      %v987 = vmul.f32 %v963, %v974
      %v988 = vmul.f32 %v967, %v978
      %989 = vrot.lane.b32.xlu0 %v755, 113
      %v990 = vpop.permute.xlu0 %989
      %991 = vrot.lane.b32.xlu0 %v757, 113
      %v992 = vpop.permute.xlu0 %991
      %993 = vrot.lane.b32.xlu0 %v759, 113
      %v994 = vpop.permute.xlu0 %993
      %995 = vrot.lane.b32.xlu0 %v761, 113
      %v996 = vpop.permute.xlu0 %995
      %997 = vrot.lane.b32.xlu0 %v756, 113
      %v998 = vpop.permute.xlu0 %997
      %999 = vrot.lane.b32.xlu0 %v758, 113
      %v1000 = vpop.permute.xlu0 %999
      %1001 = vrot.lane.b32.xlu0 %v760, 113
      %v1002 = vpop.permute.xlu0 %1001
      %1003 = vrot.lane.b32.xlu0 %v762, 113
      %v1004 = vpop.permute.xlu0 %1003
      %vm1005 = vcmp.lt.s32.totalorder %v551, 113
      %v1006 = vsel %vm1005, %v990, %v998
      %v1007 = vsel %vm1005, %v992, %v1000
      %v1008 = vsel %vm1005, %v994, %v1002
      %v1009 = vsel %vm1005, %v996, %v1004
      %v1010 = vsel %vm1005, %v998, %v990
      %v1011 = vsel %vm1005, %v1000, %v992
      %v1012 = vsel %vm1005, %v1002, %v994
      %v1013 = vsel %vm1005, %v1004, %v996
      %s1014 = scalar_lea.vmem %s5, 12
      %v1015 = vld [vmem:[%s1014] sm:$0x3]
      %v1017 = vlaneseq
      %v1018 = vshrl.u32 %v1017, 7
      %v1019 = vsub.s32 0, %v1018
      %v1020 = vrot.slane %v1015, %v1019
      %v1021 = vlaneseq
      %v1022 = vshrl.u32 %v1021, 7
      %v1023 = vsub.s32 1, %v1022
      %v1024 = vrot.slane %v1015, %v1023
      %v1027 = vmul.f32 %v1006, %v1020
      %v1028 = vmul.f32 %v1010, %v1024
      %v1029 = vmul.f32 %v1007, %v1020
      %v1030 = vmul.f32 %v1011, %v1024
      %v1031 = vmul.f32 %v1008, %v1020
      %v1032 = vmul.f32 %v1012, %v1024
      %v1033 = vmul.f32 %v1009, %v1020
      %v1034 = vmul.f32 %v1013, %v1024
      %1035 = vrot.lane.b32.xlu0 %v755, 112
      %v1036 = vpop.permute.xlu0 %1035
      %1037 = vrot.lane.b32.xlu0 %v757, 112
      %v1038 = vpop.permute.xlu0 %1037
      %1039 = vrot.lane.b32.xlu0 %v759, 112
      %v1040 = vpop.permute.xlu0 %1039
      %1041 = vrot.lane.b32.xlu0 %v761, 112
      %v1042 = vpop.permute.xlu0 %1041
      %1043 = vrot.lane.b32.xlu0 %v756, 112
      %v1044 = vpop.permute.xlu0 %1043
      %1045 = vrot.lane.b32.xlu0 %v758, 112
      %v1046 = vpop.permute.xlu0 %1045
      %1047 = vrot.lane.b32.xlu0 %v760, 112
      %v1048 = vpop.permute.xlu0 %1047
      %1049 = vrot.lane.b32.xlu0 %v762, 112
      %v1050 = vpop.permute.xlu0 %1049
      %v1051 = vsel %vm727, %v1036, %v1044
      %v1052 = vsel %vm727, %v1038, %v1046
      %v1053 = vsel %vm727, %v1040, %v1048
      %v1054 = vsel %vm727, %v1042, %v1050
      %v1055 = vsel %vm727, %v1044, %v1036
      %v1056 = vsel %vm727, %v1046, %v1038
      %v1057 = vsel %vm727, %v1048, %v1040
      %v1058 = vsel %vm727, %v1050, %v1042
      %s1059 = scalar_lea.vmem %s5, 14
      %v1060 = vld [vmem:[%s1059] sm:$0x3]
      %v1062 = vlaneseq
      %v1063 = vshrl.u32 %v1062, 7
      %v1064 = vsub.s32 0, %v1063
      %v1065 = vrot.slane %v1060, %v1064
      %v1066 = vlaneseq
      %v1067 = vshrl.u32 %v1066, 7
      %v1068 = vsub.s32 1, %v1067
      %v1069 = vrot.slane %v1060, %v1068
      %v1072 = vmul.f32 %v1051, %v1065
      %v1073 = vmul.f32 %v1055, %v1069
      %v1074 = vmul.f32 %v1052, %v1065
      %v1075 = vmul.f32 %v1056, %v1069
      %v1076 = vmul.f32 %v1053, %v1065
      %v1077 = vmul.f32 %v1057, %v1069
      %v1078 = vmul.f32 %v1054, %v1065
      %v1079 = vmul.f32 %v1058, %v1069
      %1080 = vrot.lane.b32.xlu0 %v755, 111
      %v1081 = vpop.permute.xlu0 %1080
      %1082 = vrot.lane.b32.xlu0 %v757, 111
      %v1083 = vpop.permute.xlu0 %1082
      %1084 = vrot.lane.b32.xlu0 %v759, 111
      %v1085 = vpop.permute.xlu0 %1084
      %1086 = vrot.lane.b32.xlu0 %v761, 111
      %v1087 = vpop.permute.xlu0 %1086
      %1088 = vrot.lane.b32.xlu0 %v756, 111
      %v1089 = vpop.permute.xlu0 %1088
      %1090 = vrot.lane.b32.xlu0 %v758, 111
      %v1091 = vpop.permute.xlu0 %1090
      %1092 = vrot.lane.b32.xlu0 %v760, 111
      %v1093 = vpop.permute.xlu0 %1092
      %1094 = vrot.lane.b32.xlu0 %v762, 111
      %v1095 = vpop.permute.xlu0 %1094
      %vm1096 = vcmp.lt.s32.totalorder %v551, 111
      %v1097 = vsel %vm1096, %v1081, %v1089
      %v1098 = vsel %vm1096, %v1083, %v1091
      %v1099 = vsel %vm1096, %v1085, %v1093
      %v1100 = vsel %vm1096, %v1087, %v1095
      %v1101 = vsel %vm1096, %v1089, %v1081
      %v1102 = vsel %vm1096, %v1091, %v1083
      %v1103 = vsel %vm1096, %v1093, %v1085
      %v1104 = vsel %vm1096, %v1095, %v1087
      %s1105 = scalar_lea.vmem %s5, 16
      %v1106 = vld [vmem:[%s1105] sm:$0x3]
      %v1108 = vlaneseq
      %v1109 = vshrl.u32 %v1108, 7
      %v1110 = vsub.s32 0, %v1109
      %v1111 = vrot.slane %v1106, %v1110
      %v1112 = vlaneseq
      %v1113 = vshrl.u32 %v1112, 7
      %v1114 = vsub.s32 1, %v1113
      %v1115 = vrot.slane %v1106, %v1114
      %v1118 = vmul.f32 %v1097, %v1111
      %v1119 = vmul.f32 %v1101, %v1115
      %v1120 = vmul.f32 %v1098, %v1111
      %v1121 = vmul.f32 %v1102, %v1115
      %v1122 = vmul.f32 %v1099, %v1111
      %v1123 = vmul.f32 %v1103, %v1115
      %v1124 = vmul.f32 %v1100, %v1111
      %v1125 = vmul.f32 %v1104, %v1115
      %v1126 = vpack.c.bf16 %v802, %v800
      %v1127 = vpack.c.bf16 %v803, %v801
      %v1128 = vpack.c.bf16 %v806, %v804
      %v1129 = vpack.c.bf16 %v807, %v805
      %v1130 = vpack.c.bf16 %v847, %v845
      %v1131 = vpack.c.bf16 %v848, %v846
      %v1132 = vpack.c.bf16 %v851, %v849
      %v1133 = vpack.c.bf16 %v852, %v850
      %v1134 = vpack.c.bf16 %v893, %v891
      %v1135 = vpack.c.bf16 %v894, %v892
      %v1136 = vpack.c.bf16 %v897, %v895
      %v1137 = vpack.c.bf16 %v898, %v896
      %v1138 = vpack.c.bf16 %v938, %v936
      %v1139 = vpack.c.bf16 %v939, %v937
      %v1140 = vpack.c.bf16 %v942, %v940
      %v1141 = vpack.c.bf16 %v943, %v941
      %v1142 = vpack.c.bf16 %v757, %v755
      %v1143 = vpack.c.bf16 %v758, %v756
      %v1144 = vpack.c.bf16 %v761, %v759
      %v1145 = vpack.c.bf16 %v762, %v760
      %v1146 = vpack.c.bf16 %v983, %v981
      %v1147 = vpack.c.bf16 %v984, %v982
      %v1148 = vpack.c.bf16 %v987, %v985
      %v1149 = vpack.c.bf16 %v988, %v986
      %v1150 = vpack.c.bf16 %v1029, %v1027
      %v1151 = vpack.c.bf16 %v1030, %v1028
      %v1152 = vpack.c.bf16 %v1033, %v1031
      %v1153 = vpack.c.bf16 %v1034, %v1032
      %v1154 = vpack.c.bf16 %v1074, %v1072
      %v1155 = vpack.c.bf16 %v1075, %v1073
      %v1156 = vpack.c.bf16 %v1078, %v1076
      %v1157 = vpack.c.bf16 %v1079, %v1077
      %v1158 = vpack.c.bf16 %v1120, %v1118
      %v1159 = vpack.c.bf16 %v1121, %v1119
      %v1160 = vpack.c.bf16 %v1124, %v1122
      %v1161 = vpack.c.bf16 %v1125, %v1123
      %1163 = vset.pattern.permute.xlu0 0
      %1164 = vperm.xlu0 %1163, %v484
      %v1165 = vpop.permute.xlu0 %1164
      %1168 = vset.pattern.permute.xlu0 0
      %1169 = vperm.xlu0 %1168, %v485
      %v1170 = vpop.permute.xlu0 %1169
      %1173 = vset.pattern.permute.xlu0 0
      %1174 = vperm.xlu0 %1173, %v486
      %v1175 = vpop.permute.xlu0 %1174
      %1178 = vset.pattern.permute.xlu0 0
      %1179 = vperm.xlu0 %1178, %v487
      %v1180 = vpop.permute.xlu0 %1179
      %v1190 = vunpack.c.l.b16 %v468
      %v1191 = vunpack.c.h.b16 %v468
      %v1192 = vunpack.c.l.b16 %v469
      %v1193 = vunpack.c.l.b16 %v470
      %v1194 = vunpack.c.h.b16 %v470
      %v1195 = vunpack.c.l.b16 %v471
      %v1196 = vunpack.c.l.b16 %v472
      %v1197 = vunpack.c.h.b16 %v472
      %v1198 = vunpack.c.l.b16 %v473
      %v1199 = vunpack.c.l.b16 %v474
      %v1200 = vunpack.c.h.b16 %v474
      %v1201 = vunpack.c.l.b16 %v475
      %v1202 = vpack.c.b16 %v1193, %v1190
      %v1203 = vpack.c.b16 %v1194, %v1191
      %v1204 = vpack.c.b16 %v1195, %v1192
      %v1205 = vpack.c.b16 %v1199, %v1196
      %v1206 = vpack.c.b16 %v1200, %v1197
      %v1207 = vpack.c.b16 %v1201, %v1198
      %vm1212 = vcmask 261120
      %v1214 = vsel %vm1212, %v1204, 0
      %v1217 = vsel %vm1212, %v1207, 0
      %1219 = vmatprep.subr.bf16.mxu0 %v1141
      %1220 = vmatpush1.bf16.msra.mxu0 %v1140
      %1221 = vmatprep.subr.bf16.mxu0 %v1139
      %1222 = vmatpush1.bf16.msra.mxu0 %v1138
      %1223 = vmatprep.subr.bf16.mxu0 %v1137
      %1224 = vmatpush1.bf16.msra.mxu0 %v1136
      %1225 = vmatprep.subr.bf16.mxu0 %v1135
      %1226 = vmatpush1.bf16.msra.mxu0 %v1134
      %1227 = vmatprep.subr.bf16.mxu0 %v1133
      %1228 = vmatpush1.bf16.msra.mxu0 %v1132
      %1229 = vmatprep.subr.bf16.mxu0 %v1131
      %1230 = vmatpush1.bf16.msra.mxu0 %v1130
      %1231 = vmatprep.subr.bf16.mxu0 %v1129
      %1232 = vmatpush1.bf16.msra.mxu0 %v1128
      %1233 = vmatprep.subr.bf16.mxu0 %v1127
      %1234 = vmatpush1.bf16.msra.mxu0 %v1126
      %1235 = vmatprep.subr.bf16.mxu0 %v1157
      %1236 = vmatpush2.bf16.msra.mxu0 %v1156
      %1237 = vmatprep.subr.bf16.mxu0 %v1155
      %1238 = vmatpush2.bf16.msra.mxu0 %v1154
      %1239 = vmatprep.subr.bf16.mxu0 %v1153
      %1240 = vmatpush2.bf16.msra.mxu0 %v1152
      %1241 = vmatprep.subr.bf16.mxu0 %v1151
      %1242 = vmatpush2.bf16.msra.mxu0 %v1150
      %1243 = vmatprep.subr.bf16.mxu0 %v1149
      %1244 = vmatpush2.bf16.msra.mxu0 %v1148
      %1245 = vmatprep.subr.bf16.mxu0 %v1147
      %1246 = vmatpush2.bf16.msra.mxu0 %v1146
      %1247 = vmatprep.subr.bf16.mxu0 %v1145
      %1248 = vmatpush2.bf16.msra.mxu0 %v1144
      %1249 = vmatprep.subr.bf16.mxu0 %v1143
      %1250 = vmatpush2.bf16.msra.mxu0 %v1142
      %1251 = vmatprep.mubr.bf16.mxu0 %v1203
      %1252 = vmatmul.mubr.bf16.gmra.mxu0 %v1202
      %v1253 = vpop.f32.mrf.mxu0
      %v1254 = vadd.f32 %v1165, %v1253
      %v1255 = vpop.f32.mrf.mxu0
      %v1256 = vadd.f32 %v1165, %v1255
      %v1257 = vpop.f32.mrf.mxu0
      %v1258 = vadd.f32 %v1170, %v1257
      %v1259 = vpop.f32.mrf.mxu0
      %v1260 = vadd.f32 %v1170, %v1259
      %1261 = vmatprep.mubr.bf16.mxu0 %v1206
      %1262 = vmatmul.mubr.bf16.gmra.mxu0 %v1205
      %v1263 = vpop.f32.mrf.mxu0
      %v1264 = vadd.f32 %v1175, %v1263
      %v1265 = vpop.f32.mrf.mxu0
      %v1266 = vadd.f32 %v1175, %v1265
      %v1267 = vpop.f32.mrf.mxu0
      %v1268 = vadd.f32 %v1180, %v1267
      %v1269 = vpop.f32.mrf.mxu0
      %v1270 = vadd.f32 %v1180, %v1269
      %1271 = vdwg.mxu0
      %1272 = vmatprep.subr.bf16.mxu0 0
      %1273 = vmatpush1.bf16.msra.mxu0 0
      %1274 = vmatprep.subr.bf16.mxu0 0
      %1275 = vmatpush1.bf16.msra.mxu0 0
      %1276 = vmatprep.subr.bf16.mxu0 0
      %1277 = vmatpush1.bf16.msra.mxu0 0
      %1278 = vmatprep.subr.bf16.mxu0 0
      %1279 = vmatpush1.bf16.msra.mxu0 0
      %1280 = vmatprep.subr.bf16.mxu0 0
      %1281 = vmatpush1.bf16.msra.mxu0 0
      %1282 = vmatprep.subr.bf16.mxu0 0
      %1283 = vmatpush1.bf16.msra.mxu0 0
      %1284 = vmatprep.subr.bf16.mxu0 %v1161
      %1285 = vmatpush1.bf16.msra.mxu0 %v1160
      %1286 = vmatprep.subr.bf16.mxu0 %v1159
      %1287 = vmatpush1.bf16.msra.mxu0 %v1158
      %1288 = vmatprep.subr.bf16.mxu0 0
      %1289 = vmatpush2.bf16.msra.mxu0 0
      %1290 = vmatprep.subr.bf16.mxu0 0
      %1291 = vmatpush2.bf16.msra.mxu0 0
      %1292 = vmatprep.subr.bf16.mxu0 0
      %1293 = vmatpush2.bf16.msra.mxu0 0
      %1294 = vmatprep.subr.bf16.mxu0 0
      %1295 = vmatpush2.bf16.msra.mxu0 0
      %1296 = vmatprep.subr.bf16.mxu0 0
      %1297 = vmatpush2.bf16.msra.mxu0 0
      %1298 = vmatprep.subr.bf16.mxu0 0
      %1299 = vmatpush2.bf16.msra.mxu0 0
      %1300 = vmatprep.subr.bf16.mxu0 0
      %1301 = vmatpush2.bf16.msra.mxu0 0
      %1302 = vmatprep.subr.bf16.mxu0 0
      %1303 = vmatpush2.bf16.msra.mxu0 0
      %1304 = vmatprep.mubr.bf16.mxu0 0
      %1305 = vmatmul.mubr.bf16.gmra.mxu0 %v1214
      %v1306 = vpop.f32.mrf.mxu0
      %v1307 = vadd.f32 %v1254, %v1306
      %v1308 = vpop.f32.mrf.mxu0
      %v1309 = vadd.f32 %v1256, %v1308
      %v1310 = vpop.f32.mrf.mxu0
      %v1311 = vadd.f32 %v1258, %v1310
      %v1312 = vpop.f32.mrf.mxu0
      %v1313 = vadd.f32 %v1260, %v1312
      %1314 = vmatprep.mubr.bf16.mxu0 0
      %1315 = vmatmul.mubr.bf16.gmra.mxu0 %v1217
      %v1316 = vpop.f32.mrf.mxu0
      %v1317 = vadd.f32 %v1264, %v1316
      %v1318 = vpop.f32.mrf.mxu0
      %v1319 = vadd.f32 %v1266, %v1318
      %v1320 = vpop.f32.mrf.mxu0
      %v1321 = vadd.f32 %v1268, %v1320
      %v1322 = vpop.f32.mrf.mxu0
      %v1323 = vadd.f32 %v1270, %v1322
      %1324 = vdwg.mxu0
      %v1325 = vld [vmem:[%s444] sm:$0x3]
      %1327 = vset.pattern.permute.xlu0 0
      %1328 = vperm.xlu0 %1327, %v492
      %v1329 = vpop.permute.xlu0 %1328
      %1332 = vset.pattern.permute.xlu0 0
      %1333 = vperm.xlu0 %1332, %v493
      %v1334 = vpop.permute.xlu0 %1333
      %1337 = vset.pattern.permute.xlu0 0
      %1338 = vperm.xlu0 %1337, %v494
      %v1339 = vpop.permute.xlu0 %1338
      %1342 = vset.pattern.permute.xlu0 0
      %1343 = vperm.xlu0 %1342, %v495
      %v1344 = vpop.permute.xlu0 %1343
      %v1347 = vlaneseq
      %v1348 = vshrl.u32 %v1347, 7
      %v1349 = vsub.s32 0, %v1348
      %v1350 = vrot.slane %v1325, %v1349
      %v1351 = vlaneseq
      %v1352 = vshrl.u32 %v1351, 7
      %v1353 = vsub.s32 1, %v1352
      %v1354 = vrot.slane %v1325, %v1353
      %v1357 = vmul.f32 %v1329, %v1350
      %v1358 = vmul.f32 %v1329, %v1354
      %v1359 = vmul.f32 %v1334, %v1350
      %v1360 = vmul.f32 %v1334, %v1354
      %v1361 = vmul.f32 %v1339, %v1350
      %v1362 = vmul.f32 %v1339, %v1354
      %v1363 = vmul.f32 %v1344, %v1350
      %v1364 = vmul.f32 %v1344, %v1354
      %v1365 = vadd.f32 %v1307, %v1357
      %v1366 = vadd.f32 %v1309, %v1358
      %v1367 = vadd.f32 %v1311, %v1359
      %v1368 = vadd.f32 %v1313, %v1360
      %v1369 = vadd.f32 %v1317, %v1361
      %v1370 = vadd.f32 %v1319, %v1362
      %v1371 = vadd.f32 %v1321, %v1363
      %v1372 = vadd.f32 %v1323, %v1364
      %v1373 = vld [vmem:[%s451] sm:$0xff]
      %v1374 = vld [vmem:[%s451 + $0x8] sm:$0xff]
      %v1375 = vld [vmem:[%s451 + $0x10] sm:$0xff]
      %v1376 = vld [vmem:[%s451 + $0x18] sm:$0xff]
      %v1377 = vld [vmem:[%s451 + $0x20] sm:$0xff]
      %v1378 = vld [vmem:[%s451 + $0x28] sm:$0xff]
      %v1379 = vld [vmem:[%s451 + $0x30] sm:$0xff]
      %v1380 = vld [vmem:[%s451 + $0x38] sm:$0xff]
      %v1381 = vadd.f32 %v1365, %v1366
      %1382 = vadd.xlane.f32.xlu0 %v1381
      %v1383 = vpop.xlane.xlu0 %1382
      %v1384 = vadd.f32 %v1367, %v1368
      %1385 = vadd.xlane.f32.xlu0 %v1384
      %v1386 = vpop.xlane.xlu0 %1385
      %v1387 = vadd.f32 %v1369, %v1370
      %1388 = vadd.xlane.f32.xlu0 %v1387
      %v1389 = vpop.xlane.xlu0 %1388
      %v1390 = vadd.f32 %v1371, %v1372
      %1391 = vadd.xlane.f32.xlu0 %v1390
      %v1392 = vpop.xlane.xlu0 %1391
      %v1393 = vmul.f32 %v1383, 0.00390625
      %v1394 = vmul.f32 %v1386, 0.00390625
      %v1395 = vmul.f32 %v1389, 0.00390625
      %v1396 = vmul.f32 %v1392, 0.00390625
      %v1397 = vmul.f32 %v1365, %v1365
      %v1398 = vmul.f32 %v1366, %v1366
      %v1399 = vmul.f32 %v1367, %v1367
      %v1400 = vmul.f32 %v1368, %v1368
      %v1401 = vmul.f32 %v1369, %v1369
      %v1402 = vmul.f32 %v1370, %v1370
      %v1403 = vmul.f32 %v1371, %v1371
      %v1404 = vmul.f32 %v1372, %v1372
      %v1405 = vadd.f32 %v1397, %v1398
      %1406 = vadd.xlane.f32.xlu0 %v1405
      %v1407 = vpop.xlane.xlu0 %1406
      %v1408 = vadd.f32 %v1399, %v1400
      %1409 = vadd.xlane.f32.xlu0 %v1408
      %v1410 = vpop.xlane.xlu0 %1409
      %v1411 = vadd.f32 %v1401, %v1402
      %1412 = vadd.xlane.f32.xlu0 %v1411
      %v1413 = vpop.xlane.xlu0 %1412
      %v1414 = vadd.f32 %v1403, %v1404
      %1415 = vadd.xlane.f32.xlu0 %v1414
      %v1416 = vpop.xlane.xlu0 %1415
      %v1417 = vmul.f32 %v1407, 0.00390625
      %v1418 = vmul.f32 %v1410, 0.00390625
      %v1419 = vmul.f32 %v1413, 0.00390625
      %v1420 = vmul.f32 %v1416, 0.00390625
      %v1421 = vmul.f32 %v1393, %v1393
      %v1422 = vmul.f32 %v1394, %v1394
      %v1423 = vmul.f32 %v1395, %v1395
      %v1424 = vmul.f32 %v1396, %v1396
      %v1425 = vsub.f32 %v1417, %v1421
      %v1426 = vsub.f32 %v1418, %v1422
      %v1427 = vsub.f32 %v1419, %v1423
      %v1428 = vsub.f32 %v1420, %v1424
      %v1429 = vmax.f32 %v1425, 0.0
      %v1430 = vmax.f32 %v1426, 0.0
      %v1431 = vmax.f32 %v1427, 0.0
      %v1432 = vmax.f32 %v1428, 0.0
      %v1433 = vadd.f32 %v1429, 1e-05
      %v1434 = vadd.f32 %v1430, 1e-05
      %v1435 = vadd.f32 %v1431, 1e-05
      %v1436 = vadd.f32 %v1432, 1e-05
      %v1437 = vrsqrt.pop %v1433
      %v1438 = vrsqrt.pop %v1434
      %v1439 = vrsqrt.pop %v1435
      %v1440 = vrsqrt.pop %v1436
      %v1441 = vsub.f32 %v1365, %v1393
      %v1442 = vsub.f32 %v1366, %v1393
      %v1443 = vsub.f32 %v1367, %v1394
      %v1444 = vsub.f32 %v1368, %v1394
      %v1445 = vsub.f32 %v1369, %v1395
      %v1446 = vsub.f32 %v1370, %v1395
      %v1447 = vsub.f32 %v1371, %v1396
      %v1448 = vsub.f32 %v1372, %v1396
      %v1449 = vmul.f32 %v1437, %v1373
      %v1450 = vmul.f32 %v1438, %v1374
      %v1451 = vmul.f32 %v1439, %v1375
      %v1452 = vmul.f32 %v1440, %v1376
      %1454 = vset.pattern.permute.xlu0 0
      %1455 = vperm.xlu0 %1454, %v1449
      %v1456 = vpop.permute.xlu0 %1455
      %1459 = vset.pattern.permute.xlu0 0
      %1460 = vperm.xlu0 %1459, %v1450
      %v1461 = vpop.permute.xlu0 %1460
      %1464 = vset.pattern.permute.xlu0 0
      %1465 = vperm.xlu0 %1464, %v1451
      %v1466 = vpop.permute.xlu0 %1465
      %1469 = vset.pattern.permute.xlu0 0
      %1470 = vperm.xlu0 %1469, %v1452
      %v1471 = vpop.permute.xlu0 %1470
      %v1473 = vmul.f32 %v1441, %v1456
      %v1474 = vmul.f32 %v1442, %v1456
      %v1475 = vmul.f32 %v1443, %v1461
      %v1476 = vmul.f32 %v1444, %v1461
      %v1477 = vmul.f32 %v1445, %v1466
      %v1478 = vmul.f32 %v1446, %v1466
      %v1479 = vmul.f32 %v1447, %v1471
      %v1480 = vmul.f32 %v1448, %v1471
      %1482 = vset.pattern.permute.xlu0 0
      %1483 = vperm.xlu0 %1482, %v1377
      %v1484 = vpop.permute.xlu0 %1483
      %1487 = vset.pattern.permute.xlu0 0
      %1488 = vperm.xlu0 %1487, %v1378
      %v1489 = vpop.permute.xlu0 %1488
      %1492 = vset.pattern.permute.xlu0 0
      %1493 = vperm.xlu0 %1492, %v1379
      %v1494 = vpop.permute.xlu0 %1493
      %1497 = vset.pattern.permute.xlu0 0
      %1498 = vperm.xlu0 %1497, %v1380
      %v1499 = vpop.permute.xlu0 %1498
      %v1501 = vadd.f32 %v1473, %v1484
      %v1502 = vadd.f32 %v1474, %v1484
      %v1503 = vadd.f32 %v1475, %v1489
      %v1504 = vadd.f32 %v1476, %v1489
      %v1505 = vadd.f32 %v1477, %v1494
      %v1506 = vadd.f32 %v1478, %v1494
      %v1507 = vadd.f32 %v1479, %v1499
      %v1508 = vadd.f32 %v1480, %v1499
      %vm1509 = vcmp.ge.f32.partialorder %v1501, 0.0
      %vm1510 = vcmp.ge.f32.partialorder %v1502, 0.0
      %vm1511 = vcmp.ge.f32.partialorder %v1503, 0.0
      %vm1512 = vcmp.ge.f32.partialorder %v1504, 0.0
      %vm1513 = vcmp.ge.f32.partialorder %v1505, 0.0
      %vm1514 = vcmp.ge.f32.partialorder %v1506, 0.0
      %vm1515 = vcmp.ge.f32.partialorder %v1507, 0.0
      %vm1516 = vcmp.ge.f32.partialorder %v1508, 0.0
      %v1517 = vmul.f32 %v1501, 0.2
      %v1518 = vmul.f32 %v1502, 0.2
      %v1519 = vmul.f32 %v1503, 0.2
      %v1520 = vmul.f32 %v1504, 0.2
      %v1521 = vmul.f32 %v1505, 0.2
      %v1522 = vmul.f32 %v1506, 0.2
      %v1523 = vmul.f32 %v1507, 0.2
      %v1524 = vmul.f32 %v1508, 0.2
      %v1525 = vsel %vm1509, %v1501, %v1517
      %v1526 = vsel %vm1510, %v1502, %v1518
      %v1527 = vsel %vm1511, %v1503, %v1519
      %v1528 = vsel %vm1512, %v1504, %v1520
      %v1529 = vsel %vm1513, %v1505, %v1521
      %v1530 = vsel %vm1514, %v1506, %v1522
      %v1531 = vsel %vm1515, %v1507, %v1523
      %v1532 = vsel %vm1516, %v1508, %v1524
      %1533 = vrot.lane.b32.xlu0 %v1525, 17
      %v1534 = vpop.permute.xlu0 %1533
      %1535 = vrot.lane.b32.xlu0 %v1527, 17
      %v1536 = vpop.permute.xlu0 %1535
      %1537 = vrot.lane.b32.xlu0 %v1529, 17
      %v1538 = vpop.permute.xlu0 %1537
      %1539 = vrot.lane.b32.xlu0 %v1531, 17
      %v1540 = vpop.permute.xlu0 %1539
      %1541 = vrot.lane.b32.xlu0 %v1526, 17
      %v1542 = vpop.permute.xlu0 %1541
      %1543 = vrot.lane.b32.xlu0 %v1528, 17
      %v1544 = vpop.permute.xlu0 %1543
      %1545 = vrot.lane.b32.xlu0 %v1530, 17
      %v1546 = vpop.permute.xlu0 %1545
      %1547 = vrot.lane.b32.xlu0 %v1532, 17
      %v1548 = vpop.permute.xlu0 %1547
      %v1549 = vsel %vm779, %v1534, %v1542
      %v1550 = vsel %vm779, %v1536, %v1544
      %v1551 = vsel %vm779, %v1538, %v1546
      %v1552 = vsel %vm779, %v1540, %v1548
      %v1553 = vsel %vm779, %v1542, %v1534
      %v1554 = vsel %vm779, %v1544, %v1536
      %v1555 = vsel %vm779, %v1546, %v1538
      %v1556 = vsel %vm779, %v1548, %v1540
      %v1557 = vmul.f32 %v1553, %v793
      %v1558 = vmul.f32 %v1549, %v797
      %v1559 = vmul.f32 %v1554, %v793
      %v1560 = vmul.f32 %v1550, %v797
      %v1561 = vmul.f32 %v1555, %v793
      %v1562 = vmul.f32 %v1551, %v797
      %v1563 = vmul.f32 %v1556, %v793
      %v1564 = vmul.f32 %v1552, %v797
      %1565 = vrot.lane.b32.xlu0 %v1525, 16
      %v1566 = vpop.permute.xlu0 %1565
      %1567 = vrot.lane.b32.xlu0 %v1527, 16
      %v1568 = vpop.permute.xlu0 %1567
      %1569 = vrot.lane.b32.xlu0 %v1529, 16
      %v1570 = vpop.permute.xlu0 %1569
      %1571 = vrot.lane.b32.xlu0 %v1531, 16
      %v1572 = vpop.permute.xlu0 %1571
      %1573 = vrot.lane.b32.xlu0 %v1526, 16
      %v1574 = vpop.permute.xlu0 %1573
      %1575 = vrot.lane.b32.xlu0 %v1528, 16
      %v1576 = vpop.permute.xlu0 %1575
      %1577 = vrot.lane.b32.xlu0 %v1530, 16
      %v1578 = vpop.permute.xlu0 %1577
      %1579 = vrot.lane.b32.xlu0 %v1532, 16
      %v1580 = vpop.permute.xlu0 %1579
      %v1581 = vsel %vm675, %v1566, %v1574
      %v1582 = vsel %vm675, %v1568, %v1576
      %v1583 = vsel %vm675, %v1570, %v1578
      %v1584 = vsel %vm675, %v1572, %v1580
      %v1585 = vsel %vm675, %v1574, %v1566
      %v1586 = vsel %vm675, %v1576, %v1568
      %v1587 = vsel %vm675, %v1578, %v1570
      %v1588 = vsel %vm675, %v1580, %v1572
      %v1589 = vmul.f32 %v1585, %v838
      %v1590 = vmul.f32 %v1581, %v842
      %v1591 = vmul.f32 %v1586, %v838
      %v1592 = vmul.f32 %v1582, %v842
      %v1593 = vmul.f32 %v1587, %v838
      %v1594 = vmul.f32 %v1583, %v842
      %v1595 = vmul.f32 %v1588, %v838
      %v1596 = vmul.f32 %v1584, %v842
      %1597 = vrot.lane.b32.xlu0 %v1525, 15
      %v1598 = vpop.permute.xlu0 %1597
      %1599 = vrot.lane.b32.xlu0 %v1527, 15
      %v1600 = vpop.permute.xlu0 %1599
      %1601 = vrot.lane.b32.xlu0 %v1529, 15
      %v1602 = vpop.permute.xlu0 %1601
      %1603 = vrot.lane.b32.xlu0 %v1531, 15
      %v1604 = vpop.permute.xlu0 %1603
      %1605 = vrot.lane.b32.xlu0 %v1526, 15
      %v1606 = vpop.permute.xlu0 %1605
      %1607 = vrot.lane.b32.xlu0 %v1528, 15
      %v1608 = vpop.permute.xlu0 %1607
      %1609 = vrot.lane.b32.xlu0 %v1530, 15
      %v1610 = vpop.permute.xlu0 %1609
      %1611 = vrot.lane.b32.xlu0 %v1532, 15
      %v1612 = vpop.permute.xlu0 %1611
      %v1613 = vsel %vm869, %v1598, %v1606
      %v1614 = vsel %vm869, %v1600, %v1608
      %v1615 = vsel %vm869, %v1602, %v1610
      %v1616 = vsel %vm869, %v1604, %v1612
      %v1617 = vsel %vm869, %v1606, %v1598
      %v1618 = vsel %vm869, %v1608, %v1600
      %v1619 = vsel %vm869, %v1610, %v1602
      %v1620 = vsel %vm869, %v1612, %v1604
      %v1621 = vmul.f32 %v1617, %v884
      %v1622 = vmul.f32 %v1613, %v888
      %v1623 = vmul.f32 %v1618, %v884
      %v1624 = vmul.f32 %v1614, %v888
      %v1625 = vmul.f32 %v1619, %v884
      %v1626 = vmul.f32 %v1615, %v888
      %v1627 = vmul.f32 %v1620, %v884
      %v1628 = vmul.f32 %v1616, %v888
      %1629 = vrot.lane.b32.xlu0 %v1525, 1
      %v1630 = vpop.permute.xlu0 %1629
      %1631 = vrot.lane.b32.xlu0 %v1527, 1
      %v1632 = vpop.permute.xlu0 %1631
      %1633 = vrot.lane.b32.xlu0 %v1529, 1
      %v1634 = vpop.permute.xlu0 %1633
      %1635 = vrot.lane.b32.xlu0 %v1531, 1
      %v1636 = vpop.permute.xlu0 %1635
      %1637 = vrot.lane.b32.xlu0 %v1526, 1
      %v1638 = vpop.permute.xlu0 %1637
      %1639 = vrot.lane.b32.xlu0 %v1528, 1
      %v1640 = vpop.permute.xlu0 %1639
      %1641 = vrot.lane.b32.xlu0 %v1530, 1
      %v1642 = vpop.permute.xlu0 %1641
      %1643 = vrot.lane.b32.xlu0 %v1532, 1
      %v1644 = vpop.permute.xlu0 %1643
      %v1645 = vsel %vm552, %v1630, %v1638
      %v1646 = vsel %vm552, %v1632, %v1640
      %v1647 = vsel %vm552, %v1634, %v1642
      %v1648 = vsel %vm552, %v1636, %v1644
      %v1649 = vsel %vm552, %v1638, %v1630
      %v1650 = vsel %vm552, %v1640, %v1632
      %v1651 = vsel %vm552, %v1642, %v1634
      %v1652 = vsel %vm552, %v1644, %v1636
      %v1653 = vmul.f32 %v1649, %v929
      %v1654 = vmul.f32 %v1645, %v933
      %v1655 = vmul.f32 %v1650, %v929
      %v1656 = vmul.f32 %v1646, %v933
      %v1657 = vmul.f32 %v1651, %v929
      %v1658 = vmul.f32 %v1647, %v933
      %v1659 = vmul.f32 %v1652, %v929
      %v1660 = vmul.f32 %v1648, %v933
      %1661 = vrot.lane.b32.xlu0 %v1525, 127
      %v1662 = vpop.permute.xlu0 %1661
      %1663 = vrot.lane.b32.xlu0 %v1527, 127
      %v1664 = vpop.permute.xlu0 %1663
      %1665 = vrot.lane.b32.xlu0 %v1529, 127
      %v1666 = vpop.permute.xlu0 %1665
      %1667 = vrot.lane.b32.xlu0 %v1531, 127
      %v1668 = vpop.permute.xlu0 %1667
      %1669 = vrot.lane.b32.xlu0 %v1526, 127
      %v1670 = vpop.permute.xlu0 %1669
      %1671 = vrot.lane.b32.xlu0 %v1528, 127
      %v1672 = vpop.permute.xlu0 %1671
      %1673 = vrot.lane.b32.xlu0 %v1530, 127
      %v1674 = vpop.permute.xlu0 %1673
      %1675 = vrot.lane.b32.xlu0 %v1532, 127
      %v1676 = vpop.permute.xlu0 %1675
      %v1677 = vsel %vm604, %v1662, %v1670
      %v1678 = vsel %vm604, %v1664, %v1672
      %v1679 = vsel %vm604, %v1666, %v1674
      %v1680 = vsel %vm604, %v1668, %v1676
      %v1681 = vsel %vm604, %v1670, %v1662
      %v1682 = vsel %vm604, %v1672, %v1664
      %v1683 = vsel %vm604, %v1674, %v1666
      %v1684 = vsel %vm604, %v1676, %v1668
      %v1685 = vmul.f32 %v1677, %v974
      %v1686 = vmul.f32 %v1681, %v978
      %v1687 = vmul.f32 %v1678, %v974
      %v1688 = vmul.f32 %v1682, %v978
      %v1689 = vmul.f32 %v1679, %v974
      %v1690 = vmul.f32 %v1683, %v978
      %v1691 = vmul.f32 %v1680, %v974
      %v1692 = vmul.f32 %v1684, %v978
      %1693 = vrot.lane.b32.xlu0 %v1525, 113
      %v1694 = vpop.permute.xlu0 %1693
      %1695 = vrot.lane.b32.xlu0 %v1527, 113
      %v1696 = vpop.permute.xlu0 %1695
      %1697 = vrot.lane.b32.xlu0 %v1529, 113
      %v1698 = vpop.permute.xlu0 %1697
      %1699 = vrot.lane.b32.xlu0 %v1531, 113
      %v1700 = vpop.permute.xlu0 %1699
      %1701 = vrot.lane.b32.xlu0 %v1526, 113
      %v1702 = vpop.permute.xlu0 %1701
      %1703 = vrot.lane.b32.xlu0 %v1528, 113
      %v1704 = vpop.permute.xlu0 %1703
      %1705 = vrot.lane.b32.xlu0 %v1530, 113
      %v1706 = vpop.permute.xlu0 %1705
      %1707 = vrot.lane.b32.xlu0 %v1532, 113
      %v1708 = vpop.permute.xlu0 %1707
      %v1709 = vsel %vm1005, %v1694, %v1702
      %v1710 = vsel %vm1005, %v1696, %v1704
      %v1711 = vsel %vm1005, %v1698, %v1706
      %v1712 = vsel %vm1005, %v1700, %v1708
      %v1713 = vsel %vm1005, %v1702, %v1694
      %v1714 = vsel %vm1005, %v1704, %v1696
      %v1715 = vsel %vm1005, %v1706, %v1698
      %v1716 = vsel %vm1005, %v1708, %v1700
      %v1717 = vmul.f32 %v1709, %v1020
      %v1718 = vmul.f32 %v1713, %v1024
      %v1719 = vmul.f32 %v1710, %v1020
      %v1720 = vmul.f32 %v1714, %v1024
      %v1721 = vmul.f32 %v1711, %v1020
      %v1722 = vmul.f32 %v1715, %v1024
      %v1723 = vmul.f32 %v1712, %v1020
      %v1724 = vmul.f32 %v1716, %v1024
      %1725 = vrot.lane.b32.xlu0 %v1525, 112
      %v1726 = vpop.permute.xlu0 %1725
      %1727 = vrot.lane.b32.xlu0 %v1527, 112
      %v1728 = vpop.permute.xlu0 %1727
      %1729 = vrot.lane.b32.xlu0 %v1529, 112
      %v1730 = vpop.permute.xlu0 %1729
      %1731 = vrot.lane.b32.xlu0 %v1531, 112
      %v1732 = vpop.permute.xlu0 %1731
      %1733 = vrot.lane.b32.xlu0 %v1526, 112
      %v1734 = vpop.permute.xlu0 %1733
      %1735 = vrot.lane.b32.xlu0 %v1528, 112
      %v1736 = vpop.permute.xlu0 %1735
      %1737 = vrot.lane.b32.xlu0 %v1530, 112
      %v1738 = vpop.permute.xlu0 %1737
      %1739 = vrot.lane.b32.xlu0 %v1532, 112
      %v1740 = vpop.permute.xlu0 %1739
      %v1741 = vsel %vm727, %v1726, %v1734
      %v1742 = vsel %vm727, %v1728, %v1736
      %v1743 = vsel %vm727, %v1730, %v1738
      %v1744 = vsel %vm727, %v1732, %v1740
      %v1745 = vsel %vm727, %v1734, %v1726
      %v1746 = vsel %vm727, %v1736, %v1728
      %v1747 = vsel %vm727, %v1738, %v1730
      %v1748 = vsel %vm727, %v1740, %v1732
      %v1749 = vmul.f32 %v1741, %v1065
      %v1750 = vmul.f32 %v1745, %v1069
      %v1751 = vmul.f32 %v1742, %v1065
      %v1752 = vmul.f32 %v1746, %v1069
      %v1753 = vmul.f32 %v1743, %v1065
      %v1754 = vmul.f32 %v1747, %v1069
      %v1755 = vmul.f32 %v1744, %v1065
      %v1756 = vmul.f32 %v1748, %v1069
      %1757 = vrot.lane.b32.xlu0 %v1525, 111
      %v1758 = vpop.permute.xlu0 %1757
      %1759 = vrot.lane.b32.xlu0 %v1527, 111
      %v1760 = vpop.permute.xlu0 %1759
      %1761 = vrot.lane.b32.xlu0 %v1529, 111
      %v1762 = vpop.permute.xlu0 %1761
      %1763 = vrot.lane.b32.xlu0 %v1531, 111
      %v1764 = vpop.permute.xlu0 %1763
      %1765 = vrot.lane.b32.xlu0 %v1526, 111
      %v1766 = vpop.permute.xlu0 %1765
      %1767 = vrot.lane.b32.xlu0 %v1528, 111
      %v1768 = vpop.permute.xlu0 %1767
      %1769 = vrot.lane.b32.xlu0 %v1530, 111
      %v1770 = vpop.permute.xlu0 %1769
      %1771 = vrot.lane.b32.xlu0 %v1532, 111
      %v1772 = vpop.permute.xlu0 %1771
      %v1773 = vsel %vm1096, %v1758, %v1766
      %v1774 = vsel %vm1096, %v1760, %v1768
      %v1775 = vsel %vm1096, %v1762, %v1770
      %v1776 = vsel %vm1096, %v1764, %v1772
      %v1777 = vsel %vm1096, %v1766, %v1758
      %v1778 = vsel %vm1096, %v1768, %v1760
      %v1779 = vsel %vm1096, %v1770, %v1762
      %v1780 = vsel %vm1096, %v1772, %v1764
      %v1781 = vmul.f32 %v1773, %v1111
      %v1782 = vmul.f32 %v1777, %v1115
      %v1783 = vmul.f32 %v1774, %v1111
      %v1784 = vmul.f32 %v1778, %v1115
      %v1785 = vmul.f32 %v1775, %v1111
      %v1786 = vmul.f32 %v1779, %v1115
      %v1787 = vmul.f32 %v1776, %v1111
      %v1788 = vmul.f32 %v1780, %v1115
      %v1789 = vpack.c.bf16 %v1559, %v1557
      %v1790 = vpack.c.bf16 %v1560, %v1558
      %v1791 = vpack.c.bf16 %v1563, %v1561
      %v1792 = vpack.c.bf16 %v1564, %v1562
      %v1793 = vpack.c.bf16 %v1591, %v1589
      %v1794 = vpack.c.bf16 %v1592, %v1590
      %v1795 = vpack.c.bf16 %v1595, %v1593
      %v1796 = vpack.c.bf16 %v1596, %v1594
      %v1797 = vpack.c.bf16 %v1623, %v1621
      %v1798 = vpack.c.bf16 %v1624, %v1622
      %v1799 = vpack.c.bf16 %v1627, %v1625
      %v1800 = vpack.c.bf16 %v1628, %v1626
      %v1801 = vpack.c.bf16 %v1655, %v1653
      %v1802 = vpack.c.bf16 %v1656, %v1654
      %v1803 = vpack.c.bf16 %v1659, %v1657
      %v1804 = vpack.c.bf16 %v1660, %v1658
      %v1805 = vpack.c.bf16 %v1527, %v1525
      %v1806 = vpack.c.bf16 %v1528, %v1526
      %v1807 = vpack.c.bf16 %v1531, %v1529
      %v1808 = vpack.c.bf16 %v1532, %v1530
      %v1809 = vpack.c.bf16 %v1687, %v1685
      %v1810 = vpack.c.bf16 %v1688, %v1686
      %v1811 = vpack.c.bf16 %v1691, %v1689
      %v1812 = vpack.c.bf16 %v1692, %v1690
      %v1813 = vpack.c.bf16 %v1719, %v1717
      %v1814 = vpack.c.bf16 %v1720, %v1718
      %v1815 = vpack.c.bf16 %v1723, %v1721
      %v1816 = vpack.c.bf16 %v1724, %v1722
      %v1817 = vpack.c.bf16 %v1751, %v1749
      %v1818 = vpack.c.bf16 %v1752, %v1750
      %v1819 = vpack.c.bf16 %v1755, %v1753
      %v1820 = vpack.c.bf16 %v1756, %v1754
      %v1821 = vpack.c.bf16 %v1783, %v1781
      %v1822 = vpack.c.bf16 %v1784, %v1782
      %v1823 = vpack.c.bf16 %v1787, %v1785
      %v1824 = vpack.c.bf16 %v1788, %v1786
      %1826 = vset.pattern.permute.xlu0 0
      %1827 = vperm.xlu0 %1826, %v488
      %v1828 = vpop.permute.xlu0 %1827
      %1831 = vset.pattern.permute.xlu0 0
      %1832 = vperm.xlu0 %1831, %v489
      %v1833 = vpop.permute.xlu0 %1832
      %1836 = vset.pattern.permute.xlu0 0
      %1837 = vperm.xlu0 %1836, %v490
      %v1838 = vpop.permute.xlu0 %1837
      %1841 = vset.pattern.permute.xlu0 0
      %1842 = vperm.xlu0 %1841, %v491
      %v1843 = vpop.permute.xlu0 %1842
      %v1853 = vunpack.c.l.b16 %v476
      %v1854 = vunpack.c.h.b16 %v476
      %v1855 = vunpack.c.l.b16 %v477
      %v1856 = vunpack.c.l.b16 %v478
      %v1857 = vunpack.c.h.b16 %v478
      %v1858 = vunpack.c.l.b16 %v479
      %v1859 = vunpack.c.l.b16 %v480
      %v1860 = vunpack.c.h.b16 %v480
      %v1861 = vunpack.c.l.b16 %v481
      %v1862 = vunpack.c.l.b16 %v482
      %v1863 = vunpack.c.h.b16 %v482
      %v1864 = vunpack.c.l.b16 %v483
      %v1865 = vpack.c.b16 %v1856, %v1853
      %v1866 = vpack.c.b16 %v1857, %v1854
      %v1867 = vpack.c.b16 %v1858, %v1855
      %v1868 = vpack.c.b16 %v1862, %v1859
      %v1869 = vpack.c.b16 %v1863, %v1860
      %v1870 = vpack.c.b16 %v1864, %v1861
      %v1876 = vsel %vm1212, %v1867, 0
      %v1879 = vsel %vm1212, %v1870, 0
      %1881 = vmatprep.subr.bf16.mxu0 %v1804
      %1882 = vmatpush1.bf16.msra.mxu0 %v1803
      %1883 = vmatprep.subr.bf16.mxu0 %v1802
      %1884 = vmatpush1.bf16.msra.mxu0 %v1801
      %1885 = vmatprep.subr.bf16.mxu0 %v1800
      %1886 = vmatpush1.bf16.msra.mxu0 %v1799
      %1887 = vmatprep.subr.bf16.mxu0 %v1798
      %1888 = vmatpush1.bf16.msra.mxu0 %v1797
      %1889 = vmatprep.subr.bf16.mxu0 %v1796
      %1890 = vmatpush1.bf16.msra.mxu0 %v1795
      %1891 = vmatprep.subr.bf16.mxu0 %v1794
      %1892 = vmatpush1.bf16.msra.mxu0 %v1793
      %1893 = vmatprep.subr.bf16.mxu0 %v1792
      %1894 = vmatpush1.bf16.msra.mxu0 %v1791
      %1895 = vmatprep.subr.bf16.mxu0 %v1790
      %1896 = vmatpush1.bf16.msra.mxu0 %v1789
      %1897 = vmatprep.subr.bf16.mxu0 %v1820
      %1898 = vmatpush2.bf16.msra.mxu0 %v1819
      %1899 = vmatprep.subr.bf16.mxu0 %v1818
      %1900 = vmatpush2.bf16.msra.mxu0 %v1817
      %1901 = vmatprep.subr.bf16.mxu0 %v1816
      %1902 = vmatpush2.bf16.msra.mxu0 %v1815
      %1903 = vmatprep.subr.bf16.mxu0 %v1814
      %1904 = vmatpush2.bf16.msra.mxu0 %v1813
      %1905 = vmatprep.subr.bf16.mxu0 %v1812
      %1906 = vmatpush2.bf16.msra.mxu0 %v1811
      %1907 = vmatprep.subr.bf16.mxu0 %v1810
      %1908 = vmatpush2.bf16.msra.mxu0 %v1809
      %1909 = vmatprep.subr.bf16.mxu0 %v1808
      %1910 = vmatpush2.bf16.msra.mxu0 %v1807
      %1911 = vmatprep.subr.bf16.mxu0 %v1806
      %1912 = vmatpush2.bf16.msra.mxu0 %v1805
      %1913 = vmatprep.mubr.bf16.mxu0 %v1866
      %1914 = vmatmul.mubr.bf16.gmra.mxu0 %v1865
      %v1915 = vpop.f32.mrf.mxu0
      %v1916 = vadd.f32 %v1828, %v1915
      %v1917 = vpop.f32.mrf.mxu0
      %v1918 = vadd.f32 %v1828, %v1917
      %v1919 = vpop.f32.mrf.mxu0
      %v1920 = vadd.f32 %v1833, %v1919
      %v1921 = vpop.f32.mrf.mxu0
      %v1922 = vadd.f32 %v1833, %v1921
      %1923 = vmatprep.mubr.bf16.mxu0 %v1869
      %1924 = vmatmul.mubr.bf16.gmra.mxu0 %v1868
      %v1925 = vpop.f32.mrf.mxu0
      %v1926 = vadd.f32 %v1838, %v1925
      %v1927 = vpop.f32.mrf.mxu0
      %v1928 = vadd.f32 %v1838, %v1927
      %v1929 = vpop.f32.mrf.mxu0
      %v1930 = vadd.f32 %v1843, %v1929
      %v1931 = vpop.f32.mrf.mxu0
      %v1932 = vadd.f32 %v1843, %v1931
      %1933 = vdwg.mxu0
      %1934 = vmatprep.subr.bf16.mxu0 0
      %1935 = vmatpush1.bf16.msra.mxu0 0
      %1936 = vmatprep.subr.bf16.mxu0 0
      %1937 = vmatpush1.bf16.msra.mxu0 0
      %1938 = vmatprep.subr.bf16.mxu0 0
      %1939 = vmatpush1.bf16.msra.mxu0 0
      %1940 = vmatprep.subr.bf16.mxu0 0
      %1941 = vmatpush1.bf16.msra.mxu0 0
      %1942 = vmatprep.subr.bf16.mxu0 0
      %1943 = vmatpush1.bf16.msra.mxu0 0
      %1944 = vmatprep.subr.bf16.mxu0 0
      %1945 = vmatpush1.bf16.msra.mxu0 0
      %1946 = vmatprep.subr.bf16.mxu0 %v1824
      %1947 = vmatpush1.bf16.msra.mxu0 %v1823
      %1948 = vmatprep.subr.bf16.mxu0 %v1822
      %1949 = vmatpush1.bf16.msra.mxu0 %v1821
      %1950 = vmatprep.subr.bf16.mxu0 0
      %1951 = vmatpush2.bf16.msra.mxu0 0
      %1952 = vmatprep.subr.bf16.mxu0 0
      %1953 = vmatpush2.bf16.msra.mxu0 0
      %1954 = vmatprep.subr.bf16.mxu0 0
      %1955 = vmatpush2.bf16.msra.mxu0 0
      %1956 = vmatprep.subr.bf16.mxu0 0
      %1957 = vmatpush2.bf16.msra.mxu0 0
      %1958 = vmatprep.subr.bf16.mxu0 0
      %1959 = vmatpush2.bf16.msra.mxu0 0
      %1960 = vmatprep.subr.bf16.mxu0 0
      %1961 = vmatpush2.bf16.msra.mxu0 0
      %1962 = vmatprep.subr.bf16.mxu0 0
      %1963 = vmatpush2.bf16.msra.mxu0 0
      %1964 = vmatprep.subr.bf16.mxu0 0
      %1965 = vmatpush2.bf16.msra.mxu0 0
      %1966 = vmatprep.mubr.bf16.mxu0 0
      %1967 = vmatmul.mubr.bf16.gmra.mxu0 %v1876
      %v1968 = vpop.f32.mrf.mxu0
      %v1969 = vadd.f32 %v1916, %v1968
      %v1970 = vpop.f32.mrf.mxu0
      %v1971 = vadd.f32 %v1918, %v1970
      %v1972 = vpop.f32.mrf.mxu0
      %v1973 = vadd.f32 %v1920, %v1972
      %v1974 = vpop.f32.mrf.mxu0
      %v1975 = vadd.f32 %v1922, %v1974
      %1976 = vmatprep.mubr.bf16.mxu0 0
      %1977 = vmatmul.mubr.bf16.gmra.mxu0 %v1879
      %v1978 = vpop.f32.mrf.mxu0
      %v1979 = vadd.f32 %v1926, %v1978
      %v1980 = vpop.f32.mrf.mxu0
      %v1981 = vadd.f32 %v1928, %v1980
      %v1982 = vpop.f32.mrf.mxu0
      %v1983 = vadd.f32 %v1930, %v1982
      %v1984 = vpop.f32.mrf.mxu0
      %v1985 = vadd.f32 %v1932, %v1984
      %1986 = vdwg.mxu0
      %v1987 = vld [vmem:[%s458] sm:$0xff]
      %v1988 = vld [vmem:[%s458 + $0x8] sm:$0xff]
      %v1989 = vld [vmem:[%s458 + $0x10] sm:$0xff]
      %v1990 = vld [vmem:[%s458 + $0x18] sm:$0xff]
      %v1991 = vld [vmem:[%s458 + $0x20] sm:$0xff]
      %v1992 = vld [vmem:[%s458 + $0x28] sm:$0xff]
      %v1993 = vld [vmem:[%s458 + $0x30] sm:$0xff]
      %v1994 = vld [vmem:[%s458 + $0x38] sm:$0xff]
      %v1995 = vadd.f32 %v1969, %v1971
      %1996 = vadd.xlane.f32.xlu0 %v1995
      %v1997 = vpop.xlane.xlu0 %1996
      %v1998 = vadd.f32 %v1973, %v1975
      %1999 = vadd.xlane.f32.xlu0 %v1998
      %v2000 = vpop.xlane.xlu0 %1999
      %v2001 = vadd.f32 %v1979, %v1981
      %2002 = vadd.xlane.f32.xlu0 %v2001
      %v2003 = vpop.xlane.xlu0 %2002
      %v2004 = vadd.f32 %v1983, %v1985
      %2005 = vadd.xlane.f32.xlu0 %v2004
      %v2006 = vpop.xlane.xlu0 %2005
      %v2007 = vmul.f32 %v1997, 0.00390625
      %v2008 = vmul.f32 %v2000, 0.00390625
      %v2009 = vmul.f32 %v2003, 0.00390625
      %v2010 = vmul.f32 %v2006, 0.00390625
      %v2011 = vmul.f32 %v1969, %v1969
      %v2012 = vmul.f32 %v1971, %v1971
      %v2013 = vmul.f32 %v1973, %v1973
      %v2014 = vmul.f32 %v1975, %v1975
      %v2015 = vmul.f32 %v1979, %v1979
      %v2016 = vmul.f32 %v1981, %v1981
      %v2017 = vmul.f32 %v1983, %v1983
      %v2018 = vmul.f32 %v1985, %v1985
      %v2019 = vadd.f32 %v2011, %v2012
      %2020 = vadd.xlane.f32.xlu0 %v2019
      %v2021 = vpop.xlane.xlu0 %2020
      %v2022 = vadd.f32 %v2013, %v2014
      %2023 = vadd.xlane.f32.xlu0 %v2022
      %v2024 = vpop.xlane.xlu0 %2023
      %v2025 = vadd.f32 %v2015, %v2016
      %2026 = vadd.xlane.f32.xlu0 %v2025
      %v2027 = vpop.xlane.xlu0 %2026
      %v2028 = vadd.f32 %v2017, %v2018
      %2029 = vadd.xlane.f32.xlu0 %v2028
      %v2030 = vpop.xlane.xlu0 %2029
      %v2031 = vmul.f32 %v2021, 0.00390625
      %v2032 = vmul.f32 %v2024, 0.00390625
      %v2033 = vmul.f32 %v2027, 0.00390625
      %v2034 = vmul.f32 %v2030, 0.00390625
      %v2035 = vmul.f32 %v2007, %v2007
      %v2036 = vmul.f32 %v2008, %v2008
      %v2037 = vmul.f32 %v2009, %v2009
      %v2038 = vmul.f32 %v2010, %v2010
      %v2039 = vsub.f32 %v2031, %v2035
      %v2040 = vsub.f32 %v2032, %v2036
      %v2041 = vsub.f32 %v2033, %v2037
      %v2042 = vsub.f32 %v2034, %v2038
      %v2043 = vmax.f32 %v2039, 0.0
      %v2044 = vmax.f32 %v2040, 0.0
      %v2045 = vmax.f32 %v2041, 0.0
      %v2046 = vmax.f32 %v2042, 0.0
      %v2047 = vadd.f32 %v2043, 1e-05
      %v2048 = vadd.f32 %v2044, 1e-05
      %v2049 = vadd.f32 %v2045, 1e-05
      %v2050 = vadd.f32 %v2046, 1e-05
      %v2051 = vrsqrt.pop %v2047
      %v2052 = vrsqrt.pop %v2048
      %v2053 = vrsqrt.pop %v2049
      %v2054 = vrsqrt.pop %v2050
      %v2055 = vsub.f32 %v1969, %v2007
      %v2056 = vsub.f32 %v1971, %v2007
      %v2057 = vsub.f32 %v1973, %v2008
      %v2058 = vsub.f32 %v1975, %v2008
      %v2059 = vsub.f32 %v1979, %v2009
      %v2060 = vsub.f32 %v1981, %v2009
      %v2061 = vsub.f32 %v1983, %v2010
      %v2062 = vsub.f32 %v1985, %v2010
      %v2063 = vmul.f32 %v2051, %v1987
      %v2064 = vmul.f32 %v2052, %v1988
      %v2065 = vmul.f32 %v2053, %v1989
      %v2066 = vmul.f32 %v2054, %v1990
      %2068 = vset.pattern.permute.xlu0 0
      %2069 = vperm.xlu0 %2068, %v2063
      %v2070 = vpop.permute.xlu0 %2069
      %2073 = vset.pattern.permute.xlu0 0
      %2074 = vperm.xlu0 %2073, %v2064
      %v2075 = vpop.permute.xlu0 %2074
      %2078 = vset.pattern.permute.xlu0 0
      %2079 = vperm.xlu0 %2078, %v2065
      %v2080 = vpop.permute.xlu0 %2079
      %2083 = vset.pattern.permute.xlu0 0
      %2084 = vperm.xlu0 %2083, %v2066
      %v2085 = vpop.permute.xlu0 %2084
      %v2087 = vmul.f32 %v2055, %v2070
      %v2088 = vmul.f32 %v2056, %v2070
      %v2089 = vmul.f32 %v2057, %v2075
      %v2090 = vmul.f32 %v2058, %v2075
      %v2091 = vmul.f32 %v2059, %v2080
      %v2092 = vmul.f32 %v2060, %v2080
      %v2093 = vmul.f32 %v2061, %v2085
      %v2094 = vmul.f32 %v2062, %v2085
      %2096 = vset.pattern.permute.xlu0 0
      %2097 = vperm.xlu0 %2096, %v1991
      %v2098 = vpop.permute.xlu0 %2097
      %2101 = vset.pattern.permute.xlu0 0
      %2102 = vperm.xlu0 %2101, %v1992
      %v2103 = vpop.permute.xlu0 %2102
      %2106 = vset.pattern.permute.xlu0 0
      %2107 = vperm.xlu0 %2106, %v1993
      %v2108 = vpop.permute.xlu0 %2107
      %2111 = vset.pattern.permute.xlu0 0
      %2112 = vperm.xlu0 %2111, %v1994
      %v2113 = vpop.permute.xlu0 %2112
      %v2115 = vadd.f32 %v2087, %v2098
      %v2116 = vadd.f32 %v2088, %v2098
      %v2117 = vadd.f32 %v2089, %v2103
      %v2118 = vadd.f32 %v2090, %v2103
      %v2119 = vadd.f32 %v2091, %v2108
      %v2120 = vadd.f32 %v2092, %v2108
      %v2121 = vadd.f32 %v2093, %v2113
      %v2122 = vadd.f32 %v2094, %v2113
      %vm2123 = vcmp.ge.f32.partialorder %v2115, 0.0
      %vm2124 = vcmp.ge.f32.partialorder %v2116, 0.0
      %vm2125 = vcmp.ge.f32.partialorder %v2117, 0.0
      %vm2126 = vcmp.ge.f32.partialorder %v2118, 0.0
      %vm2127 = vcmp.ge.f32.partialorder %v2119, 0.0
      %vm2128 = vcmp.ge.f32.partialorder %v2120, 0.0
      %vm2129 = vcmp.ge.f32.partialorder %v2121, 0.0
      %vm2130 = vcmp.ge.f32.partialorder %v2122, 0.0
      %v2131 = vmul.f32 %v2115, 0.2
      %v2132 = vmul.f32 %v2116, 0.2
      %v2133 = vmul.f32 %v2117, 0.2
      %v2134 = vmul.f32 %v2118, 0.2
      %v2135 = vmul.f32 %v2119, 0.2
      %v2136 = vmul.f32 %v2120, 0.2
      %v2137 = vmul.f32 %v2121, 0.2
      %v2138 = vmul.f32 %v2122, 0.2
      %v2139 = vsel %vm2123, %v2115, %v2131
      %v2140 = vsel %vm2124, %v2116, %v2132
      %v2141 = vsel %vm2125, %v2117, %v2133
      %v2142 = vsel %vm2126, %v2118, %v2134
      %v2143 = vsel %vm2127, %v2119, %v2135
      %v2144 = vsel %vm2128, %v2120, %v2136
      %v2145 = vsel %vm2129, %v2121, %v2137
      %v2146 = vsel %vm2130, %v2122, %v2138
      %2147 = vst [vmem:[%s465] sm:$0xff] %v2139
      %2148 = vst [vmem:[%s465 + $0x8] sm:$0xff] %v2140
      %2149 = vst [vmem:[%s465 + $0x10] sm:$0xff] %v2141
      %2150 = vst [vmem:[%s465 + $0x18] sm:$0xff] %v2142
      %2151 = vst [vmem:[%s465 + $0x20] sm:$0xff] %v2143
      %2152 = vst [vmem:[%s465 + $0x28] sm:$0xff] %v2144
      %2153 = vst [vmem:[%s465 + $0x30] sm:$0xff] %v2145
      %2154 = vst [vmem:[%s465 + $0x38] sm:$0xff] %v2146
      %s2155 = scalar_lea.vmem %s438, 64
      %v2156 = vld [vmem:[%s2155] sm:$0xff]
      %v2157 = vld [vmem:[%s2155 + $0x8] sm:$0xff]
      %v2158 = vld [vmem:[%s2155 + $0x10] sm:$0xff]
      %v2159 = vld [vmem:[%s2155 + $0x18] sm:$0xff]
      %v2160 = vld [vmem:[%s2155 + $0x20] sm:$0xff]
      %v2161 = vld [vmem:[%s2155 + $0x28] sm:$0xff]
      %v2162 = vld [vmem:[%s2155 + $0x30] sm:$0xff]
      %v2163 = vld [vmem:[%s2155 + $0x38] sm:$0xff]
      %v2164 = vmul.f32 %v519, %v2156
      %v2165 = vmul.f32 %v523, %v2157
      %v2166 = vmul.f32 %v519, %v2158
      %v2167 = vmul.f32 %v523, %v2159
      %v2168 = vmul.f32 %v519, %v2160
      %v2169 = vmul.f32 %v523, %v2161
      %v2170 = vmul.f32 %v519, %v2162
      %v2171 = vmul.f32 %v523, %v2163
      %2172 = vrot.lane.b32.xlu0 %v2156, 1
      %v2173 = vpop.permute.xlu0 %2172
      %2174 = vrot.lane.b32.xlu0 %v2158, 1
      %v2175 = vpop.permute.xlu0 %2174
      %2176 = vrot.lane.b32.xlu0 %v2160, 1
      %v2177 = vpop.permute.xlu0 %2176
      %2178 = vrot.lane.b32.xlu0 %v2162, 1
      %v2179 = vpop.permute.xlu0 %2178
      %2180 = vrot.lane.b32.xlu0 %v2157, 1
      %v2181 = vpop.permute.xlu0 %2180
      %2182 = vrot.lane.b32.xlu0 %v2159, 1
      %v2183 = vpop.permute.xlu0 %2182
      %2184 = vrot.lane.b32.xlu0 %v2161, 1
      %v2185 = vpop.permute.xlu0 %2184
      %2186 = vrot.lane.b32.xlu0 %v2163, 1
      %v2187 = vpop.permute.xlu0 %2186
      %v2188 = vsel %vm552, %v2173, %v2181
      %v2189 = vsel %vm552, %v2175, %v2183
      %v2190 = vsel %vm552, %v2177, %v2185
      %v2191 = vsel %vm552, %v2179, %v2187
      %v2192 = vsel %vm552, %v2181, %v2173
      %v2193 = vsel %vm552, %v2183, %v2175
      %v2194 = vsel %vm552, %v2185, %v2177
      %v2195 = vsel %vm552, %v2187, %v2179
      %v2196 = vmul.f32 %v565, %v2192
      %v2197 = vmul.f32 %v569, %v2188
      %v2198 = vmul.f32 %v565, %v2193
      %v2199 = vmul.f32 %v569, %v2189
      %v2200 = vmul.f32 %v565, %v2194
      %v2201 = vmul.f32 %v569, %v2190
      %v2202 = vmul.f32 %v565, %v2195
      %v2203 = vmul.f32 %v569, %v2191
      %v2204 = vadd.f32 %v2164, %v2196
      %v2205 = vadd.f32 %v2165, %v2197
      %v2206 = vadd.f32 %v2166, %v2198
      %v2207 = vadd.f32 %v2167, %v2199
      %v2208 = vadd.f32 %v2168, %v2200
      %v2209 = vadd.f32 %v2169, %v2201
      %v2210 = vadd.f32 %v2170, %v2202
      %v2211 = vadd.f32 %v2171, %v2203
      %2212 = vrot.lane.b32.xlu0 %v2156, 127
      %v2213 = vpop.permute.xlu0 %2212
      %2214 = vrot.lane.b32.xlu0 %v2158, 127
      %v2215 = vpop.permute.xlu0 %2214
      %2216 = vrot.lane.b32.xlu0 %v2160, 127
      %v2217 = vpop.permute.xlu0 %2216
      %2218 = vrot.lane.b32.xlu0 %v2162, 127
      %v2219 = vpop.permute.xlu0 %2218
      %2220 = vrot.lane.b32.xlu0 %v2157, 127
      %v2221 = vpop.permute.xlu0 %2220
      %2222 = vrot.lane.b32.xlu0 %v2159, 127
      %v2223 = vpop.permute.xlu0 %2222
      %2224 = vrot.lane.b32.xlu0 %v2161, 127
      %v2225 = vpop.permute.xlu0 %2224
      %2226 = vrot.lane.b32.xlu0 %v2163, 127
      %v2227 = vpop.permute.xlu0 %2226
      %v2228 = vsel %vm604, %v2213, %v2221
      %v2229 = vsel %vm604, %v2215, %v2223
      %v2230 = vsel %vm604, %v2217, %v2225
      %v2231 = vsel %vm604, %v2219, %v2227
      %v2232 = vsel %vm604, %v2221, %v2213
      %v2233 = vsel %vm604, %v2223, %v2215
      %v2234 = vsel %vm604, %v2225, %v2217
      %v2235 = vsel %vm604, %v2227, %v2219
      %v2236 = vmul.f32 %v617, %v2228
      %v2237 = vmul.f32 %v621, %v2232
      %v2238 = vmul.f32 %v617, %v2229
      %v2239 = vmul.f32 %v621, %v2233
      %v2240 = vmul.f32 %v617, %v2230
      %v2241 = vmul.f32 %v621, %v2234
      %v2242 = vmul.f32 %v617, %v2231
      %v2243 = vmul.f32 %v621, %v2235
      %v2244 = vadd.f32 %v2204, %v2236
      %v2245 = vadd.f32 %v2205, %v2237
      %v2246 = vadd.f32 %v2206, %v2238
      %v2247 = vadd.f32 %v2207, %v2239
      %v2248 = vadd.f32 %v2208, %v2240
      %v2249 = vadd.f32 %v2209, %v2241
      %v2250 = vadd.f32 %v2210, %v2242
      %v2251 = vadd.f32 %v2211, %v2243
      %v2252 = vmul.f32 %v644, %v2244
      %v2253 = vmul.f32 %v648, %v2245
      %v2254 = vmul.f32 %v644, %v2246
      %v2255 = vmul.f32 %v648, %v2247
      %v2256 = vmul.f32 %v644, %v2248
      %v2257 = vmul.f32 %v648, %v2249
      %v2258 = vmul.f32 %v644, %v2250
      %v2259 = vmul.f32 %v648, %v2251
      %2260 = vrot.lane.b32.xlu0 %v2244, 16
      %v2261 = vpop.permute.xlu0 %2260
      %2262 = vrot.lane.b32.xlu0 %v2246, 16
      %v2263 = vpop.permute.xlu0 %2262
      %2264 = vrot.lane.b32.xlu0 %v2248, 16
      %v2265 = vpop.permute.xlu0 %2264
      %2266 = vrot.lane.b32.xlu0 %v2250, 16
      %v2267 = vpop.permute.xlu0 %2266
      %2268 = vrot.lane.b32.xlu0 %v2245, 16
      %v2269 = vpop.permute.xlu0 %2268
      %2270 = vrot.lane.b32.xlu0 %v2247, 16
      %v2271 = vpop.permute.xlu0 %2270
      %2272 = vrot.lane.b32.xlu0 %v2249, 16
      %v2273 = vpop.permute.xlu0 %2272
      %2274 = vrot.lane.b32.xlu0 %v2251, 16
      %v2275 = vpop.permute.xlu0 %2274
      %v2276 = vsel %vm675, %v2261, %v2269
      %v2277 = vsel %vm675, %v2263, %v2271
      %v2278 = vsel %vm675, %v2265, %v2273
      %v2279 = vsel %vm675, %v2267, %v2275
      %v2280 = vsel %vm675, %v2269, %v2261
      %v2281 = vsel %vm675, %v2271, %v2263
      %v2282 = vsel %vm675, %v2273, %v2265
      %v2283 = vsel %vm675, %v2275, %v2267
      %v2284 = vmul.f32 %v688, %v2280
      %v2285 = vmul.f32 %v692, %v2276
      %v2286 = vmul.f32 %v688, %v2281
      %v2287 = vmul.f32 %v692, %v2277
      %v2288 = vmul.f32 %v688, %v2282
      %v2289 = vmul.f32 %v692, %v2278
      %v2290 = vmul.f32 %v688, %v2283
      %v2291 = vmul.f32 %v692, %v2279
      %v2292 = vadd.f32 %v2252, %v2284
      %v2293 = vadd.f32 %v2253, %v2285
      %v2294 = vadd.f32 %v2254, %v2286
      %v2295 = vadd.f32 %v2255, %v2287
      %v2296 = vadd.f32 %v2256, %v2288
      %v2297 = vadd.f32 %v2257, %v2289
      %v2298 = vadd.f32 %v2258, %v2290
      %v2299 = vadd.f32 %v2259, %v2291
      %2300 = vrot.lane.b32.xlu0 %v2244, 112
      %v2301 = vpop.permute.xlu0 %2300
      %2302 = vrot.lane.b32.xlu0 %v2246, 112
      %v2303 = vpop.permute.xlu0 %2302
      %2304 = vrot.lane.b32.xlu0 %v2248, 112
      %v2305 = vpop.permute.xlu0 %2304
      %2306 = vrot.lane.b32.xlu0 %v2250, 112
      %v2307 = vpop.permute.xlu0 %2306
      %2308 = vrot.lane.b32.xlu0 %v2245, 112
      %v2309 = vpop.permute.xlu0 %2308
      %2310 = vrot.lane.b32.xlu0 %v2247, 112
      %v2311 = vpop.permute.xlu0 %2310
      %2312 = vrot.lane.b32.xlu0 %v2249, 112
      %v2313 = vpop.permute.xlu0 %2312
      %2314 = vrot.lane.b32.xlu0 %v2251, 112
      %v2315 = vpop.permute.xlu0 %2314
      %v2316 = vsel %vm727, %v2301, %v2309
      %v2317 = vsel %vm727, %v2303, %v2311
      %v2318 = vsel %vm727, %v2305, %v2313
      %v2319 = vsel %vm727, %v2307, %v2315
      %v2320 = vsel %vm727, %v2309, %v2301
      %v2321 = vsel %vm727, %v2311, %v2303
      %v2322 = vsel %vm727, %v2313, %v2305
      %v2323 = vsel %vm727, %v2315, %v2307
      %v2324 = vmul.f32 %v740, %v2316
      %v2325 = vmul.f32 %v744, %v2320
      %v2326 = vmul.f32 %v740, %v2317
      %v2327 = vmul.f32 %v744, %v2321
      %v2328 = vmul.f32 %v740, %v2318
      %v2329 = vmul.f32 %v744, %v2322
      %v2330 = vmul.f32 %v740, %v2319
      %v2331 = vmul.f32 %v744, %v2323
      %v2332 = vadd.f32 %v2292, %v2324
      %v2333 = vadd.f32 %v2293, %v2325
      %v2334 = vadd.f32 %v2294, %v2326
      %v2335 = vadd.f32 %v2295, %v2327
      %v2336 = vadd.f32 %v2296, %v2328
      %v2337 = vadd.f32 %v2297, %v2329
      %v2338 = vadd.f32 %v2298, %v2330
      %v2339 = vadd.f32 %v2299, %v2331
      %2340 = vrot.lane.b32.xlu0 %v2332, 17
      %v2341 = vpop.permute.xlu0 %2340
      %2342 = vrot.lane.b32.xlu0 %v2334, 17
      %v2343 = vpop.permute.xlu0 %2342
      %2344 = vrot.lane.b32.xlu0 %v2336, 17
      %v2345 = vpop.permute.xlu0 %2344
      %2346 = vrot.lane.b32.xlu0 %v2338, 17
      %v2347 = vpop.permute.xlu0 %2346
      %2348 = vrot.lane.b32.xlu0 %v2333, 17
      %v2349 = vpop.permute.xlu0 %2348
      %2350 = vrot.lane.b32.xlu0 %v2335, 17
      %v2351 = vpop.permute.xlu0 %2350
      %2352 = vrot.lane.b32.xlu0 %v2337, 17
      %v2353 = vpop.permute.xlu0 %2352
      %2354 = vrot.lane.b32.xlu0 %v2339, 17
      %v2355 = vpop.permute.xlu0 %2354
      %v2356 = vsel %vm779, %v2341, %v2349
      %v2357 = vsel %vm779, %v2343, %v2351
      %v2358 = vsel %vm779, %v2345, %v2353
      %v2359 = vsel %vm779, %v2347, %v2355
      %v2360 = vsel %vm779, %v2349, %v2341
      %v2361 = vsel %vm779, %v2351, %v2343
      %v2362 = vsel %vm779, %v2353, %v2345
      %v2363 = vsel %vm779, %v2355, %v2347
      %v2364 = vld [vmem:[%s5] sm:$0x3]
      %v2366 = vlaneseq
      %v2367 = vshrl.u32 %v2366, 7
      %v2368 = vsub.s32 0, %v2367
      %v2369 = vrot.slane %v2364, %v2368
      %v2370 = vlaneseq
      %v2371 = vshrl.u32 %v2370, 7
      %v2372 = vsub.s32 1, %v2371
      %v2373 = vrot.slane %v2364, %v2372
      %v2376 = vmul.f32 %v2360, %v2369
      %v2377 = vmul.f32 %v2356, %v2373
      %v2378 = vmul.f32 %v2361, %v2369
      %v2379 = vmul.f32 %v2357, %v2373
      %v2380 = vmul.f32 %v2362, %v2369
      %v2381 = vmul.f32 %v2358, %v2373
      %v2382 = vmul.f32 %v2363, %v2369
      %v2383 = vmul.f32 %v2359, %v2373
      %2384 = vrot.lane.b32.xlu0 %v2332, 16
      %v2385 = vpop.permute.xlu0 %2384
      %2386 = vrot.lane.b32.xlu0 %v2334, 16
      %v2387 = vpop.permute.xlu0 %2386
      %2388 = vrot.lane.b32.xlu0 %v2336, 16
      %v2389 = vpop.permute.xlu0 %2388
      %2390 = vrot.lane.b32.xlu0 %v2338, 16
      %v2391 = vpop.permute.xlu0 %2390
      %2392 = vrot.lane.b32.xlu0 %v2333, 16
      %v2393 = vpop.permute.xlu0 %2392
      %2394 = vrot.lane.b32.xlu0 %v2335, 16
      %v2395 = vpop.permute.xlu0 %2394
      %2396 = vrot.lane.b32.xlu0 %v2337, 16
      %v2397 = vpop.permute.xlu0 %2396
      %2398 = vrot.lane.b32.xlu0 %v2339, 16
      %v2399 = vpop.permute.xlu0 %2398
      %v2400 = vsel %vm675, %v2385, %v2393
      %v2401 = vsel %vm675, %v2387, %v2395
      %v2402 = vsel %vm675, %v2389, %v2397
      %v2403 = vsel %vm675, %v2391, %v2399
      %v2404 = vsel %vm675, %v2393, %v2385
      %v2405 = vsel %vm675, %v2395, %v2387
      %v2406 = vsel %vm675, %v2397, %v2389
      %v2407 = vsel %vm675, %v2399, %v2391
      %v2408 = vld [vmem:[%s832] sm:$0x3]
      %v2410 = vlaneseq
      %v2411 = vshrl.u32 %v2410, 7
      %v2412 = vsub.s32 0, %v2411
      %v2413 = vrot.slane %v2408, %v2412
      %v2414 = vlaneseq
      %v2415 = vshrl.u32 %v2414, 7
      %v2416 = vsub.s32 1, %v2415
      %v2417 = vrot.slane %v2408, %v2416
      %v2420 = vmul.f32 %v2404, %v2413
      %v2421 = vmul.f32 %v2400, %v2417
      %v2422 = vmul.f32 %v2405, %v2413
      %v2423 = vmul.f32 %v2401, %v2417
      %v2424 = vmul.f32 %v2406, %v2413
      %v2425 = vmul.f32 %v2402, %v2417
      %v2426 = vmul.f32 %v2407, %v2413
      %v2427 = vmul.f32 %v2403, %v2417
      %2428 = vrot.lane.b32.xlu0 %v2332, 15
      %v2429 = vpop.permute.xlu0 %2428
      %2430 = vrot.lane.b32.xlu0 %v2334, 15
      %v2431 = vpop.permute.xlu0 %2430
      %2432 = vrot.lane.b32.xlu0 %v2336, 15
      %v2433 = vpop.permute.xlu0 %2432
      %2434 = vrot.lane.b32.xlu0 %v2338, 15
      %v2435 = vpop.permute.xlu0 %2434
      %2436 = vrot.lane.b32.xlu0 %v2333, 15
      %v2437 = vpop.permute.xlu0 %2436
      %2438 = vrot.lane.b32.xlu0 %v2335, 15
      %v2439 = vpop.permute.xlu0 %2438
      %2440 = vrot.lane.b32.xlu0 %v2337, 15
      %v2441 = vpop.permute.xlu0 %2440
      %2442 = vrot.lane.b32.xlu0 %v2339, 15
      %v2443 = vpop.permute.xlu0 %2442
      %v2444 = vsel %vm869, %v2429, %v2437
      %v2445 = vsel %vm869, %v2431, %v2439
      %v2446 = vsel %vm869, %v2433, %v2441
      %v2447 = vsel %vm869, %v2435, %v2443
      %v2448 = vsel %vm869, %v2437, %v2429
      %v2449 = vsel %vm869, %v2439, %v2431
      %v2450 = vsel %vm869, %v2441, %v2433
      %v2451 = vsel %vm869, %v2443, %v2435
      %v2452 = vld [vmem:[%s878] sm:$0x3]
      %v2454 = vlaneseq
      %v2455 = vshrl.u32 %v2454, 7
      %v2456 = vsub.s32 0, %v2455
      %v2457 = vrot.slane %v2452, %v2456
      %v2458 = vlaneseq
      %v2459 = vshrl.u32 %v2458, 7
      %v2460 = vsub.s32 1, %v2459
      %v2461 = vrot.slane %v2452, %v2460
      %v2464 = vmul.f32 %v2448, %v2457
      %v2465 = vmul.f32 %v2444, %v2461
      %v2466 = vmul.f32 %v2449, %v2457
      %v2467 = vmul.f32 %v2445, %v2461
      %v2468 = vmul.f32 %v2450, %v2457
      %v2469 = vmul.f32 %v2446, %v2461
      %v2470 = vmul.f32 %v2451, %v2457
      %v2471 = vmul.f32 %v2447, %v2461
      %2472 = vrot.lane.b32.xlu0 %v2332, 1
      %v2473 = vpop.permute.xlu0 %2472
      %2474 = vrot.lane.b32.xlu0 %v2334, 1
      %v2475 = vpop.permute.xlu0 %2474
      %2476 = vrot.lane.b32.xlu0 %v2336, 1
      %v2477 = vpop.permute.xlu0 %2476
      %2478 = vrot.lane.b32.xlu0 %v2338, 1
      %v2479 = vpop.permute.xlu0 %2478
      %2480 = vrot.lane.b32.xlu0 %v2333, 1
      %v2481 = vpop.permute.xlu0 %2480
      %2482 = vrot.lane.b32.xlu0 %v2335, 1
      %v2483 = vpop.permute.xlu0 %2482
      %2484 = vrot.lane.b32.xlu0 %v2337, 1
      %v2485 = vpop.permute.xlu0 %2484
      %2486 = vrot.lane.b32.xlu0 %v2339, 1
      %v2487 = vpop.permute.xlu0 %2486
      %v2488 = vsel %vm552, %v2473, %v2481
      %v2489 = vsel %vm552, %v2475, %v2483
      %v2490 = vsel %vm552, %v2477, %v2485
      %v2491 = vsel %vm552, %v2479, %v2487
      %v2492 = vsel %vm552, %v2481, %v2473
      %v2493 = vsel %vm552, %v2483, %v2475
      %v2494 = vsel %vm552, %v2485, %v2477
      %v2495 = vsel %vm552, %v2487, %v2479
      %v2496 = vld [vmem:[%s923] sm:$0x3]
      %v2498 = vlaneseq
      %v2499 = vshrl.u32 %v2498, 7
      %v2500 = vsub.s32 0, %v2499
      %v2501 = vrot.slane %v2496, %v2500
      %v2502 = vlaneseq
      %v2503 = vshrl.u32 %v2502, 7
      %v2504 = vsub.s32 1, %v2503
      %v2505 = vrot.slane %v2496, %v2504
      %v2508 = vmul.f32 %v2492, %v2501
      %v2509 = vmul.f32 %v2488, %v2505
      %v2510 = vmul.f32 %v2493, %v2501
      %v2511 = vmul.f32 %v2489, %v2505
      %v2512 = vmul.f32 %v2494, %v2501
      %v2513 = vmul.f32 %v2490, %v2505
      %v2514 = vmul.f32 %v2495, %v2501
      %v2515 = vmul.f32 %v2491, %v2505
      %2516 = vrot.lane.b32.xlu0 %v2332, 127
      %v2517 = vpop.permute.xlu0 %2516
      %2518 = vrot.lane.b32.xlu0 %v2334, 127
      %v2519 = vpop.permute.xlu0 %2518
      %2520 = vrot.lane.b32.xlu0 %v2336, 127
      %v2521 = vpop.permute.xlu0 %2520
      %2522 = vrot.lane.b32.xlu0 %v2338, 127
      %v2523 = vpop.permute.xlu0 %2522
      %2524 = vrot.lane.b32.xlu0 %v2333, 127
      %v2525 = vpop.permute.xlu0 %2524
      %2526 = vrot.lane.b32.xlu0 %v2335, 127
      %v2527 = vpop.permute.xlu0 %2526
      %2528 = vrot.lane.b32.xlu0 %v2337, 127
      %v2529 = vpop.permute.xlu0 %2528
      %2530 = vrot.lane.b32.xlu0 %v2339, 127
      %v2531 = vpop.permute.xlu0 %2530
      %v2532 = vsel %vm604, %v2517, %v2525
      %v2533 = vsel %vm604, %v2519, %v2527
      %v2534 = vsel %vm604, %v2521, %v2529
      %v2535 = vsel %vm604, %v2523, %v2531
      %v2536 = vsel %vm604, %v2525, %v2517
      %v2537 = vsel %vm604, %v2527, %v2519
      %v2538 = vsel %vm604, %v2529, %v2521
      %v2539 = vsel %vm604, %v2531, %v2523
      %v2540 = vld [vmem:[%s968] sm:$0x3]
      %v2542 = vlaneseq
      %v2543 = vshrl.u32 %v2542, 7
      %v2544 = vsub.s32 0, %v2543
      %v2545 = vrot.slane %v2540, %v2544
      %v2546 = vlaneseq
      %v2547 = vshrl.u32 %v2546, 7
      %v2548 = vsub.s32 1, %v2547
      %v2549 = vrot.slane %v2540, %v2548
      %v2552 = vmul.f32 %v2532, %v2545
      %v2553 = vmul.f32 %v2536, %v2549
      %v2554 = vmul.f32 %v2533, %v2545
      %v2555 = vmul.f32 %v2537, %v2549
      %v2556 = vmul.f32 %v2534, %v2545
      %v2557 = vmul.f32 %v2538, %v2549
      %v2558 = vmul.f32 %v2535, %v2545
      %v2559 = vmul.f32 %v2539, %v2549
      %2560 = vrot.lane.b32.xlu0 %v2332, 113
      %v2561 = vpop.permute.xlu0 %2560
      %2562 = vrot.lane.b32.xlu0 %v2334, 113
      %v2563 = vpop.permute.xlu0 %2562
      %2564 = vrot.lane.b32.xlu0 %v2336, 113
      %v2565 = vpop.permute.xlu0 %2564
      %2566 = vrot.lane.b32.xlu0 %v2338, 113
      %v2567 = vpop.permute.xlu0 %2566
      %2568 = vrot.lane.b32.xlu0 %v2333, 113
      %v2569 = vpop.permute.xlu0 %2568
      %2570 = vrot.lane.b32.xlu0 %v2335, 113
      %v2571 = vpop.permute.xlu0 %2570
      %2572 = vrot.lane.b32.xlu0 %v2337, 113
      %v2573 = vpop.permute.xlu0 %2572
      %2574 = vrot.lane.b32.xlu0 %v2339, 113
      %v2575 = vpop.permute.xlu0 %2574
      %v2576 = vsel %vm1005, %v2561, %v2569
      %v2577 = vsel %vm1005, %v2563, %v2571
      %v2578 = vsel %vm1005, %v2565, %v2573
      %v2579 = vsel %vm1005, %v2567, %v2575
      %v2580 = vsel %vm1005, %v2569, %v2561
      %v2581 = vsel %vm1005, %v2571, %v2563
      %v2582 = vsel %vm1005, %v2573, %v2565
      %v2583 = vsel %vm1005, %v2575, %v2567
      %v2584 = vld [vmem:[%s1014] sm:$0x3]
      %v2586 = vlaneseq
      %v2587 = vshrl.u32 %v2586, 7
      %v2588 = vsub.s32 0, %v2587
      %v2589 = vrot.slane %v2584, %v2588
      %v2590 = vlaneseq
      %v2591 = vshrl.u32 %v2590, 7
      %v2592 = vsub.s32 1, %v2591
      %v2593 = vrot.slane %v2584, %v2592
      %v2596 = vmul.f32 %v2576, %v2589
      %v2597 = vmul.f32 %v2580, %v2593
      %v2598 = vmul.f32 %v2577, %v2589
      %v2599 = vmul.f32 %v2581, %v2593
      %v2600 = vmul.f32 %v2578, %v2589
      %v2601 = vmul.f32 %v2582, %v2593
      %v2602 = vmul.f32 %v2579, %v2589
      %v2603 = vmul.f32 %v2583, %v2593
      %2604 = vrot.lane.b32.xlu0 %v2332, 112
      %v2605 = vpop.permute.xlu0 %2604
      %2606 = vrot.lane.b32.xlu0 %v2334, 112
      %v2607 = vpop.permute.xlu0 %2606
      %2608 = vrot.lane.b32.xlu0 %v2336, 112
      %v2609 = vpop.permute.xlu0 %2608
      %2610 = vrot.lane.b32.xlu0 %v2338, 112
      %v2611 = vpop.permute.xlu0 %2610
      %2612 = vrot.lane.b32.xlu0 %v2333, 112
      %v2613 = vpop.permute.xlu0 %2612
      %2614 = vrot.lane.b32.xlu0 %v2335, 112
      %v2615 = vpop.permute.xlu0 %2614
      %2616 = vrot.lane.b32.xlu0 %v2337, 112
      %v2617 = vpop.permute.xlu0 %2616
      %2618 = vrot.lane.b32.xlu0 %v2339, 112
      %v2619 = vpop.permute.xlu0 %2618
      %v2620 = vsel %vm727, %v2605, %v2613
      %v2621 = vsel %vm727, %v2607, %v2615
      %v2622 = vsel %vm727, %v2609, %v2617
      %v2623 = vsel %vm727, %v2611, %v2619
      %v2624 = vsel %vm727, %v2613, %v2605
      %v2625 = vsel %vm727, %v2615, %v2607
      %v2626 = vsel %vm727, %v2617, %v2609
      %v2627 = vsel %vm727, %v2619, %v2611
      %v2628 = vld [vmem:[%s1059] sm:$0x3]
      %v2630 = vlaneseq
      %v2631 = vshrl.u32 %v2630, 7
      %v2632 = vsub.s32 0, %v2631
      %v2633 = vrot.slane %v2628, %v2632
      %v2634 = vlaneseq
      %v2635 = vshrl.u32 %v2634, 7
      %v2636 = vsub.s32 1, %v2635
      %v2637 = vrot.slane %v2628, %v2636
      %v2640 = vmul.f32 %v2620, %v2633
      %v2641 = vmul.f32 %v2624, %v2637
      %v2642 = vmul.f32 %v2621, %v2633
      %v2643 = vmul.f32 %v2625, %v2637
      %v2644 = vmul.f32 %v2622, %v2633
      %v2645 = vmul.f32 %v2626, %v2637
      %v2646 = vmul.f32 %v2623, %v2633
      %v2647 = vmul.f32 %v2627, %v2637
      %2648 = vrot.lane.b32.xlu0 %v2332, 111
      %v2649 = vpop.permute.xlu0 %2648
      %2650 = vrot.lane.b32.xlu0 %v2334, 111
      %v2651 = vpop.permute.xlu0 %2650
      %2652 = vrot.lane.b32.xlu0 %v2336, 111
      %v2653 = vpop.permute.xlu0 %2652
      %2654 = vrot.lane.b32.xlu0 %v2338, 111
      %v2655 = vpop.permute.xlu0 %2654
      %2656 = vrot.lane.b32.xlu0 %v2333, 111
      %v2657 = vpop.permute.xlu0 %2656
      %2658 = vrot.lane.b32.xlu0 %v2335, 111
      %v2659 = vpop.permute.xlu0 %2658
      %2660 = vrot.lane.b32.xlu0 %v2337, 111
      %v2661 = vpop.permute.xlu0 %2660
      %2662 = vrot.lane.b32.xlu0 %v2339, 111
      %v2663 = vpop.permute.xlu0 %2662
      %v2664 = vsel %vm1096, %v2649, %v2657
      %v2665 = vsel %vm1096, %v2651, %v2659
      %v2666 = vsel %vm1096, %v2653, %v2661
      %v2667 = vsel %vm1096, %v2655, %v2663
      %v2668 = vsel %vm1096, %v2657, %v2649
      %v2669 = vsel %vm1096, %v2659, %v2651
      %v2670 = vsel %vm1096, %v2661, %v2653
      %v2671 = vsel %vm1096, %v2663, %v2655
      %v2672 = vld [vmem:[%s1105] sm:$0x3]
      %v2674 = vlaneseq
      %v2675 = vshrl.u32 %v2674, 7
      %v2676 = vsub.s32 0, %v2675
      %v2677 = vrot.slane %v2672, %v2676
      %v2678 = vlaneseq
      %v2679 = vshrl.u32 %v2678, 7
      %v2680 = vsub.s32 1, %v2679
      %v2681 = vrot.slane %v2672, %v2680
      %v2684 = vmul.f32 %v2664, %v2677
      %v2685 = vmul.f32 %v2668, %v2681
      %v2686 = vmul.f32 %v2665, %v2677
      %v2687 = vmul.f32 %v2669, %v2681
      %v2688 = vmul.f32 %v2666, %v2677
      %v2689 = vmul.f32 %v2670, %v2681
      %v2690 = vmul.f32 %v2667, %v2677
      %v2691 = vmul.f32 %v2671, %v2681
      %v2692 = vpack.c.bf16 %v2378, %v2376
      %v2693 = vpack.c.bf16 %v2379, %v2377
      %v2694 = vpack.c.bf16 %v2382, %v2380
      %v2695 = vpack.c.bf16 %v2383, %v2381
      %v2696 = vpack.c.bf16 %v2422, %v2420
      %v2697 = vpack.c.bf16 %v2423, %v2421
      %v2698 = vpack.c.bf16 %v2426, %v2424
      %v2699 = vpack.c.bf16 %v2427, %v2425
      %v2700 = vpack.c.bf16 %v2466, %v2464
      %v2701 = vpack.c.bf16 %v2467, %v2465
      %v2702 = vpack.c.bf16 %v2470, %v2468
      %v2703 = vpack.c.bf16 %v2471, %v2469
      %v2704 = vpack.c.bf16 %v2510, %v2508
      %v2705 = vpack.c.bf16 %v2511, %v2509
      %v2706 = vpack.c.bf16 %v2514, %v2512
      %v2707 = vpack.c.bf16 %v2515, %v2513
      %v2708 = vpack.c.bf16 %v2334, %v2332
      %v2709 = vpack.c.bf16 %v2335, %v2333
      %v2710 = vpack.c.bf16 %v2338, %v2336
      %v2711 = vpack.c.bf16 %v2339, %v2337
      %v2712 = vpack.c.bf16 %v2554, %v2552
      %v2713 = vpack.c.bf16 %v2555, %v2553
      %v2714 = vpack.c.bf16 %v2558, %v2556
      %v2715 = vpack.c.bf16 %v2559, %v2557
      %v2716 = vpack.c.bf16 %v2598, %v2596
      %v2717 = vpack.c.bf16 %v2599, %v2597
      %v2718 = vpack.c.bf16 %v2602, %v2600
      %v2719 = vpack.c.bf16 %v2603, %v2601
      %v2720 = vpack.c.bf16 %v2642, %v2640
      %v2721 = vpack.c.bf16 %v2643, %v2641
      %v2722 = vpack.c.bf16 %v2646, %v2644
      %v2723 = vpack.c.bf16 %v2647, %v2645
      %v2724 = vpack.c.bf16 %v2686, %v2684
      %v2725 = vpack.c.bf16 %v2687, %v2685
      %v2726 = vpack.c.bf16 %v2690, %v2688
      %v2727 = vpack.c.bf16 %v2691, %v2689
      %2728 = vmatprep.subr.bf16.mxu0 %v2707
      %2729 = vmatpush1.bf16.msra.mxu0 %v2706
      %2730 = vmatprep.subr.bf16.mxu0 %v2705
      %2731 = vmatpush1.bf16.msra.mxu0 %v2704
      %2732 = vmatprep.subr.bf16.mxu0 %v2703
      %2733 = vmatpush1.bf16.msra.mxu0 %v2702
      %2734 = vmatprep.subr.bf16.mxu0 %v2701
      %2735 = vmatpush1.bf16.msra.mxu0 %v2700
      %2736 = vmatprep.subr.bf16.mxu0 %v2699
      %2737 = vmatpush1.bf16.msra.mxu0 %v2698
      %2738 = vmatprep.subr.bf16.mxu0 %v2697
      %2739 = vmatpush1.bf16.msra.mxu0 %v2696
      %2740 = vmatprep.subr.bf16.mxu0 %v2695
      %2741 = vmatpush1.bf16.msra.mxu0 %v2694
      %2742 = vmatprep.subr.bf16.mxu0 %v2693
      %2743 = vmatpush1.bf16.msra.mxu0 %v2692
      %2744 = vmatprep.subr.bf16.mxu0 %v2723
      %2745 = vmatpush2.bf16.msra.mxu0 %v2722
      %2746 = vmatprep.subr.bf16.mxu0 %v2721
      %2747 = vmatpush2.bf16.msra.mxu0 %v2720
      %2748 = vmatprep.subr.bf16.mxu0 %v2719
      %2749 = vmatpush2.bf16.msra.mxu0 %v2718
      %2750 = vmatprep.subr.bf16.mxu0 %v2717
      %2751 = vmatpush2.bf16.msra.mxu0 %v2716
      %2752 = vmatprep.subr.bf16.mxu0 %v2715
      %2753 = vmatpush2.bf16.msra.mxu0 %v2714
      %2754 = vmatprep.subr.bf16.mxu0 %v2713
      %2755 = vmatpush2.bf16.msra.mxu0 %v2712
      %2756 = vmatprep.subr.bf16.mxu0 %v2711
      %2757 = vmatpush2.bf16.msra.mxu0 %v2710
      %2758 = vmatprep.subr.bf16.mxu0 %v2709
      %2759 = vmatpush2.bf16.msra.mxu0 %v2708
      %2760 = vmatprep.mubr.bf16.mxu0 %v1203
      %2761 = vmatmul.mubr.bf16.gmra.mxu0 %v1202
      %v2762 = vpop.f32.mrf.mxu0
      %v2763 = vadd.f32 %v1165, %v2762
      %v2764 = vpop.f32.mrf.mxu0
      %v2765 = vadd.f32 %v1165, %v2764
      %v2766 = vpop.f32.mrf.mxu0
      %v2767 = vadd.f32 %v1170, %v2766
      %v2768 = vpop.f32.mrf.mxu0
      %v2769 = vadd.f32 %v1170, %v2768
      %2770 = vmatprep.mubr.bf16.mxu0 %v1206
      %2771 = vmatmul.mubr.bf16.gmra.mxu0 %v1205
      %v2772 = vpop.f32.mrf.mxu0
      %v2773 = vadd.f32 %v1175, %v2772
      %v2774 = vpop.f32.mrf.mxu0
      %v2775 = vadd.f32 %v1175, %v2774
      %v2776 = vpop.f32.mrf.mxu0
      %v2777 = vadd.f32 %v1180, %v2776
      %v2778 = vpop.f32.mrf.mxu0
      %v2779 = vadd.f32 %v1180, %v2778
      %2780 = vdwg.mxu0
      %2781 = vmatprep.subr.bf16.mxu0 0
      %2782 = vmatpush1.bf16.msra.mxu0 0
      %2783 = vmatprep.subr.bf16.mxu0 0
      %2784 = vmatpush1.bf16.msra.mxu0 0
      %2785 = vmatprep.subr.bf16.mxu0 0
      %2786 = vmatpush1.bf16.msra.mxu0 0
      %2787 = vmatprep.subr.bf16.mxu0 0
      %2788 = vmatpush1.bf16.msra.mxu0 0
      %2789 = vmatprep.subr.bf16.mxu0 0
      %2790 = vmatpush1.bf16.msra.mxu0 0
      %2791 = vmatprep.subr.bf16.mxu0 0
      %2792 = vmatpush1.bf16.msra.mxu0 0
      %2793 = vmatprep.subr.bf16.mxu0 %v2727
      %2794 = vmatpush1.bf16.msra.mxu0 %v2726
      %2795 = vmatprep.subr.bf16.mxu0 %v2725
      %2796 = vmatpush1.bf16.msra.mxu0 %v2724
      %2797 = vmatprep.subr.bf16.mxu0 0
      %2798 = vmatpush2.bf16.msra.mxu0 0
      %2799 = vmatprep.subr.bf16.mxu0 0
      %2800 = vmatpush2.bf16.msra.mxu0 0
      %2801 = vmatprep.subr.bf16.mxu0 0
      %2802 = vmatpush2.bf16.msra.mxu0 0
      %2803 = vmatprep.subr.bf16.mxu0 0
      %2804 = vmatpush2.bf16.msra.mxu0 0
      %2805 = vmatprep.subr.bf16.mxu0 0
      %2806 = vmatpush2.bf16.msra.mxu0 0
      %2807 = vmatprep.subr.bf16.mxu0 0
      %2808 = vmatpush2.bf16.msra.mxu0 0
      %2809 = vmatprep.subr.bf16.mxu0 0
      %2810 = vmatpush2.bf16.msra.mxu0 0
      %2811 = vmatprep.subr.bf16.mxu0 0
      %2812 = vmatpush2.bf16.msra.mxu0 0
      %2813 = vmatprep.mubr.bf16.mxu0 0
      %2814 = vmatmul.mubr.bf16.gmra.mxu0 %v1214
      %v2815 = vpop.f32.mrf.mxu0
      %v2816 = vadd.f32 %v2763, %v2815
      %v2817 = vpop.f32.mrf.mxu0
      %v2818 = vadd.f32 %v2765, %v2817
      %v2819 = vpop.f32.mrf.mxu0
      %v2820 = vadd.f32 %v2767, %v2819
      %v2821 = vpop.f32.mrf.mxu0
      %v2822 = vadd.f32 %v2769, %v2821
      %2823 = vmatprep.mubr.bf16.mxu0 0
      %2824 = vmatmul.mubr.bf16.gmra.mxu0 %v1217
      %v2825 = vpop.f32.mrf.mxu0
      %v2826 = vadd.f32 %v2773, %v2825
      %v2827 = vpop.f32.mrf.mxu0
      %v2828 = vadd.f32 %v2775, %v2827
      %v2829 = vpop.f32.mrf.mxu0
      %v2830 = vadd.f32 %v2777, %v2829
      %v2831 = vpop.f32.mrf.mxu0
      %v2832 = vadd.f32 %v2779, %v2831
      %2833 = vdwg.mxu0
      %s2834 = scalar_lea.vmem %s444, 2
      %v2835 = vld [vmem:[%s2834] sm:$0x3]
      %v2837 = vlaneseq
      %v2838 = vshrl.u32 %v2837, 7
      %v2839 = vsub.s32 0, %v2838
      %v2840 = vrot.slane %v2835, %v2839
      %v2841 = vlaneseq
      %v2842 = vshrl.u32 %v2841, 7
      %v2843 = vsub.s32 1, %v2842
      %v2844 = vrot.slane %v2835, %v2843
      %v2847 = vmul.f32 %v1329, %v2840
      %v2848 = vmul.f32 %v1329, %v2844
      %v2849 = vmul.f32 %v1334, %v2840
      %v2850 = vmul.f32 %v1334, %v2844
      %v2851 = vmul.f32 %v1339, %v2840
      %v2852 = vmul.f32 %v1339, %v2844
      %v2853 = vmul.f32 %v1344, %v2840
      %v2854 = vmul.f32 %v1344, %v2844
      %v2855 = vadd.f32 %v2816, %v2847
      %v2856 = vadd.f32 %v2818, %v2848
      %v2857 = vadd.f32 %v2820, %v2849
      %v2858 = vadd.f32 %v2822, %v2850
      %v2859 = vadd.f32 %v2826, %v2851
      %v2860 = vadd.f32 %v2828, %v2852
      %v2861 = vadd.f32 %v2830, %v2853
      %v2862 = vadd.f32 %v2832, %v2854
      %s2863 = scalar_lea.vmem %s451, 64
      %v2864 = vld [vmem:[%s2863] sm:$0xff]
      %v2865 = vld [vmem:[%s2863 + $0x8] sm:$0xff]
      %v2866 = vld [vmem:[%s2863 + $0x10] sm:$0xff]
      %v2867 = vld [vmem:[%s2863 + $0x18] sm:$0xff]
      %v2868 = vld [vmem:[%s2863 + $0x20] sm:$0xff]
      %v2869 = vld [vmem:[%s2863 + $0x28] sm:$0xff]
      %v2870 = vld [vmem:[%s2863 + $0x30] sm:$0xff]
      %v2871 = vld [vmem:[%s2863 + $0x38] sm:$0xff]
      %v2872 = vadd.f32 %v2855, %v2856
      %2873 = vadd.xlane.f32.xlu0 %v2872
      %v2874 = vpop.xlane.xlu0 %2873
      %v2875 = vadd.f32 %v2857, %v2858
      %2876 = vadd.xlane.f32.xlu0 %v2875
      %v2877 = vpop.xlane.xlu0 %2876
      %v2878 = vadd.f32 %v2859, %v2860
      %2879 = vadd.xlane.f32.xlu0 %v2878
      %v2880 = vpop.xlane.xlu0 %2879
      %v2881 = vadd.f32 %v2861, %v2862
      %2882 = vadd.xlane.f32.xlu0 %v2881
      %v2883 = vpop.xlane.xlu0 %2882
      %v2884 = vmul.f32 %v2874, 0.00390625
      %v2885 = vmul.f32 %v2877, 0.00390625
      %v2886 = vmul.f32 %v2880, 0.00390625
      %v2887 = vmul.f32 %v2883, 0.00390625
      %v2888 = vmul.f32 %v2855, %v2855
      %v2889 = vmul.f32 %v2856, %v2856
      %v2890 = vmul.f32 %v2857, %v2857
      %v2891 = vmul.f32 %v2858, %v2858
      %v2892 = vmul.f32 %v2859, %v2859
      %v2893 = vmul.f32 %v2860, %v2860
      %v2894 = vmul.f32 %v2861, %v2861
      %v2895 = vmul.f32 %v2862, %v2862
      %v2896 = vadd.f32 %v2888, %v2889
      %2897 = vadd.xlane.f32.xlu0 %v2896
      %v2898 = vpop.xlane.xlu0 %2897
      %v2899 = vadd.f32 %v2890, %v2891
      %2900 = vadd.xlane.f32.xlu0 %v2899
      %v2901 = vpop.xlane.xlu0 %2900
      %v2902 = vadd.f32 %v2892, %v2893
      %2903 = vadd.xlane.f32.xlu0 %v2902
      %v2904 = vpop.xlane.xlu0 %2903
      %v2905 = vadd.f32 %v2894, %v2895
      %2906 = vadd.xlane.f32.xlu0 %v2905
      %v2907 = vpop.xlane.xlu0 %2906
      %v2908 = vmul.f32 %v2898, 0.00390625
      %v2909 = vmul.f32 %v2901, 0.00390625
      %v2910 = vmul.f32 %v2904, 0.00390625
      %v2911 = vmul.f32 %v2907, 0.00390625
      %v2912 = vmul.f32 %v2884, %v2884
      %v2913 = vmul.f32 %v2885, %v2885
      %v2914 = vmul.f32 %v2886, %v2886
      %v2915 = vmul.f32 %v2887, %v2887
      %v2916 = vsub.f32 %v2908, %v2912
      %v2917 = vsub.f32 %v2909, %v2913
      %v2918 = vsub.f32 %v2910, %v2914
      %v2919 = vsub.f32 %v2911, %v2915
      %v2920 = vmax.f32 %v2916, 0.0
      %v2921 = vmax.f32 %v2917, 0.0
      %v2922 = vmax.f32 %v2918, 0.0
      %v2923 = vmax.f32 %v2919, 0.0
      %v2924 = vadd.f32 %v2920, 1e-05
      %v2925 = vadd.f32 %v2921, 1e-05
      %v2926 = vadd.f32 %v2922, 1e-05
      %v2927 = vadd.f32 %v2923, 1e-05
      %v2928 = vrsqrt.pop %v2924
      %v2929 = vrsqrt.pop %v2925
      %v2930 = vrsqrt.pop %v2926
      %v2931 = vrsqrt.pop %v2927
      %v2932 = vsub.f32 %v2855, %v2884
      %v2933 = vsub.f32 %v2856, %v2884
      %v2934 = vsub.f32 %v2857, %v2885
      %v2935 = vsub.f32 %v2858, %v2885
      %v2936 = vsub.f32 %v2859, %v2886
      %v2937 = vsub.f32 %v2860, %v2886
      %v2938 = vsub.f32 %v2861, %v2887
      %v2939 = vsub.f32 %v2862, %v2887
      %v2940 = vmul.f32 %v2928, %v2864
      %v2941 = vmul.f32 %v2929, %v2865
      %v2942 = vmul.f32 %v2930, %v2866
      %v2943 = vmul.f32 %v2931, %v2867
      %2945 = vset.pattern.permute.xlu0 0
      %2946 = vperm.xlu0 %2945, %v2940
      %v2947 = vpop.permute.xlu0 %2946
      %2950 = vset.pattern.permute.xlu0 0
      %2951 = vperm.xlu0 %2950, %v2941
      %v2952 = vpop.permute.xlu0 %2951
      %2955 = vset.pattern.permute.xlu0 0
      %2956 = vperm.xlu0 %2955, %v2942
      %v2957 = vpop.permute.xlu0 %2956
      %2960 = vset.pattern.permute.xlu0 0
      %2961 = vperm.xlu0 %2960, %v2943
      %v2962 = vpop.permute.xlu0 %2961
      %v2964 = vmul.f32 %v2932, %v2947
      %v2965 = vmul.f32 %v2933, %v2947
      %v2966 = vmul.f32 %v2934, %v2952
      %v2967 = vmul.f32 %v2935, %v2952
      %v2968 = vmul.f32 %v2936, %v2957
      %v2969 = vmul.f32 %v2937, %v2957
      %v2970 = vmul.f32 %v2938, %v2962
      %v2971 = vmul.f32 %v2939, %v2962
      %2973 = vset.pattern.permute.xlu0 0
      %2974 = vperm.xlu0 %2973, %v2868
      %v2975 = vpop.permute.xlu0 %2974
      %2978 = vset.pattern.permute.xlu0 0
      %2979 = vperm.xlu0 %2978, %v2869
      %v2980 = vpop.permute.xlu0 %2979
      %2983 = vset.pattern.permute.xlu0 0
      %2984 = vperm.xlu0 %2983, %v2870
      %v2985 = vpop.permute.xlu0 %2984
      %2988 = vset.pattern.permute.xlu0 0
      %2989 = vperm.xlu0 %2988, %v2871
      %v2990 = vpop.permute.xlu0 %2989
      %v2992 = vadd.f32 %v2964, %v2975
      %v2993 = vadd.f32 %v2965, %v2975
      %v2994 = vadd.f32 %v2966, %v2980
      %v2995 = vadd.f32 %v2967, %v2980
      %v2996 = vadd.f32 %v2968, %v2985
      %v2997 = vadd.f32 %v2969, %v2985
      %v2998 = vadd.f32 %v2970, %v2990
      %v2999 = vadd.f32 %v2971, %v2990
      %vm3000 = vcmp.ge.f32.partialorder %v2992, 0.0
      %vm3001 = vcmp.ge.f32.partialorder %v2993, 0.0
      %vm3002 = vcmp.ge.f32.partialorder %v2994, 0.0
      %vm3003 = vcmp.ge.f32.partialorder %v2995, 0.0
      %vm3004 = vcmp.ge.f32.partialorder %v2996, 0.0
      %vm3005 = vcmp.ge.f32.partialorder %v2997, 0.0
      %vm3006 = vcmp.ge.f32.partialorder %v2998, 0.0
      %vm3007 = vcmp.ge.f32.partialorder %v2999, 0.0
      %v3008 = vmul.f32 %v2992, 0.2
      %v3009 = vmul.f32 %v2993, 0.2
      %v3010 = vmul.f32 %v2994, 0.2
      %v3011 = vmul.f32 %v2995, 0.2
      %v3012 = vmul.f32 %v2996, 0.2
      %v3013 = vmul.f32 %v2997, 0.2
      %v3014 = vmul.f32 %v2998, 0.2
      %v3015 = vmul.f32 %v2999, 0.2
      %v3016 = vsel %vm3000, %v2992, %v3008
      %v3017 = vsel %vm3001, %v2993, %v3009
      %v3018 = vsel %vm3002, %v2994, %v3010
      %v3019 = vsel %vm3003, %v2995, %v3011
      %v3020 = vsel %vm3004, %v2996, %v3012
      %v3021 = vsel %vm3005, %v2997, %v3013
      %v3022 = vsel %vm3006, %v2998, %v3014
      %v3023 = vsel %vm3007, %v2999, %v3015
      %3024 = vrot.lane.b32.xlu0 %v3016, 17
      %v3025 = vpop.permute.xlu0 %3024
      %3026 = vrot.lane.b32.xlu0 %v3018, 17
      %v3027 = vpop.permute.xlu0 %3026
      %3028 = vrot.lane.b32.xlu0 %v3020, 17
      %v3029 = vpop.permute.xlu0 %3028
      %3030 = vrot.lane.b32.xlu0 %v3022, 17
      %v3031 = vpop.permute.xlu0 %3030
      %3032 = vrot.lane.b32.xlu0 %v3017, 17
      %v3033 = vpop.permute.xlu0 %3032
      %3034 = vrot.lane.b32.xlu0 %v3019, 17
      %v3035 = vpop.permute.xlu0 %3034
      %3036 = vrot.lane.b32.xlu0 %v3021, 17
      %v3037 = vpop.permute.xlu0 %3036
      %3038 = vrot.lane.b32.xlu0 %v3023, 17
      %v3039 = vpop.permute.xlu0 %3038
      %v3040 = vsel %vm779, %v3025, %v3033
      %v3041 = vsel %vm779, %v3027, %v3035
      %v3042 = vsel %vm779, %v3029, %v3037
      %v3043 = vsel %vm779, %v3031, %v3039
      %v3044 = vsel %vm779, %v3033, %v3025
      %v3045 = vsel %vm779, %v3035, %v3027
      %v3046 = vsel %vm779, %v3037, %v3029
      %v3047 = vsel %vm779, %v3039, %v3031
      %v3048 = vmul.f32 %v3044, %v2369
      %v3049 = vmul.f32 %v3040, %v2373
      %v3050 = vmul.f32 %v3045, %v2369
      %v3051 = vmul.f32 %v3041, %v2373
      %v3052 = vmul.f32 %v3046, %v2369
      %v3053 = vmul.f32 %v3042, %v2373
      %v3054 = vmul.f32 %v3047, %v2369
      %v3055 = vmul.f32 %v3043, %v2373
      %3056 = vrot.lane.b32.xlu0 %v3016, 16
      %v3057 = vpop.permute.xlu0 %3056
      %3058 = vrot.lane.b32.xlu0 %v3018, 16
      %v3059 = vpop.permute.xlu0 %3058
      %3060 = vrot.lane.b32.xlu0 %v3020, 16
      %v3061 = vpop.permute.xlu0 %3060
      %3062 = vrot.lane.b32.xlu0 %v3022, 16
      %v3063 = vpop.permute.xlu0 %3062
      %3064 = vrot.lane.b32.xlu0 %v3017, 16
      %v3065 = vpop.permute.xlu0 %3064
      %3066 = vrot.lane.b32.xlu0 %v3019, 16
      %v3067 = vpop.permute.xlu0 %3066
      %3068 = vrot.lane.b32.xlu0 %v3021, 16
      %v3069 = vpop.permute.xlu0 %3068
      %3070 = vrot.lane.b32.xlu0 %v3023, 16
      %v3071 = vpop.permute.xlu0 %3070
      %v3072 = vsel %vm675, %v3057, %v3065
      %v3073 = vsel %vm675, %v3059, %v3067
      %v3074 = vsel %vm675, %v3061, %v3069
      %v3075 = vsel %vm675, %v3063, %v3071
      %v3076 = vsel %vm675, %v3065, %v3057
      %v3077 = vsel %vm675, %v3067, %v3059
      %v3078 = vsel %vm675, %v3069, %v3061
      %v3079 = vsel %vm675, %v3071, %v3063
      %v3080 = vmul.f32 %v3076, %v2413
      %v3081 = vmul.f32 %v3072, %v2417
      %v3082 = vmul.f32 %v3077, %v2413
      %v3083 = vmul.f32 %v3073, %v2417
      %v3084 = vmul.f32 %v3078, %v2413
      %v3085 = vmul.f32 %v3074, %v2417
      %v3086 = vmul.f32 %v3079, %v2413
      %v3087 = vmul.f32 %v3075, %v2417
      %3088 = vrot.lane.b32.xlu0 %v3016, 15
      %v3089 = vpop.permute.xlu0 %3088
      %3090 = vrot.lane.b32.xlu0 %v3018, 15
      %v3091 = vpop.permute.xlu0 %3090
      %3092 = vrot.lane.b32.xlu0 %v3020, 15
      %v3093 = vpop.permute.xlu0 %3092
      %3094 = vrot.lane.b32.xlu0 %v3022, 15
      %v3095 = vpop.permute.xlu0 %3094
      %3096 = vrot.lane.b32.xlu0 %v3017, 15
      %v3097 = vpop.permute.xlu0 %3096
      %3098 = vrot.lane.b32.xlu0 %v3019, 15
      %v3099 = vpop.permute.xlu0 %3098
      %3100 = vrot.lane.b32.xlu0 %v3021, 15
      %v3101 = vpop.permute.xlu0 %3100
      %3102 = vrot.lane.b32.xlu0 %v3023, 15
      %v3103 = vpop.permute.xlu0 %3102
      %v3104 = vsel %vm869, %v3089, %v3097
      %v3105 = vsel %vm869, %v3091, %v3099
      %v3106 = vsel %vm869, %v3093, %v3101
      %v3107 = vsel %vm869, %v3095, %v3103
      %v3108 = vsel %vm869, %v3097, %v3089
      %v3109 = vsel %vm869, %v3099, %v3091
      %v3110 = vsel %vm869, %v3101, %v3093
      %v3111 = vsel %vm869, %v3103, %v3095
      %v3112 = vmul.f32 %v3108, %v2457
      %v3113 = vmul.f32 %v3104, %v2461
      %v3114 = vmul.f32 %v3109, %v2457
      %v3115 = vmul.f32 %v3105, %v2461
      %v3116 = vmul.f32 %v3110, %v2457
      %v3117 = vmul.f32 %v3106, %v2461
      %v3118 = vmul.f32 %v3111, %v2457
      %v3119 = vmul.f32 %v3107, %v2461
      %3120 = vrot.lane.b32.xlu0 %v3016, 1
      %v3121 = vpop.permute.xlu0 %3120
      %3122 = vrot.lane.b32.xlu0 %v3018, 1
      %v3123 = vpop.permute.xlu0 %3122
      %3124 = vrot.lane.b32.xlu0 %v3020, 1
      %v3125 = vpop.permute.xlu0 %3124
      %3126 = vrot.lane.b32.xlu0 %v3022, 1
      %v3127 = vpop.permute.xlu0 %3126
      %3128 = vrot.lane.b32.xlu0 %v3017, 1
      %v3129 = vpop.permute.xlu0 %3128
      %3130 = vrot.lane.b32.xlu0 %v3019, 1
      %v3131 = vpop.permute.xlu0 %3130
      %3132 = vrot.lane.b32.xlu0 %v3021, 1
      %v3133 = vpop.permute.xlu0 %3132
      %3134 = vrot.lane.b32.xlu0 %v3023, 1
      %v3135 = vpop.permute.xlu0 %3134
      %v3136 = vsel %vm552, %v3121, %v3129
      %v3137 = vsel %vm552, %v3123, %v3131
      %v3138 = vsel %vm552, %v3125, %v3133
      %v3139 = vsel %vm552, %v3127, %v3135
      %v3140 = vsel %vm552, %v3129, %v3121
      %v3141 = vsel %vm552, %v3131, %v3123
      %v3142 = vsel %vm552, %v3133, %v3125
      %v3143 = vsel %vm552, %v3135, %v3127
      %v3144 = vmul.f32 %v3140, %v2501
      %v3145 = vmul.f32 %v3136, %v2505
      %v3146 = vmul.f32 %v3141, %v2501
      %v3147 = vmul.f32 %v3137, %v2505
      %v3148 = vmul.f32 %v3142, %v2501
      %v3149 = vmul.f32 %v3138, %v2505
      %v3150 = vmul.f32 %v3143, %v2501
      %v3151 = vmul.f32 %v3139, %v2505
      %3152 = vrot.lane.b32.xlu0 %v3016, 127
      %v3153 = vpop.permute.xlu0 %3152
      %3154 = vrot.lane.b32.xlu0 %v3018, 127
      %v3155 = vpop.permute.xlu0 %3154
      %3156 = vrot.lane.b32.xlu0 %v3020, 127
      %v3157 = vpop.permute.xlu0 %3156
      %3158 = vrot.lane.b32.xlu0 %v3022, 127
      %v3159 = vpop.permute.xlu0 %3158
      %3160 = vrot.lane.b32.xlu0 %v3017, 127
      %v3161 = vpop.permute.xlu0 %3160
      %3162 = vrot.lane.b32.xlu0 %v3019, 127
      %v3163 = vpop.permute.xlu0 %3162
      %3164 = vrot.lane.b32.xlu0 %v3021, 127
      %v3165 = vpop.permute.xlu0 %3164
      %3166 = vrot.lane.b32.xlu0 %v3023, 127
      %v3167 = vpop.permute.xlu0 %3166
      %v3168 = vsel %vm604, %v3153, %v3161
      %v3169 = vsel %vm604, %v3155, %v3163
      %v3170 = vsel %vm604, %v3157, %v3165
      %v3171 = vsel %vm604, %v3159, %v3167
      %v3172 = vsel %vm604, %v3161, %v3153
      %v3173 = vsel %vm604, %v3163, %v3155
      %v3174 = vsel %vm604, %v3165, %v3157
      %v3175 = vsel %vm604, %v3167, %v3159
      %v3176 = vmul.f32 %v3168, %v2545
      %v3177 = vmul.f32 %v3172, %v2549
      %v3178 = vmul.f32 %v3169, %v2545
      %v3179 = vmul.f32 %v3173, %v2549
      %v3180 = vmul.f32 %v3170, %v2545
      %v3181 = vmul.f32 %v3174, %v2549
      %v3182 = vmul.f32 %v3171, %v2545
      %v3183 = vmul.f32 %v3175, %v2549
      %3184 = vrot.lane.b32.xlu0 %v3016, 113
      %v3185 = vpop.permute.xlu0 %3184
      %3186 = vrot.lane.b32.xlu0 %v3018, 113
      %v3187 = vpop.permute.xlu0 %3186
      %3188 = vrot.lane.b32.xlu0 %v3020, 113
      %v3189 = vpop.permute.xlu0 %3188
      %3190 = vrot.lane.b32.xlu0 %v3022, 113
      %v3191 = vpop.permute.xlu0 %3190
      %3192 = vrot.lane.b32.xlu0 %v3017, 113
      %v3193 = vpop.permute.xlu0 %3192
      %3194 = vrot.lane.b32.xlu0 %v3019, 113
      %v3195 = vpop.permute.xlu0 %3194
      %3196 = vrot.lane.b32.xlu0 %v3021, 113
      %v3197 = vpop.permute.xlu0 %3196
      %3198 = vrot.lane.b32.xlu0 %v3023, 113
      %v3199 = vpop.permute.xlu0 %3198
      %v3200 = vsel %vm1005, %v3185, %v3193
      %v3201 = vsel %vm1005, %v3187, %v3195
      %v3202 = vsel %vm1005, %v3189, %v3197
      %v3203 = vsel %vm1005, %v3191, %v3199
      %v3204 = vsel %vm1005, %v3193, %v3185
      %v3205 = vsel %vm1005, %v3195, %v3187
      %v3206 = vsel %vm1005, %v3197, %v3189
      %v3207 = vsel %vm1005, %v3199, %v3191
      %v3208 = vmul.f32 %v3200, %v2589
      %v3209 = vmul.f32 %v3204, %v2593
      %v3210 = vmul.f32 %v3201, %v2589
      %v3211 = vmul.f32 %v3205, %v2593
      %v3212 = vmul.f32 %v3202, %v2589
      %v3213 = vmul.f32 %v3206, %v2593
      %v3214 = vmul.f32 %v3203, %v2589
      %v3215 = vmul.f32 %v3207, %v2593
      %3216 = vrot.lane.b32.xlu0 %v3016, 112
      %v3217 = vpop.permute.xlu0 %3216
      %3218 = vrot.lane.b32.xlu0 %v3018, 112
      %v3219 = vpop.permute.xlu0 %3218
      %3220 = vrot.lane.b32.xlu0 %v3020, 112
      %v3221 = vpop.permute.xlu0 %3220
      %3222 = vrot.lane.b32.xlu0 %v3022, 112
      %v3223 = vpop.permute.xlu0 %3222
      %3224 = vrot.lane.b32.xlu0 %v3017, 112
      %v3225 = vpop.permute.xlu0 %3224
      %3226 = vrot.lane.b32.xlu0 %v3019, 112
      %v3227 = vpop.permute.xlu0 %3226
      %3228 = vrot.lane.b32.xlu0 %v3021, 112
      %v3229 = vpop.permute.xlu0 %3228
      %3230 = vrot.lane.b32.xlu0 %v3023, 112
      %v3231 = vpop.permute.xlu0 %3230
      %v3232 = vsel %vm727, %v3217, %v3225
      %v3233 = vsel %vm727, %v3219, %v3227
      %v3234 = vsel %vm727, %v3221, %v3229
      %v3235 = vsel %vm727, %v3223, %v3231
      %v3236 = vsel %vm727, %v3225, %v3217
      %v3237 = vsel %vm727, %v3227, %v3219
      %v3238 = vsel %vm727, %v3229, %v3221
      %v3239 = vsel %vm727, %v3231, %v3223
      %v3240 = vmul.f32 %v3232, %v2633
      %v3241 = vmul.f32 %v3236, %v2637
      %v3242 = vmul.f32 %v3233, %v2633
      %v3243 = vmul.f32 %v3237, %v2637
      %v3244 = vmul.f32 %v3234, %v2633
      %v3245 = vmul.f32 %v3238, %v2637
      %v3246 = vmul.f32 %v3235, %v2633
      %v3247 = vmul.f32 %v3239, %v2637
      %3248 = vrot.lane.b32.xlu0 %v3016, 111
      %v3249 = vpop.permute.xlu0 %3248
      %3250 = vrot.lane.b32.xlu0 %v3018, 111
      %v3251 = vpop.permute.xlu0 %3250
      %3252 = vrot.lane.b32.xlu0 %v3020, 111
      %v3253 = vpop.permute.xlu0 %3252
      %3254 = vrot.lane.b32.xlu0 %v3022, 111
      %v3255 = vpop.permute.xlu0 %3254
      %3256 = vrot.lane.b32.xlu0 %v3017, 111
      %v3257 = vpop.permute.xlu0 %3256
      %3258 = vrot.lane.b32.xlu0 %v3019, 111
      %v3259 = vpop.permute.xlu0 %3258
      %3260 = vrot.lane.b32.xlu0 %v3021, 111
      %v3261 = vpop.permute.xlu0 %3260
      %3262 = vrot.lane.b32.xlu0 %v3023, 111
      %v3263 = vpop.permute.xlu0 %3262
      %v3264 = vsel %vm1096, %v3249, %v3257
      %v3265 = vsel %vm1096, %v3251, %v3259
      %v3266 = vsel %vm1096, %v3253, %v3261
      %v3267 = vsel %vm1096, %v3255, %v3263
      %v3268 = vsel %vm1096, %v3257, %v3249
      %v3269 = vsel %vm1096, %v3259, %v3251
      %v3270 = vsel %vm1096, %v3261, %v3253
      %v3271 = vsel %vm1096, %v3263, %v3255
      %v3272 = vmul.f32 %v3264, %v2677
      %v3273 = vmul.f32 %v3268, %v2681
      %v3274 = vmul.f32 %v3265, %v2677
      %v3275 = vmul.f32 %v3269, %v2681
      %v3276 = vmul.f32 %v3266, %v2677
      %v3277 = vmul.f32 %v3270, %v2681
      %v3278 = vmul.f32 %v3267, %v2677
      %v3279 = vmul.f32 %v3271, %v2681
      %v3280 = vpack.c.bf16 %v3050, %v3048
      %v3281 = vpack.c.bf16 %v3051, %v3049
      %v3282 = vpack.c.bf16 %v3054, %v3052
      %v3283 = vpack.c.bf16 %v3055, %v3053
      %v3284 = vpack.c.bf16 %v3082, %v3080
      %v3285 = vpack.c.bf16 %v3083, %v3081
      %v3286 = vpack.c.bf16 %v3086, %v3084
      %v3287 = vpack.c.bf16 %v3087, %v3085
      %v3288 = vpack.c.bf16 %v3114, %v3112
      %v3289 = vpack.c.bf16 %v3115, %v3113
      %v3290 = vpack.c.bf16 %v3118, %v3116
      %v3291 = vpack.c.bf16 %v3119, %v3117
      %v3292 = vpack.c.bf16 %v3146, %v3144
      %v3293 = vpack.c.bf16 %v3147, %v3145
      %v3294 = vpack.c.bf16 %v3150, %v3148
      %v3295 = vpack.c.bf16 %v3151, %v3149
      %v3296 = vpack.c.bf16 %v3018, %v3016
      %v3297 = vpack.c.bf16 %v3019, %v3017
      %v3298 = vpack.c.bf16 %v3022, %v3020
      %v3299 = vpack.c.bf16 %v3023, %v3021
      %v3300 = vpack.c.bf16 %v3178, %v3176
      %v3301 = vpack.c.bf16 %v3179, %v3177
      %v3302 = vpack.c.bf16 %v3182, %v3180
      %v3303 = vpack.c.bf16 %v3183, %v3181
      %v3304 = vpack.c.bf16 %v3210, %v3208
      %v3305 = vpack.c.bf16 %v3211, %v3209
      %v3306 = vpack.c.bf16 %v3214, %v3212
      %v3307 = vpack.c.bf16 %v3215, %v3213
      %v3308 = vpack.c.bf16 %v3242, %v3240
      %v3309 = vpack.c.bf16 %v3243, %v3241
      %v3310 = vpack.c.bf16 %v3246, %v3244
      %v3311 = vpack.c.bf16 %v3247, %v3245
      %v3312 = vpack.c.bf16 %v3274, %v3272
      %v3313 = vpack.c.bf16 %v3275, %v3273
      %v3314 = vpack.c.bf16 %v3278, %v3276
      %v3315 = vpack.c.bf16 %v3279, %v3277
      %3316 = vmatprep.subr.bf16.mxu0 %v3295
      %3317 = vmatpush1.bf16.msra.mxu0 %v3294
      %3318 = vmatprep.subr.bf16.mxu0 %v3293
      %3319 = vmatpush1.bf16.msra.mxu0 %v3292
      %3320 = vmatprep.subr.bf16.mxu0 %v3291
      %3321 = vmatpush1.bf16.msra.mxu0 %v3290
      %3322 = vmatprep.subr.bf16.mxu0 %v3289
      %3323 = vmatpush1.bf16.msra.mxu0 %v3288
      %3324 = vmatprep.subr.bf16.mxu0 %v3287
      %3325 = vmatpush1.bf16.msra.mxu0 %v3286
      %3326 = vmatprep.subr.bf16.mxu0 %v3285
      %3327 = vmatpush1.bf16.msra.mxu0 %v3284
      %3328 = vmatprep.subr.bf16.mxu0 %v3283
      %3329 = vmatpush1.bf16.msra.mxu0 %v3282
      %3330 = vmatprep.subr.bf16.mxu0 %v3281
      %3331 = vmatpush1.bf16.msra.mxu0 %v3280
      %3332 = vmatprep.subr.bf16.mxu0 %v3311
      %3333 = vmatpush2.bf16.msra.mxu0 %v3310
      %3334 = vmatprep.subr.bf16.mxu0 %v3309
      %3335 = vmatpush2.bf16.msra.mxu0 %v3308
      %3336 = vmatprep.subr.bf16.mxu0 %v3307
      %3337 = vmatpush2.bf16.msra.mxu0 %v3306
      %3338 = vmatprep.subr.bf16.mxu0 %v3305
      %3339 = vmatpush2.bf16.msra.mxu0 %v3304
      %3340 = vmatprep.subr.bf16.mxu0 %v3303
      %3341 = vmatpush2.bf16.msra.mxu0 %v3302
      %3342 = vmatprep.subr.bf16.mxu0 %v3301
      %3343 = vmatpush2.bf16.msra.mxu0 %v3300
      %3344 = vmatprep.subr.bf16.mxu0 %v3299
      %3345 = vmatpush2.bf16.msra.mxu0 %v3298
      %3346 = vmatprep.subr.bf16.mxu0 %v3297
      %3347 = vmatpush2.bf16.msra.mxu0 %v3296
      %3348 = vmatprep.mubr.bf16.mxu0 %v1866
      %3349 = vmatmul.mubr.bf16.gmra.mxu0 %v1865
      %v3350 = vpop.f32.mrf.mxu0
      %v3351 = vadd.f32 %v1828, %v3350
      %v3352 = vpop.f32.mrf.mxu0
      %v3353 = vadd.f32 %v1828, %v3352
      %v3354 = vpop.f32.mrf.mxu0
      %v3355 = vadd.f32 %v1833, %v3354
      %v3356 = vpop.f32.mrf.mxu0
      %v3357 = vadd.f32 %v1833, %v3356
      %3358 = vmatprep.mubr.bf16.mxu0 %v1869
      %3359 = vmatmul.mubr.bf16.gmra.mxu0 %v1868
      %v3360 = vpop.f32.mrf.mxu0
      %v3361 = vadd.f32 %v1838, %v3360
      %v3362 = vpop.f32.mrf.mxu0
      %v3363 = vadd.f32 %v1838, %v3362
      %v3364 = vpop.f32.mrf.mxu0
      %v3365 = vadd.f32 %v1843, %v3364
      %v3366 = vpop.f32.mrf.mxu0
      %v3367 = vadd.f32 %v1843, %v3366
      %3368 = vdwg.mxu0
      %3369 = vmatprep.subr.bf16.mxu0 0
      %3370 = vmatpush1.bf16.msra.mxu0 0
      %3371 = vmatprep.subr.bf16.mxu0 0
      %3372 = vmatpush1.bf16.msra.mxu0 0
      %3373 = vmatprep.subr.bf16.mxu0 0
      %3374 = vmatpush1.bf16.msra.mxu0 0
      %3375 = vmatprep.subr.bf16.mxu0 0
      %3376 = vmatpush1.bf16.msra.mxu0 0
      %3377 = vmatprep.subr.bf16.mxu0 0
      %3378 = vmatpush1.bf16.msra.mxu0 0
      %3379 = vmatprep.subr.bf16.mxu0 0
      %3380 = vmatpush1.bf16.msra.mxu0 0
      %3381 = vmatprep.subr.bf16.mxu0 %v3315
      %3382 = vmatpush1.bf16.msra.mxu0 %v3314
      %3383 = vmatprep.subr.bf16.mxu0 %v3313
      %3384 = vmatpush1.bf16.msra.mxu0 %v3312
      %3385 = vmatprep.subr.bf16.mxu0 0
      %3386 = vmatpush2.bf16.msra.mxu0 0
      %3387 = vmatprep.subr.bf16.mxu0 0
      %3388 = vmatpush2.bf16.msra.mxu0 0
      %3389 = vmatprep.subr.bf16.mxu0 0
      %3390 = vmatpush2.bf16.msra.mxu0 0
      %3391 = vmatprep.subr.bf16.mxu0 0
      %3392 = vmatpush2.bf16.msra.mxu0 0
      %3393 = vmatprep.subr.bf16.mxu0 0
      %3394 = vmatpush2.bf16.msra.mxu0 0
      %3395 = vmatprep.subr.bf16.mxu0 0
      %3396 = vmatpush2.bf16.msra.mxu0 0
      %3397 = vmatprep.subr.bf16.mxu0 0
      %3398 = vmatpush2.bf16.msra.mxu0 0
      %3399 = vmatprep.subr.bf16.mxu0 0
      %3400 = vmatpush2.bf16.msra.mxu0 0
      %3401 = vmatprep.mubr.bf16.mxu0 0
      %3402 = vmatmul.mubr.bf16.gmra.mxu0 %v1876
      %v3403 = vpop.f32.mrf.mxu0
      %v3404 = vadd.f32 %v3351, %v3403
      %v3405 = vpop.f32.mrf.mxu0
      %v3406 = vadd.f32 %v3353, %v3405
      %v3407 = vpop.f32.mrf.mxu0
      %v3408 = vadd.f32 %v3355, %v3407
      %v3409 = vpop.f32.mrf.mxu0
      %v3410 = vadd.f32 %v3357, %v3409
      %3411 = vmatprep.mubr.bf16.mxu0 0
      %3412 = vmatmul.mubr.bf16.gmra.mxu0 %v1879
      %v3413 = vpop.f32.mrf.mxu0
      %v3414 = vadd.f32 %v3361, %v3413
      %v3415 = vpop.f32.mrf.mxu0
      %v3416 = vadd.f32 %v3363, %v3415
      %v3417 = vpop.f32.mrf.mxu0
      %v3418 = vadd.f32 %v3365, %v3417
      %v3419 = vpop.f32.mrf.mxu0
      %v3420 = vadd.f32 %v3367, %v3419
      %3421 = vdwg.mxu0
      %s3422 = scalar_lea.vmem %s458, 64
      %v3423 = vld [vmem:[%s3422] sm:$0xff]
      %v3424 = vld [vmem:[%s3422 + $0x8] sm:$0xff]
      %v3425 = vld [vmem:[%s3422 + $0x10] sm:$0xff]
      %v3426 = vld [vmem:[%s3422 + $0x18] sm:$0xff]
      %v3427 = vld [vmem:[%s3422 + $0x20] sm:$0xff]
      %v3428 = vld [vmem:[%s3422 + $0x28] sm:$0xff]
      %v3429 = vld [vmem:[%s3422 + $0x30] sm:$0xff]
      %v3430 = vld [vmem:[%s3422 + $0x38] sm:$0xff]
      %v3431 = vadd.f32 %v3404, %v3406
      %3432 = vadd.xlane.f32.xlu0 %v3431
      %v3433 = vpop.xlane.xlu0 %3432
      %v3434 = vadd.f32 %v3408, %v3410
      %3435 = vadd.xlane.f32.xlu0 %v3434
      %v3436 = vpop.xlane.xlu0 %3435
      %v3437 = vadd.f32 %v3414, %v3416
      %3438 = vadd.xlane.f32.xlu0 %v3437
      %v3439 = vpop.xlane.xlu0 %3438
      %v3440 = vadd.f32 %v3418, %v3420
      %3441 = vadd.xlane.f32.xlu0 %v3440
      %v3442 = vpop.xlane.xlu0 %3441
      %v3443 = vmul.f32 %v3433, 0.00390625
      %v3444 = vmul.f32 %v3436, 0.00390625
      %v3445 = vmul.f32 %v3439, 0.00390625
      %v3446 = vmul.f32 %v3442, 0.00390625
      %v3447 = vmul.f32 %v3404, %v3404
      %v3448 = vmul.f32 %v3406, %v3406
      %v3449 = vmul.f32 %v3408, %v3408
      %v3450 = vmul.f32 %v3410, %v3410
      %v3451 = vmul.f32 %v3414, %v3414
      %v3452 = vmul.f32 %v3416, %v3416
      %v3453 = vmul.f32 %v3418, %v3418
      %v3454 = vmul.f32 %v3420, %v3420
      %v3455 = vadd.f32 %v3447, %v3448
      %3456 = vadd.xlane.f32.xlu0 %v3455
      %v3457 = vpop.xlane.xlu0 %3456
      %v3458 = vadd.f32 %v3449, %v3450
      %3459 = vadd.xlane.f32.xlu0 %v3458
      %v3460 = vpop.xlane.xlu0 %3459
      %v3461 = vadd.f32 %v3451, %v3452
      %3462 = vadd.xlane.f32.xlu0 %v3461
      %v3463 = vpop.xlane.xlu0 %3462
      %v3464 = vadd.f32 %v3453, %v3454
      %3465 = vadd.xlane.f32.xlu0 %v3464
      %v3466 = vpop.xlane.xlu0 %3465
      %v3467 = vmul.f32 %v3457, 0.00390625
      %v3468 = vmul.f32 %v3460, 0.00390625
      %v3469 = vmul.f32 %v3463, 0.00390625
      %v3470 = vmul.f32 %v3466, 0.00390625
      %v3471 = vmul.f32 %v3443, %v3443
      %v3472 = vmul.f32 %v3444, %v3444
      %v3473 = vmul.f32 %v3445, %v3445
      %v3474 = vmul.f32 %v3446, %v3446
      %v3475 = vsub.f32 %v3467, %v3471
      %v3476 = vsub.f32 %v3468, %v3472
      %v3477 = vsub.f32 %v3469, %v3473
      %v3478 = vsub.f32 %v3470, %v3474
      %v3479 = vmax.f32 %v3475, 0.0
      %v3480 = vmax.f32 %v3476, 0.0
      %v3481 = vmax.f32 %v3477, 0.0
      %v3482 = vmax.f32 %v3478, 0.0
      %v3483 = vadd.f32 %v3479, 1e-05
      %v3484 = vadd.f32 %v3480, 1e-05
      %v3485 = vadd.f32 %v3481, 1e-05
      %v3486 = vadd.f32 %v3482, 1e-05
      %v3487 = vrsqrt.pop %v3483
      %v3488 = vrsqrt.pop %v3484
      %v3489 = vrsqrt.pop %v3485
      %v3490 = vrsqrt.pop %v3486
      %v3491 = vsub.f32 %v3404, %v3443
      %v3492 = vsub.f32 %v3406, %v3443
      %v3493 = vsub.f32 %v3408, %v3444
      %v3494 = vsub.f32 %v3410, %v3444
      %v3495 = vsub.f32 %v3414, %v3445
      %v3496 = vsub.f32 %v3416, %v3445
      %v3497 = vsub.f32 %v3418, %v3446
      %v3498 = vsub.f32 %v3420, %v3446
      %v3499 = vmul.f32 %v3487, %v3423
      %v3500 = vmul.f32 %v3488, %v3424
      %v3501 = vmul.f32 %v3489, %v3425
      %v3502 = vmul.f32 %v3490, %v3426
      %3504 = vset.pattern.permute.xlu0 0
      %3505 = vperm.xlu0 %3504, %v3499
      %v3506 = vpop.permute.xlu0 %3505
      %3509 = vset.pattern.permute.xlu0 0
      %3510 = vperm.xlu0 %3509, %v3500
      %v3511 = vpop.permute.xlu0 %3510
      %3514 = vset.pattern.permute.xlu0 0
      %3515 = vperm.xlu0 %3514, %v3501
      %v3516 = vpop.permute.xlu0 %3515
      %3519 = vset.pattern.permute.xlu0 0
      %3520 = vperm.xlu0 %3519, %v3502
      %v3521 = vpop.permute.xlu0 %3520
      %v3523 = vmul.f32 %v3491, %v3506
      %v3524 = vmul.f32 %v3492, %v3506
      %v3525 = vmul.f32 %v3493, %v3511
      %v3526 = vmul.f32 %v3494, %v3511
      %v3527 = vmul.f32 %v3495, %v3516
      %v3528 = vmul.f32 %v3496, %v3516
      %v3529 = vmul.f32 %v3497, %v3521
      %v3530 = vmul.f32 %v3498, %v3521
      %3532 = vset.pattern.permute.xlu0 0
      %3533 = vperm.xlu0 %3532, %v3427
      %v3534 = vpop.permute.xlu0 %3533
      %3537 = vset.pattern.permute.xlu0 0
      %3538 = vperm.xlu0 %3537, %v3428
      %v3539 = vpop.permute.xlu0 %3538
      %3542 = vset.pattern.permute.xlu0 0
      %3543 = vperm.xlu0 %3542, %v3429
      %v3544 = vpop.permute.xlu0 %3543
      %3547 = vset.pattern.permute.xlu0 0
      %3548 = vperm.xlu0 %3547, %v3430
      %v3549 = vpop.permute.xlu0 %3548
      %v3551 = vadd.f32 %v3523, %v3534
      %v3552 = vadd.f32 %v3524, %v3534
      %v3553 = vadd.f32 %v3525, %v3539
      %v3554 = vadd.f32 %v3526, %v3539
      %v3555 = vadd.f32 %v3527, %v3544
      %v3556 = vadd.f32 %v3528, %v3544
      %v3557 = vadd.f32 %v3529, %v3549
      %v3558 = vadd.f32 %v3530, %v3549
      %vm3559 = vcmp.ge.f32.partialorder %v3551, 0.0
      %vm3560 = vcmp.ge.f32.partialorder %v3552, 0.0
      %vm3561 = vcmp.ge.f32.partialorder %v3553, 0.0
      %vm3562 = vcmp.ge.f32.partialorder %v3554, 0.0
      %vm3563 = vcmp.ge.f32.partialorder %v3555, 0.0
      %vm3564 = vcmp.ge.f32.partialorder %v3556, 0.0
      %vm3565 = vcmp.ge.f32.partialorder %v3557, 0.0
      %vm3566 = vcmp.ge.f32.partialorder %v3558, 0.0
      %v3567 = vmul.f32 %v3551, 0.2
      %v3568 = vmul.f32 %v3552, 0.2
      %v3569 = vmul.f32 %v3553, 0.2
      %v3570 = vmul.f32 %v3554, 0.2
      %v3571 = vmul.f32 %v3555, 0.2
      %v3572 = vmul.f32 %v3556, 0.2
      %v3573 = vmul.f32 %v3557, 0.2
      %v3574 = vmul.f32 %v3558, 0.2
      %v3575 = vsel %vm3559, %v3551, %v3567
      %v3576 = vsel %vm3560, %v3552, %v3568
      %v3577 = vsel %vm3561, %v3553, %v3569
      %v3578 = vsel %vm3562, %v3554, %v3570
      %v3579 = vsel %vm3563, %v3555, %v3571
      %v3580 = vsel %vm3564, %v3556, %v3572
      %v3581 = vsel %vm3565, %v3557, %v3573
      %v3582 = vsel %vm3566, %v3558, %v3574
      %s3583 = scalar_lea.vmem %s465, 64
      %3584 = vst [vmem:[%s3583] sm:$0xff] %v3575
      %3585 = vst [vmem:[%s3583 + $0x8] sm:$0xff] %v3576
      %3586 = vst [vmem:[%s3583 + $0x10] sm:$0xff] %v3577
      %3587 = vst [vmem:[%s3583 + $0x18] sm:$0xff] %v3578
      %3588 = vst [vmem:[%s3583 + $0x20] sm:$0xff] %v3579
      %3589 = vst [vmem:[%s3583 + $0x28] sm:$0xff] %v3580
      %3590 = vst [vmem:[%s3583 + $0x30] sm:$0xff] %v3581
      %3591 = vst [vmem:[%s3583 + $0x38] sm:$0xff] %v3582
      %s3592 = smul.u32 2, %s22
      %p3593 = scmp.lt.s32.totalorder %s3592, 3
      %s3594 = scalar_select %p3593, %s3592, 3
      %s3595 = smul.addr %s3594, 8
      %s3596 = smul.addr %s3595, 8
      %s3597 = scalar_lea.vmem %s11, %s3596
      // Predicated region
      $region65: #{synthesis_block_forward.1} parent=63 // pred_check
        %p3598 = pneg %p291
      $region66: #{synthesis_block_forward.1} parent=63 // pred_check_branch
        %3600 = sbr.rel (%p3598) target = $region68
      $region67: #{synthesis_block_forward.1} parent=63 // pred_region
        %s3601 = smul.u32 2, %s22
      $region68: #{synthesis_block_forward.1} parent=63 // pred_fallthru
        _
    $region64: #{synthesis_block_forward.1} parent=5 // pred_fallthru
      _
    %p3602 = scmp.le.s32.totalorder 2, %s17
    // Predicated region
    $region69: #{synthesis_block_forward.1} parent=5 // pred_check
      %p3603 = pneg %p3602
    $region70: #{synthesis_block_forward.1} parent=5 // pred_check_branch
      %3605 = sbr.rel (%p3603) target = $region72
    $region71: #{synthesis_block_forward.1} parent=5 // pred_region
      %s3606 = ssub.s32 %s17, 2
      // Predicated region
      $region73: #{synthesis_block_forward.1} parent=71 // pred_check
        %p3607 = pneg %p297
      $region74: #{synthesis_block_forward.1} parent=71 // pred_check_branch
        %3609 = sbr.rel (%p3607) target = $region76
      $region75: #{synthesis_block_forward.1} parent=71 // pred_region
        %s3610 = smul.u32 2, %s23
        %p3611 = scmp.lt.s32.totalorder %s3610, 3
        %s3612 = scalar_select %p3611, %s3610, 3
        %s3613 = smul.addr %s3612, 8
        %s3614 = smul.addr %s3613, 8
        %s3615 = scalar_lea.vmem %s11, %s3614
      $region76: #{synthesis_block_forward.1} parent=71 // pred_fallthru
        _
    $region72: #{synthesis_block_forward.1} parent=5 // pred_fallthru
      _
  $region6: #{synthesis_block_forward.1} parent=0 // loop_footer
    %s21 = sadd.s32 1, %s17
  $region7: #{synthesis_block_forward.1} parent=0 // loop_footer_branch
    %16 = sbr.rel target = $region3
  $region8: #{synthesis_block_forward.1} parent=0 // loop_exit
    _

</llo_original>
